<compile_context>
chip_gen: v6e
topology: v6e:2x2x1
jax: 0.10.0
libtpu: 0.0.40
codegen_flags: <defaults>
</compile_context>

<pallas_src>
import math
import jax
import jax.numpy as jnp
from jax.experimental import pallas as pl
from jax.experimental.pallas import tpu as pltpu

# ----------------------------- model sizes -----------------------------------
B   = 2      # batch
S   = 16     # BERT sequence length
N   = 16     # number of graph nodes (dg[0].size(-1))
E   = 768    # BERT hidden size (hard-coded 768 in the module's self.weight)
H   = 128    # opt.gcn_hidden_dim
OUT = 3      # opt.output_dim
EPS = 1e-07

BS = B * S   # flat token rows (batch folded into sublanes)
BN = B * N   # flat node rows


# ------------------------------ fused kernel ----------------------------------
def _fused_kernel(se_ref, pooled_ref, dg_ref, dg1_ref,
                  tran_lo_ref, tran_hi_ref, tgt_lo_ref, tgt_hi_ref,
                  span_lo_ref, span_hi_ref,
                  w768_ref, gw_ref, gb_ref,
                  fcwp_ref, fcwc_ref, fcwg_ref, fcb_ref,
                  out_ref):
    f32 = jnp.float32
    bf16 = jnp.bfloat16

    se = se_ref[...]                                              # (BS, E) f32

    # ---- target max-pool over the per-batch token span (kept in f32) --------
    row = jax.lax.broadcasted_iota(jnp.int32, (BS, 1), 0)         # flat token row
    trow = (row >= tgt_lo_ref[...]) & (row < tgt_hi_ref[...])     # (BS, 1)
    se_masked = jnp.where(trow, se, -1e30)                        # finite fill
    rsel = jax.lax.broadcasted_iota(jnp.int32, (B, 1), 0)         # (B, 1)
    cat_rows = [jnp.max(se_masked[b * S:(b + 1) * S, :], axis=0, keepdims=True)
                for b in range(B)]                                # B x (1, E)
    cat = cat_rows[B - 1]
    for b in range(B - 2, -1, -1):                                # assemble (B, E)
        cat = jnp.where(rsel == b, cat_rows[b], cat)

    # ---- segment-sum over word pieces: block-diag tran mask @ sentence ------
    col = jax.lax.broadcasted_iota(jnp.int32, (BN, BS), 1)        # flat token col
    tmask = jnp.where((col >= tran_lo_ref[...]) & (col < tran_hi_ref[...]),
                      1.0, 0.0).astype(bf16)                      # (BN, BS)
    tmps = jnp.dot(tmask, se.astype(bf16),
                   preferred_element_type=f32)                    # (BN, E) f32

    # ---- gcn_text = relu(tmps @ W768)  (bf16 MXU, f32 accumulation) ---------
    text = jnp.maximum(
        jnp.dot(tmps.astype(bf16), w768_ref[...], preferred_element_type=f32),
        0.0)                                                      # (BN, H) f32

    # ---- per-batch adjacency: clamp(dg + dg1), precompute 1/(deg + eps) -----
    adjs = []
    for b in range(B):
        a_b = dg_ref[b] + dg1_ref[b]                              # (N, N) f32
        a_b = jnp.where(a_b >= 1.0, 1.0, a_b)
        inv_d = pl.reciprocal(jnp.sum(a_b, axis=1, keepdims=True) + EPS,
                              approx=True)                        # (N, 1)
        adjs.append((a_b, inv_d))

    # ---- 3 GCN layers, each fused with module-level relu + residual ---------
    for i in range(3):
        w_i = gw_ref[i]                                           # (H, H) bf16
        b_i = gb_ref[i]                                           # (1, H) f32
        hidden = jnp.dot(text.astype(bf16), w_i,
                         preferred_element_type=f32)              # (BN, H)
        parts = [jnp.dot(adjs[b][0], hidden[b * N:(b + 1) * N, :],
                         preferred_element_type=f32) * adjs[b][1]
                 for b in range(B)]                               # B x (N, H)
        gcn = jnp.concatenate(parts, axis=0) + b_i                # (BN, H)
        text = jnp.maximum(gcn, 0.0) + text                       # relu + residual

    # ---- span-sum of graph nodes -> gcn_cat ----------------------------------
    ncol = jax.lax.broadcasted_iota(jnp.int32, (B, BN), 1)        # flat node col
    smask = jnp.where((ncol >= span_lo_ref[...]) & (ncol < span_hi_ref[...]),
                      1.0, 0.0)                                   # (B, BN) f32
    gcn_cat = jnp.dot(smask, text, preferred_element_type=f32)    # (B, H)

    # ---- final FC (concat-free) + tanh, as a lane-dense VPU reduce -----------
    pooled = pooled_ref[...]                                      # (B, E) f32
    cols = []
    for o in range(OUT):
        s = (jnp.sum(pooled * fcwp_ref[o:o + 1, :], axis=1, keepdims=True)
             + jnp.sum(cat * fcwc_ref[o:o + 1, :], axis=1, keepdims=True)
             + jnp.sum(gcn_cat * fcwg_ref[o:o + 1, :], axis=1, keepdims=True))
        cols.append(s)                                            # (B, 1)
    lane = jax.lax.broadcasted_iota(jnp.int32, (B, OUT), 1)
    pre = cols[OUT - 1]
    for o in range(OUT - 2, -1, -1):                              # assemble (B, OUT)
        pre = jnp.where(lane == o, cols[o], pre)
    out_ref[...] = jnp.tanh(pre + fcb_ref[...])


def fused_forward(params, se_flat, pooled, dg, dg1,
                  tran_lo_g, tran_hi_g, tgt_lo_g, tgt_hi_g,
                  span_lo_g, span_hi_g):
    in_specs = [
        pl.BlockSpec((BS, E), lambda i: (0, 0)),        # sentence_embed (flat)
        pl.BlockSpec((B, E), lambda i: (0, 0)),         # pooled_output
        pl.BlockSpec((B, N, N), lambda i: (0, 0, 0)),   # dg
        pl.BlockSpec((B, N, N), lambda i: (0, 0, 0)),   # dg1
        pl.BlockSpec((BN, 1), lambda i: (0, 0)),        # tran span lo (global col)
        pl.BlockSpec((BN, 1), lambda i: (0, 0)),        # tran span hi
        pl.BlockSpec((BS, 1), lambda i: (0, 0)),        # target-token lo (global row)
        pl.BlockSpec((BS, 1), lambda i: (0, 0)),        # target-token hi
        pl.BlockSpec((B, 1), lambda i: (0, 0)),         # node-span lo (global col)
        pl.BlockSpec((B, 1), lambda i: (0, 0)),         # node-span hi
        pl.BlockSpec((E, H), lambda i: (0, 0)),         # W768 (bf16)
        pl.BlockSpec((3, H, H), lambda i: (0, 0, 0)),   # stacked GCN weights (bf16)
        pl.BlockSpec((3, 1, H), lambda i: (0, 0, 0)),   # stacked GCN biases (f32)
        pl.BlockSpec((OUT, E), lambda i: (0, 0)),       # fc_w^T chunk (pooled)
        pl.BlockSpec((OUT, E), lambda i: (0, 0)),       # fc_w^T chunk (cat)
        pl.BlockSpec((OUT, H), lambda i: (0, 0)),       # fc_w^T chunk (gcn_cat)
        pl.BlockSpec((1, OUT), lambda i: (0, 0)),       # fc bias
    ]
    return pl.pallas_call(
        _fused_kernel,
        out_shape=jax.ShapeDtypeStruct((B, OUT), jnp.float32),
        grid_spec=pltpu.PrefetchScalarGridSpec(
            num_scalar_prefetch=0,
            grid=(1,),
            in_specs=in_specs,
            out_specs=pl.BlockSpec((B, OUT), lambda i: (0, 0))),
        compiler_params=pltpu.CompilerParams(
            dimension_semantics=("arbitrary",),         # keep on one core (v7x)
            vmem_limit_bytes=32 * 1024 * 1024),
    )(se_flat, pooled, dg, dg1,
      tran_lo_g, tran_hi_g, tgt_lo_g, tgt_hi_g, span_lo_g, span_hi_g,
      params["w768"], params["gcn_w"], params["gcn_b"],
      params["fc_wp"], params["fc_wc"], params["fc_wg"], params["fc_b"])


# ------------------------------ forward pass ----------------------------------
@jax.jit
def forward(params, sentence_embed, pooled_output, input_t_ids, input_left_ids,
            dg, dg1, tran_indices, span_indices):
    # --- tiny integer glue: per-row global bounds for the in-kernel masks ---
    left_len = jnp.sum(input_left_ids != 0, axis=-1) - 1            # [B]
    target_len = jnp.sum(input_t_ids != 0, axis=1) - 2               # [B]
    t_start = jnp.clip(left_len, 0, S).astype(jnp.int32)
    t_end = jnp.clip(left_len + target_len, 0, S).astype(jnp.int32)

    batch_off_tok = jnp.arange(B, dtype=jnp.int32) * S               # [B]
    tgt_lo_g = jnp.repeat(t_start + batch_off_tok, S)[:, None]       # (B*S, 1)
    tgt_hi_g = jnp.repeat(t_end + batch_off_tok, S)[:, None]

    tran_lo = jnp.clip(tran_indices[..., 0] + 1, 0, S).astype(jnp.int32)   # (B, N)
    tran_hi = jnp.clip(tran_indices[..., 1] + 1, 0, S).astype(jnp.int32)
    tran_lo_g = (tran_lo + batch_off_tok[:, None]).reshape(BN, 1)
    tran_hi_g = (tran_hi + batch_off_tok[:, None]).reshape(BN, 1)

    batch_off_node = jnp.arange(B, dtype=jnp.int32) * N
    sp_lo = jnp.clip(span_indices[:, 0, 0], 0, N).astype(jnp.int32)
    sp_hi = jnp.clip(span_indices[:, 0, 1], 0, N).astype(jnp.int32)
    span_lo_g = (sp_lo + batch_off_node)[:, None]                    # (B, 1)
    span_hi_g = (sp_hi + batch_off_node)[:, None]

    se_flat = sentence_embed.reshape(BS, E)                          # free reshape

    return fused_forward(params, se_flat, pooled_output, dg, dg1,
                         tran_lo_g, tran_hi_g, tgt_lo_g, tgt_hi_g,
                         span_lo_g, span_hi_g)


# --------------------------- pure-JAX reference --------------------------------
def reference_forward(raw, sentence_embed, pooled_output, input_t_ids,
                      input_left_ids, dg, dg1, tran_indices, span_indices):
    left_len = jnp.sum(input_left_ids != 0, axis=-1) - 1
    target_len = jnp.sum(input_t_ids != 0, axis=1) - 2
    start = jnp.clip(left_len, 0, S)
    end = jnp.clip(left_len + target_len, 0, S)
    pos = jnp.arange(S)[None, :]
    tmask = (pos >= start[:, None]) & (pos < end[:, None])
    cat = jnp.max(jnp.where(tmask[:, :, None], sentence_embed, -1e30), axis=1)

    lo = jnp.clip(tran_indices[..., 0] + 1, 0, S)
    hi = jnp.clip(tran_indices[..., 1] + 1, 0, S)
    p = jnp.arange(S)[None, None, :]
    tr = ((p >= lo[..., None]) & (p < hi[..., None])).astype(jnp.float32)
    tmps = jnp.einsum('bns,bse->bne', tr, sentence_embed)
    gcn_text = jax.nn.relu(tmps @ raw["w768"])

    adj = dg + dg1
    adj = jnp.where(adj >= 1.0, 1.0, adj)
    denom = jnp.sum(adj, axis=2, keepdims=True) + EPS
    for i in range(3):
        hidden = gcn_text @ raw[f"gcn_w{i}"]
        out = jnp.einsum('bij,bjh->bih', adj, hidden) / denom + raw[f"gcn_b{i}"]
        gcn_text = jax.nn.relu(out) + gcn_text

    npos = jnp.arange(N)[None, :]
    sl = jnp.clip(span_indices[:, 0, 0:1], 0, N)
    sh = jnp.clip(span_indices[:, 0, 1:2], 0, N)
    sm = ((npos >= sl) & (npos < sh)).astype(jnp.float32)
    gcn_cat = jnp.einsum('bn,bnh->bh', sm, gcn_text)

    concat = jnp.concatenate([pooled_output, cat, gcn_cat], axis=1)
    return jnp.tanh(concat @ raw["fc_w"] + raw["fc_b"])


# ----------------------------- deterministic init ------------------------------
def xavier_uniform(key, shape):
    fan_in, fan_out = shape[0], shape[1]
    bound = math.sqrt(6.0 / (fan_in + fan_out))
    return jax.random.uniform(key, shape, jnp.float32, -bound, bound)


def init_params(key):
    keys = jax.random.split(key, 16)
    params = {"w768": xavier_uniform(keys[0], (E, H))}
    stdv = 1.0 / math.sqrt(H)
    for i in range(3):
        params[f"gcn_w{i}"] = xavier_uniform(keys[1 + i], (H, H))
        params[f"gcn_b{i}"] = jax.random.uniform(
            keys[4 + i], (1, H), jnp.float32, -stdv, stdv)
    params["fc_w"] = xavier_uniform(keys[7], (2 * E + H, OUT))
    params["fc_b"] = jax.random.uniform(
        keys[8], (1, OUT), jnp.float32,
        -1.0 / math.sqrt(2 * E + H), 1.0 / math.sqrt(2 * E + H))
    return params


def prepare_params(raw):
    """Kernel-ready layouts: bf16 weights for the MXU dots, stacked GCN params,
    transposed (lane-dense) FC weight chunks for the VPU reduce."""
    fc_w = raw["fc_w"]
    return {
        "w768": raw["w768"].astype(jnp.bfloat16),                              # (E, H)
        "gcn_w": jnp.stack([raw[f"gcn_w{i}"] for i in range(3)]).astype(jnp.bfloat16),
        "gcn_b": jnp.stack([raw[f"gcn_b{i}"] for i in range(3)]),              # (3,1,H)
        "fc_wp": jnp.transpose(fc_w[:E, :]),                                   # (OUT, E)
        "fc_wc": jnp.transpose(fc_w[E:2 * E, :]),                              # (OUT, E)
        "fc_wg": jnp.transpose(fc_w[2 * E:, :]),                               # (OUT, H)
        "fc_b": raw["fc_b"],                                                   # (1, OUT)
    }


# ----------------------------------- main --------------------------------------
if __name__ == "__main__":
    key = jax.random.PRNGKey(0)
    k_param, k_emb, k_pool, k_dg, k_dg1 = jax.random.split(key, 5)

    raw_params = init_params(k_param)
    params = prepare_params(raw_params)

    # Synthetic BERT outputs (see TODO(synk) above).
    sentence_embed = jax.random.normal(k_emb, (B, S, E), jnp.float32)
    pooled_output = jax.random.normal(k_pool, (B, E), jnp.float32)

    # Token-id tensors only used for their non-zero counts.
    input_left_ids = jnp.zeros((B, S), jnp.int32)
    input_left_ids = input_left_ids.at[0, :4].set(1).at[1, :5].set(1)   # left_len = 3, 4
    input_t_ids = jnp.zeros((B, S), jnp.int32)
    input_t_ids = input_t_ids.at[0, :4].set(1).at[1, :5].set(1)         # target_len = 2, 3

    # Random binary dependency-graph adjacencies.
    dg = jax.random.bernoulli(k_dg, 0.3, (B, N, N)).astype(jnp.float32)
    dg1 = jax.random.bernoulli(k_dg1, 0.3, (B, N, N)).astype(jnp.float32)

    # tran_indices: node j covers word pieces in span (j, j+1) -> tokens [j+1, j+2)
    base = jnp.arange(N, dtype=jnp.int32)
    tran_indices = jnp.stack(
        [jnp.stack([base, base + 1], axis=-1)] * B, axis=0)             # [B, N, 2]

    # span_indices[i][0] = (start, end) over graph nodes.
    span_indices = jnp.array([[[2, 5]], [[1, 4]]], jnp.int32)           # [B, 1, 2]

    logits = forward(params, sentence_embed, pooled_output,
                     input_t_ids, input_left_ids, dg, dg1,
                     tran_indices, span_indices)
    logits = jax.block_until_ready(logits)

    ref = reference_forward(raw_params, sentence_embed, pooled_output,
                            input_t_ids, input_left_ids, dg, dg1,
                            tran_indices, span_indices)

    assert logits.shape == (B, OUT)
    assert bool(jnp.all(jnp.isfinite(logits)))
    max_diff = float(jnp.max(jnp.abs(logits - ref)))
    assert max_diff < 0.25, f"mismatch vs f32 reference: max |diff| = {max_diff}"
    print("KERNEL_OK")
</pallas_src>

<mosaic_0001>
module attributes {stable_mosaic.version = 11 : i64} {
  func.func @_fused_kernel(%arg0: i32, %arg1: memref<32x768xf32, #tpu.memory_space<vmem>>, %arg2: memref<2x768xf32, #tpu.memory_space<vmem>>, %arg3: memref<2x16x16xf32, #tpu.memory_space<vmem>>, %arg4: memref<2x16x16xf32, #tpu.memory_space<vmem>>, %arg5: memref<32x1xi32, #tpu.memory_space<vmem>>, %arg6: memref<32x1xi32, #tpu.memory_space<vmem>>, %arg7: memref<32x1xi32, #tpu.memory_space<vmem>>, %arg8: memref<32x1xi32, #tpu.memory_space<vmem>>, %arg9: memref<2x1xi32, #tpu.memory_space<vmem>>, %arg10: memref<2x1xi32, #tpu.memory_space<vmem>>, %arg11: memref<768x128xbf16, #tpu.memory_space<vmem>>, %arg12: memref<3x128x128xbf16, #tpu.memory_space<vmem>>, %arg13: memref<3x1x128xf32, #tpu.memory_space<vmem>>, %arg14: memref<3x768xf32, #tpu.memory_space<vmem>>, %arg15: memref<3x768xf32, #tpu.memory_space<vmem>>, %arg16: memref<3x128xf32, #tpu.memory_space<vmem>>, %arg17: memref<1x3xf32, #tpu.memory_space<vmem>>, %arg18: memref<2x3xf32, #tpu.memory_space<vmem>>) attributes {dimension_semantics = [#tpu.dimension_semantics<arbitrary>], iteration_bounds = array<i64: 1>, scalar_prefetch = 0 : i64, scratch_operands = 0 : i64, tpu.core_type = #tpu.core_type<tc>, window_params = [{pipeline_mode = #tpu.pipeline_mode<synchronous>, transform_indices = @transform_0, window_bounds = array<i64: 32, 768>}, {pipeline_mode = #tpu.pipeline_mode<synchronous>, transform_indices = @transform_1, window_bounds = array<i64: 2, 768>}, {pipeline_mode = #tpu.pipeline_mode<synchronous>, transform_indices = @transform_2, window_bounds = array<i64: 2, 16, 16>}, {pipeline_mode = #tpu.pipeline_mode<synchronous>, transform_indices = @transform_3, window_bounds = array<i64: 2, 16, 16>}, {pipeline_mode = #tpu.pipeline_mode<synchronous>, transform_indices = @transform_4, window_bounds = array<i64: 32, 1>}, {pipeline_mode = #tpu.pipeline_mode<synchronous>, transform_indices = @transform_5, window_bounds = array<i64: 32, 1>}, {pipeline_mode = #tpu.pipeline_mode<synchronous>, transform_indices = @transform_6, window_bounds = array<i64: 32, 1>}, {pipeline_mode = #tpu.pipeline_mode<synchronous>, transform_indices = @transform_7, window_bounds = array<i64: 32, 1>}, {pipeline_mode = #tpu.pipeline_mode<synchronous>, transform_indices = @transform_8, window_bounds = array<i64: 2, 1>}, {pipeline_mode = #tpu.pipeline_mode<synchronous>, transform_indices = @transform_9, window_bounds = array<i64: 2, 1>}, {pipeline_mode = #tpu.pipeline_mode<synchronous>, transform_indices = @transform_10, window_bounds = array<i64: 768, 128>}, {pipeline_mode = #tpu.pipeline_mode<synchronous>, transform_indices = @transform_11, window_bounds = array<i64: 3, 128, 128>}, {pipeline_mode = #tpu.pipeline_mode<synchronous>, transform_indices = @transform_12, window_bounds = array<i64: 3, 1, 128>}, {pipeline_mode = #tpu.pipeline_mode<synchronous>, transform_indices = @transform_13, window_bounds = array<i64: 3, 768>}, {pipeline_mode = #tpu.pipeline_mode<synchronous>, transform_indices = @transform_14, window_bounds = array<i64: 3, 768>}, {pipeline_mode = #tpu.pipeline_mode<synchronous>, transform_indices = @transform_15, window_bounds = array<i64: 3, 128>}, {pipeline_mode = #tpu.pipeline_mode<synchronous>, transform_indices = @transform_16, window_bounds = array<i64: 1, 3>}, {pipeline_mode = #tpu.pipeline_mode<synchronous>, transform_indices = @transform_17, window_bounds = array<i64: 2, 3>}]} {
    %c0 = arith.constant 0 : index
    %c0_0 = arith.constant 0 : index
    %0 = vector.load %arg1[%c0, %c0_0] : memref<32x768xf32, #tpu.memory_space<vmem>>, vector<32x768xf32>
    %1 = tpu.iota {dimensions = array<i32: 0>} : vector<32x1xi32>
    %c0_1 = arith.constant 0 : index
    %c0_2 = arith.constant 0 : index
    %2 = vector.load %arg7[%c0_1, %c0_2] : memref<32x1xi32, #tpu.memory_space<vmem>>, vector<32x1xi32>
    %3 = arith.cmpi sge, %1, %2 : vector<32x1xi32>
    %c0_3 = arith.constant 0 : index
    %c0_4 = arith.constant 0 : index
    %4 = vector.load %arg8[%c0_3, %c0_4] : memref<32x1xi32, #tpu.memory_space<vmem>>, vector<32x1xi32>
    %5 = arith.cmpi slt, %1, %4 : vector<32x1xi32>
    %6 = arith.andi %3, %5 : vector<32x1xi1>
    %cst = arith.constant -1.000000e+30 : f32
    %7 = vector.shape_cast %6 : vector<32x1xi1> to vector<32x1xi1>
    %8 = vector.broadcast %7 : vector<32x1xi1> to vector<32x768xi1>
    %9 = vector.broadcast %cst : f32 to vector<32x768xf32>
    %10 = arith.select %8, %0, %9 : vector<32x768xi1>, vector<32x768xf32>
    %11 = tpu.iota {dimensions = array<i32: 0>} : vector<2x1xi32>
    %12 = vector.extract_strided_slice %10 {offsets = [0, 0], sizes = [16, 768], strides = [1, 1]} : vector<32x768xf32> to vector<16x768xf32>
    %cst_5 = arith.constant dense<0xFF800000> : vector<768xf32>
    %13 = vector.multi_reduction <maximumf>, %12, %cst_5 [0] : vector<16x768xf32> to vector<768xf32>
    %14 = vector.shape_cast %13 : vector<768xf32> to vector<1x768xf32>
    %15 = vector.extract_strided_slice %10 {offsets = [16, 0], sizes = [16, 768], strides = [1, 1]} : vector<32x768xf32> to vector<16x768xf32>
    %cst_6 = arith.constant dense<0xFF800000> : vector<768xf32>
    %16 = vector.multi_reduction <maximumf>, %15, %cst_6 [0] : vector<16x768xf32> to vector<768xf32>
    %17 = vector.shape_cast %16 : vector<768xf32> to vector<1x768xf32>
    %c0_i32 = arith.constant 0 : i32
    %18 = vector.broadcast %c0_i32 : i32 to vector<2x1xi32>
    %19 = arith.cmpi eq, %11, %18 : vector<2x1xi32>
    %20 = vector.shape_cast %19 : vector<2x1xi1> to vector<2x1xi1>
    %21 = vector.broadcast %20 : vector<2x1xi1> to vector<2x768xi1>
    %22 = vector.shape_cast %14 : vector<1x768xf32> to vector<1x768xf32>
    %23 = vector.broadcast %22 : vector<1x768xf32> to vector<2x768xf32>
    %24 = vector.shape_cast %17 : vector<1x768xf32> to vector<1x768xf32>
    %25 = vector.broadcast %24 : vector<1x768xf32> to vector<2x768xf32>
    %26 = arith.select %21, %23, %25 : vector<2x768xi1>, vector<2x768xf32>
    %27 = tpu.iota {dimensions = array<i32: 1>} : vector<32x32xi32>
    %c0_7 = arith.constant 0 : index
    %c0_8 = arith.constant 0 : index
    %28 = vector.load %arg5[%c0_7, %c0_8] : memref<32x1xi32, #tpu.memory_space<vmem>>, vector<32x1xi32>
    %29 = vector.broadcast %28 : vector<32x1xi32> to vector<32x32xi32>
    %30 = arith.cmpi sge, %27, %29 : vector<32x32xi32>
    %c0_9 = arith.constant 0 : index
    %c0_10 = arith.constant 0 : index
    %31 = vector.load %arg6[%c0_9, %c0_10] : memref<32x1xi32, #tpu.memory_space<vmem>>, vector<32x1xi32>
    %32 = vector.broadcast %31 : vector<32x1xi32> to vector<32x32xi32>
    %33 = arith.cmpi slt, %27, %32 : vector<32x32xi32>
    %34 = arith.andi %30, %33 : vector<32x32xi1>
    %cst_11 = arith.constant 1.000000e+00 : f32
    %cst_12 = arith.constant 0.000000e+00 : f32
    %35 = vector.broadcast %cst_11 : f32 to vector<32x32xf32>
    %36 = vector.broadcast %cst_12 : f32 to vector<32x32xf32>
    %37 = arith.select %34, %35, %36 : vector<32x32xi1>, vector<32x32xf32>
    %38 = arith.truncf %37 : vector<32x32xf32> to vector<32x32xbf16>
    %39 = arith.truncf %0 : vector<32x768xf32> to vector<32x768xbf16>
    %cst_13 = arith.constant dense<0.000000e+00> : vector<32x768xf32>
    %40 = tpu.matmul %38, %39, %cst_13 {dimension_numbers = #tpu.dot_dimension_numbers<[1], [0], [0], [1], [0, 0, 1, 1], [], []>} : vector<32x32xbf16>, vector<32x768xbf16>, vector<32x768xf32> -> vector<32x768xf32>
    %41 = arith.truncf %40 : vector<32x768xf32> to vector<32x768xbf16>
    %c0_14 = arith.constant 0 : index
    %c0_15 = arith.constant 0 : index
    %42 = vector.load %arg11[%c0_14, %c0_15] : memref<768x128xbf16, #tpu.memory_space<vmem>>, vector<768x128xbf16>
    %cst_16 = arith.constant dense<0.000000e+00> : vector<32x128xf32>
    %43 = tpu.matmul %41, %42, %cst_16 {dimension_numbers = #tpu.dot_dimension_numbers<[1], [0], [0], [1], [0, 0, 1, 1], [], []>} : vector<32x768xbf16>, vector<768x128xbf16>, vector<32x128xf32> -> vector<32x128xf32>
    %cst_17 = arith.constant 0.000000e+00 : f32
    %44 = vector.broadcast %cst_17 : f32 to vector<32x128xf32>
    %45 = arith.maximumf %43, %44 : vector<32x128xf32>
    %c0_18 = arith.constant 0 : index
    %c0_19 = arith.constant 0 : index
    %c0_20 = arith.constant 0 : index
    %46 = vector.load %arg3[%c0_18, %c0_19, %c0_20] : memref<2x16x16xf32, #tpu.memory_space<vmem>>, vector<1x16x16xf32>
    %47 = vector.shape_cast %46 : vector<1x16x16xf32> to vector<16x16xf32>
    %c0_21 = arith.constant 0 : index
    %c0_22 = arith.constant 0 : index
    %c0_23 = arith.constant 0 : index
    %48 = vector.load %arg4[%c0_21, %c0_22, %c0_23] : memref<2x16x16xf32, #tpu.memory_space<vmem>>, vector<1x16x16xf32>
    %49 = vector.shape_cast %48 : vector<1x16x16xf32> to vector<16x16xf32>
    %50 = arith.addf %47, %49 : vector<16x16xf32>
    %cst_24 = arith.constant 1.000000e+00 : f32
    %51 = vector.broadcast %cst_24 : f32 to vector<16x16xf32>
    %52 = arith.cmpf oge, %50, %51 : vector<16x16xf32>
    %cst_25 = arith.constant 1.000000e+00 : f32
    %53 = vector.broadcast %cst_25 : f32 to vector<16x16xf32>
    %54 = arith.select %52, %53, %50 : vector<16x16xi1>, vector<16x16xf32>
    %cst_26 = arith.constant dense<0.000000e+00> : vector<16xf32>
    %55 = vector.multi_reduction <add>, %54, %cst_26 [1] : vector<16x16xf32> to vector<16xf32>
    %56 = vector.shape_cast %55 : vector<16xf32> to vector<16x1xf32>
    %cst_27 = arith.constant 1.000000e-07 : f32
    %57 = vector.broadcast %cst_27 : f32 to vector<16x1xf32>
    %58 = arith.addf %56, %57 : vector<16x1xf32>
    %59 = tpu.reciprocal %58 {approx = true} : vector<16x1xf32> -> vector<16x1xf32>
    %c1 = arith.constant 1 : index
    %c0_28 = arith.constant 0 : index
    %c0_29 = arith.constant 0 : index
    %60 = vector.load %arg3[%c1, %c0_28, %c0_29] : memref<2x16x16xf32, #tpu.memory_space<vmem>>, vector<1x16x16xf32>
    %61 = vector.shape_cast %60 : vector<1x16x16xf32> to vector<16x16xf32>
    %c1_30 = arith.constant 1 : index
    %c0_31 = arith.constant 0 : index
    %c0_32 = arith.constant 0 : index
    %62 = vector.load %arg4[%c1_30, %c0_31, %c0_32] : memref<2x16x16xf32, #tpu.memory_space<vmem>>, vector<1x16x16xf32>
    %63 = vector.shape_cast %62 : vector<1x16x16xf32> to vector<16x16xf32>
    %64 = arith.addf %61, %63 : vector<16x16xf32>
    %cst_33 = arith.constant 1.000000e+00 : f32
    %65 = vector.broadcast %cst_33 : f32 to vector<16x16xf32>
    %66 = arith.cmpf oge, %64, %65 : vector<16x16xf32>
    %cst_34 = arith.constant 1.000000e+00 : f32
    %67 = vector.broadcast %cst_34 : f32 to vector<16x16xf32>
    %68 = arith.select %66, %67, %64 : vector<16x16xi1>, vector<16x16xf32>
    %cst_35 = arith.constant dense<0.000000e+00> : vector<16xf32>
    %69 = vector.multi_reduction <add>, %68, %cst_35 [1] : vector<16x16xf32> to vector<16xf32>
    %70 = vector.shape_cast %69 : vector<16xf32> to vector<16x1xf32>
    %cst_36 = arith.constant 1.000000e-07 : f32
    %71 = vector.broadcast %cst_36 : f32 to vector<16x1xf32>
    %72 = arith.addf %70, %71 : vector<16x1xf32>
    %73 = tpu.reciprocal %72 {approx = true} : vector<16x1xf32> -> vector<16x1xf32>
    %c0_37 = arith.constant 0 : index
    %c0_38 = arith.constant 0 : index
    %c0_39 = arith.constant 0 : index
    %74 = vector.load %arg12[%c0_37, %c0_38, %c0_39] : memref<3x128x128xbf16, #tpu.memory_space<vmem>>, vector<1x128x128xbf16>
    %75 = vector.shape_cast %74 : vector<1x128x128xbf16> to vector<128x128xbf16>
    %c0_40 = arith.constant 0 : index
    %c0_41 = arith.constant 0 : index
    %c0_42 = arith.constant 0 : index
    %76 = vector.load %arg13[%c0_40, %c0_41, %c0_42] : memref<3x1x128xf32, #tpu.memory_space<vmem>>, vector<1x1x128xf32>
    %77 = vector.shape_cast %76 : vector<1x1x128xf32> to vector<1x128xf32>
    %78 = arith.truncf %45 : vector<32x128xf32> to vector<32x128xbf16>
    %cst_43 = arith.constant dense<0.000000e+00> : vector<32x128xf32>
    %79 = tpu.matmul %78, %75, %cst_43 {dimension_numbers = #tpu.dot_dimension_numbers<[1], [0], [0], [1], [0, 0, 1, 1], [], []>} : vector<32x128xbf16>, vector<128x128xbf16>, vector<32x128xf32> -> vector<32x128xf32>
    %80 = vector.extract_strided_slice %79 {offsets = [0, 0], sizes = [16, 128], strides = [1, 1]} : vector<32x128xf32> to vector<16x128xf32>
    %cst_44 = arith.constant dense<0.000000e+00> : vector<16x128xf32>
    %81 = tpu.matmul %54, %80, %cst_44 {dimension_numbers = #tpu.dot_dimension_numbers<[1], [0], [0], [1], [0, 0, 1, 1], [], []>} : vector<16x16xf32>, vector<16x128xf32>, vector<16x128xf32> -> vector<16x128xf32>
    %82 = vector.broadcast %59 : vector<16x1xf32> to vector<16x128xf32>
    %83 = arith.mulf %81, %82 : vector<16x128xf32>
    %84 = vector.extract_strided_slice %79 {offsets = [16, 0], sizes = [16, 128], strides = [1, 1]} : vector<32x128xf32> to vector<16x128xf32>
    %cst_45 = arith.constant dense<0.000000e+00> : vector<16x128xf32>
    %85 = tpu.matmul %68, %84, %cst_45 {dimension_numbers = #tpu.dot_dimension_numbers<[1], [0], [0], [1], [0, 0, 1, 1], [], []>} : vector<16x16xf32>, vector<16x128xf32>, vector<16x128xf32> -> vector<16x128xf32>
    %86 = vector.broadcast %73 : vector<16x1xf32> to vector<16x128xf32>
    %87 = arith.mulf %85, %86 : vector<16x128xf32>
    %88 = tpu.concatenate %83, %87 in 0 : vector<16x128xf32>, vector<16x128xf32> -> vector<32x128xf32>
    %89 = vector.broadcast %77 : vector<1x128xf32> to vector<32x128xf32>
    %90 = arith.addf %88, %89 : vector<32x128xf32>
    %cst_46 = arith.constant 0.000000e+00 : f32
    %91 = vector.broadcast %cst_46 : f32 to vector<32x128xf32>
    %92 = arith.maximumf %90, %91 : vector<32x128xf32>
    %93 = arith.addf %92, %45 : vector<32x128xf32>
    %c1_47 = arith.constant 1 : index
    %c0_48 = arith.constant 0 : index
    %c0_49 = arith.constant 0 : index
    %94 = vector.load %arg12[%c1_47, %c0_48, %c0_49] : memref<3x128x128xbf16, #tpu.memory_space<vmem>>, vector<1x128x128xbf16>
    %95 = vector.shape_cast %94 : vector<1x128x128xbf16> to vector<128x128xbf16>
    %c1_50 = arith.constant 1 : index
    %c0_51 = arith.constant 0 : index
    %c0_52 = arith.constant 0 : index
    %96 = vector.load %arg13[%c1_50, %c0_51, %c0_52] : memref<3x1x128xf32, #tpu.memory_space<vmem>>, vector<1x1x128xf32>
    %97 = vector.shape_cast %96 : vector<1x1x128xf32> to vector<1x128xf32>
    %98 = arith.truncf %93 : vector<32x128xf32> to vector<32x128xbf16>
    %cst_53 = arith.constant dense<0.000000e+00> : vector<32x128xf32>
    %99 = tpu.matmul %98, %95, %cst_53 {dimension_numbers = #tpu.dot_dimension_numbers<[1], [0], [0], [1], [0, 0, 1, 1], [], []>} : vector<32x128xbf16>, vector<128x128xbf16>, vector<32x128xf32> -> vector<32x128xf32>
    %100 = vector.extract_strided_slice %99 {offsets = [0, 0], sizes = [16, 128], strides = [1, 1]} : vector<32x128xf32> to vector<16x128xf32>
    %cst_54 = arith.constant dense<0.000000e+00> : vector<16x128xf32>
    %101 = tpu.matmul %54, %100, %cst_54 {dimension_numbers = #tpu.dot_dimension_numbers<[1], [0], [0], [1], [0, 0, 1, 1], [], []>} : vector<16x16xf32>, vector<16x128xf32>, vector<16x128xf32> -> vector<16x128xf32>
    %102 = vector.broadcast %59 : vector<16x1xf32> to vector<16x128xf32>
    %103 = arith.mulf %101, %102 : vector<16x128xf32>
    %104 = vector.extract_strided_slice %99 {offsets = [16, 0], sizes = [16, 128], strides = [1, 1]} : vector<32x128xf32> to vector<16x128xf32>
    %cst_55 = arith.constant dense<0.000000e+00> : vector<16x128xf32>
    %105 = tpu.matmul %68, %104, %cst_55 {dimension_numbers = #tpu.dot_dimension_numbers<[1], [0], [0], [1], [0, 0, 1, 1], [], []>} : vector<16x16xf32>, vector<16x128xf32>, vector<16x128xf32> -> vector<16x128xf32>
    %106 = vector.broadcast %73 : vector<16x1xf32> to vector<16x128xf32>
    %107 = arith.mulf %105, %106 : vector<16x128xf32>
    %108 = tpu.concatenate %103, %107 in 0 : vector<16x128xf32>, vector<16x128xf32> -> vector<32x128xf32>
    %109 = vector.broadcast %97 : vector<1x128xf32> to vector<32x128xf32>
    %110 = arith.addf %108, %109 : vector<32x128xf32>
    %cst_56 = arith.constant 0.000000e+00 : f32
    %111 = vector.broadcast %cst_56 : f32 to vector<32x128xf32>
    %112 = arith.maximumf %110, %111 : vector<32x128xf32>
    %113 = arith.addf %112, %93 : vector<32x128xf32>
    %c2 = arith.constant 2 : index
    %c0_57 = arith.constant 0 : index
    %c0_58 = arith.constant 0 : index
    %114 = vector.load %arg12[%c2, %c0_57, %c0_58] : memref<3x128x128xbf16, #tpu.memory_space<vmem>>, vector<1x128x128xbf16>
    %115 = vector.shape_cast %114 : vector<1x128x128xbf16> to vector<128x128xbf16>
    %c2_59 = arith.constant 2 : index
    %c0_60 = arith.constant 0 : index
    %c0_61 = arith.constant 0 : index
    %116 = vector.load %arg13[%c2_59, %c0_60, %c0_61] : memref<3x1x128xf32, #tpu.memory_space<vmem>>, vector<1x1x128xf32>
    %117 = vector.shape_cast %116 : vector<1x1x128xf32> to vector<1x128xf32>
    %118 = arith.truncf %113 : vector<32x128xf32> to vector<32x128xbf16>
    %cst_62 = arith.constant dense<0.000000e+00> : vector<32x128xf32>
    %119 = tpu.matmul %118, %115, %cst_62 {dimension_numbers = #tpu.dot_dimension_numbers<[1], [0], [0], [1], [0, 0, 1, 1], [], []>} : vector<32x128xbf16>, vector<128x128xbf16>, vector<32x128xf32> -> vector<32x128xf32>
    %120 = vector.extract_strided_slice %119 {offsets = [0, 0], sizes = [16, 128], strides = [1, 1]} : vector<32x128xf32> to vector<16x128xf32>
    %cst_63 = arith.constant dense<0.000000e+00> : vector<16x128xf32>
    %121 = tpu.matmul %54, %120, %cst_63 {dimension_numbers = #tpu.dot_dimension_numbers<[1], [0], [0], [1], [0, 0, 1, 1], [], []>} : vector<16x16xf32>, vector<16x128xf32>, vector<16x128xf32> -> vector<16x128xf32>
    %122 = vector.broadcast %59 : vector<16x1xf32> to vector<16x128xf32>
    %123 = arith.mulf %121, %122 : vector<16x128xf32>
    %124 = vector.extract_strided_slice %119 {offsets = [16, 0], sizes = [16, 128], strides = [1, 1]} : vector<32x128xf32> to vector<16x128xf32>
    %cst_64 = arith.constant dense<0.000000e+00> : vector<16x128xf32>
    %125 = tpu.matmul %68, %124, %cst_64 {dimension_numbers = #tpu.dot_dimension_numbers<[1], [0], [0], [1], [0, 0, 1, 1], [], []>} : vector<16x16xf32>, vector<16x128xf32>, vector<16x128xf32> -> vector<16x128xf32>
    %126 = vector.broadcast %73 : vector<16x1xf32> to vector<16x128xf32>
    %127 = arith.mulf %125, %126 : vector<16x128xf32>
    %128 = tpu.concatenate %123, %127 in 0 : vector<16x128xf32>, vector<16x128xf32> -> vector<32x128xf32>
    %129 = vector.broadcast %117 : vector<1x128xf32> to vector<32x128xf32>
    %130 = arith.addf %128, %129 : vector<32x128xf32>
    %cst_65 = arith.constant 0.000000e+00 : f32
    %131 = vector.broadcast %cst_65 : f32 to vector<32x128xf32>
    %132 = arith.maximumf %130, %131 : vector<32x128xf32>
    %133 = arith.addf %132, %113 : vector<32x128xf32>
    %134 = tpu.iota {dimensions = array<i32: 1>} : vector<2x32xi32>
    %c0_66 = arith.constant 0 : index
    %c0_67 = arith.constant 0 : index
    %135 = vector.load %arg9[%c0_66, %c0_67] : memref<2x1xi32, #tpu.memory_space<vmem>>, vector<2x1xi32>
    %136 = vector.broadcast %135 : vector<2x1xi32> to vector<2x32xi32>
    %137 = arith.cmpi sge, %134, %136 : vector<2x32xi32>
    %c0_68 = arith.constant 0 : index
    %c0_69 = arith.constant 0 : index
    %138 = vector.load %arg10[%c0_68, %c0_69] : memref<2x1xi32, #tpu.memory_space<vmem>>, vector<2x1xi32>
    %139 = vector.broadcast %138 : vector<2x1xi32> to vector<2x32xi32>
    %140 = arith.cmpi slt, %134, %139 : vector<2x32xi32>
    %141 = arith.andi %137, %140 : vector<2x32xi1>
    %cst_70 = arith.constant 1.000000e+00 : f32
    %cst_71 = arith.constant 0.000000e+00 : f32
    %142 = vector.broadcast %cst_70 : f32 to vector<2x32xf32>
    %143 = vector.broadcast %cst_71 : f32 to vector<2x32xf32>
    %144 = arith.select %141, %142, %143 : vector<2x32xi1>, vector<2x32xf32>
    %cst_72 = arith.constant dense<0.000000e+00> : vector<2x128xf32>
    %145 = tpu.matmul %144, %133, %cst_72 {dimension_numbers = #tpu.dot_dimension_numbers<[1], [0], [0], [1], [0, 0, 1, 1], [], []>} : vector<2x32xf32>, vector<32x128xf32>, vector<2x128xf32> -> vector<2x128xf32>
    %c0_73 = arith.constant 0 : index
    %c0_74 = arith.constant 0 : index
    %146 = vector.load %arg2[%c0_73, %c0_74] : memref<2x768xf32, #tpu.memory_space<vmem>>, vector<2x768xf32>
    %c0_75 = arith.constant 0 : index
    %c0_76 = arith.constant 0 : index
    %147 = vector.load %arg14[%c0_75, %c0_76] : memref<3x768xf32, #tpu.memory_space<vmem>>, vector<1x768xf32>
    %148 = vector.broadcast %147 : vector<1x768xf32> to vector<2x768xf32>
    %149 = arith.mulf %146, %148 : vector<2x768xf32>
    %cst_77 = arith.constant dense<0.000000e+00> : vector<2xf32>
    %150 = vector.multi_reduction <add>, %149, %cst_77 [1] : vector<2x768xf32> to vector<2xf32>
    %151 = vector.shape_cast %150 : vector<2xf32> to vector<2x1xf32>
    %c0_78 = arith.constant 0 : index
    %c0_79 = arith.constant 0 : index
    %152 = vector.load %arg15[%c0_78, %c0_79] : memref<3x768xf32, #tpu.memory_space<vmem>>, vector<1x768xf32>
    %153 = vector.broadcast %152 : vector<1x768xf32> to vector<2x768xf32>
    %154 = arith.mulf %26, %153 : vector<2x768xf32>
    %cst_80 = arith.constant dense<0.000000e+00> : vector<2xf32>
    %155 = vector.multi_reduction <add>, %154, %cst_80 [1] : vector<2x768xf32> to vector<2xf32>
    %156 = vector.shape_cast %155 : vector<2xf32> to vector<2x1xf32>
    %157 = arith.addf %151, %156 : vector<2x1xf32>
    %c0_81 = arith.constant 0 : index
    %c0_82 = arith.constant 0 : index
    %158 = vector.load %arg16[%c0_81, %c0_82] : memref<3x128xf32, #tpu.memory_space<vmem>>, vector<1x128xf32>
    %159 = vector.broadcast %158 : vector<1x128xf32> to vector<2x128xf32>
    %160 = arith.mulf %145, %159 : vector<2x128xf32>
    %cst_83 = arith.constant dense<0.000000e+00> : vector<2xf32>
    %161 = vector.multi_reduction <add>, %160, %cst_83 [1] : vector<2x128xf32> to vector<2xf32>
    %162 = vector.shape_cast %161 : vector<2xf32> to vector<2x1xf32>
    %163 = arith.addf %157, %162 : vector<2x1xf32>
    %c1_84 = arith.constant 1 : index
    %c0_85 = arith.constant 0 : index
    %164 = vector.load %arg14[%c1_84, %c0_85] : memref<3x768xf32, #tpu.memory_space<vmem>>, vector<1x768xf32>
    %165 = vector.broadcast %164 : vector<1x768xf32> to vector<2x768xf32>
    %166 = arith.mulf %146, %165 : vector<2x768xf32>
    %cst_86 = arith.constant dense<0.000000e+00> : vector<2xf32>
    %167 = vector.multi_reduction <add>, %166, %cst_86 [1] : vector<2x768xf32> to vector<2xf32>
    %168 = vector.shape_cast %167 : vector<2xf32> to vector<2x1xf32>
    %c1_87 = arith.constant 1 : index
    %c0_88 = arith.constant 0 : index
    %169 = vector.load %arg15[%c1_87, %c0_88] : memref<3x768xf32, #tpu.memory_space<vmem>>, vector<1x768xf32>
    %170 = vector.broadcast %169 : vector<1x768xf32> to vector<2x768xf32>
    %171 = arith.mulf %26, %170 : vector<2x768xf32>
    %cst_89 = arith.constant dense<0.000000e+00> : vector<2xf32>
    %172 = vector.multi_reduction <add>, %171, %cst_89 [1] : vector<2x768xf32> to vector<2xf32>
    %173 = vector.shape_cast %172 : vector<2xf32> to vector<2x1xf32>
    %174 = arith.addf %168, %173 : vector<2x1xf32>
    %c1_90 = arith.constant 1 : index
    %c0_91 = arith.constant 0 : index
    %175 = vector.load %arg16[%c1_90, %c0_91] : memref<3x128xf32, #tpu.memory_space<vmem>>, vector<1x128xf32>
    %176 = vector.broadcast %175 : vector<1x128xf32> to vector<2x128xf32>
    %177 = arith.mulf %145, %176 : vector<2x128xf32>
    %cst_92 = arith.constant dense<0.000000e+00> : vector<2xf32>
    %178 = vector.multi_reduction <add>, %177, %cst_92 [1] : vector<2x128xf32> to vector<2xf32>
    %179 = vector.shape_cast %178 : vector<2xf32> to vector<2x1xf32>
    %180 = arith.addf %174, %179 : vector<2x1xf32>
    %c2_93 = arith.constant 2 : index
    %c0_94 = arith.constant 0 : index
    %181 = vector.load %arg14[%c2_93, %c0_94] : memref<3x768xf32, #tpu.memory_space<vmem>>, vector<1x768xf32>
    %182 = vector.broadcast %181 : vector<1x768xf32> to vector<2x768xf32>
    %183 = arith.mulf %146, %182 : vector<2x768xf32>
    %cst_95 = arith.constant dense<0.000000e+00> : vector<2xf32>
    %184 = vector.multi_reduction <add>, %183, %cst_95 [1] : vector<2x768xf32> to vector<2xf32>
    %185 = vector.shape_cast %184 : vector<2xf32> to vector<2x1xf32>
    %c2_96 = arith.constant 2 : index
    %c0_97 = arith.constant 0 : index
    %186 = vector.load %arg15[%c2_96, %c0_97] : memref<3x768xf32, #tpu.memory_space<vmem>>, vector<1x768xf32>
    %187 = vector.broadcast %186 : vector<1x768xf32> to vector<2x768xf32>
    %188 = arith.mulf %26, %187 : vector<2x768xf32>
    %cst_98 = arith.constant dense<0.000000e+00> : vector<2xf32>
    %189 = vector.multi_reduction <add>, %188, %cst_98 [1] : vector<2x768xf32> to vector<2xf32>
    %190 = vector.shape_cast %189 : vector<2xf32> to vector<2x1xf32>
    %191 = arith.addf %185, %190 : vector<2x1xf32>
    %c2_99 = arith.constant 2 : index
    %c0_100 = arith.constant 0 : index
    %192 = vector.load %arg16[%c2_99, %c0_100] : memref<3x128xf32, #tpu.memory_space<vmem>>, vector<1x128xf32>
    %193 = vector.broadcast %192 : vector<1x128xf32> to vector<2x128xf32>
    %194 = arith.mulf %145, %193 : vector<2x128xf32>
    %cst_101 = arith.constant dense<0.000000e+00> : vector<2xf32>
    %195 = vector.multi_reduction <add>, %194, %cst_101 [1] : vector<2x128xf32> to vector<2xf32>
    %196 = vector.shape_cast %195 : vector<2xf32> to vector<2x1xf32>
    %197 = arith.addf %191, %196 : vector<2x1xf32>
    %198 = tpu.iota {dimensions = array<i32: 1>} : vector<2x3xi32>
    %c1_i32 = arith.constant 1 : i32
    %199 = vector.broadcast %c1_i32 : i32 to vector<2x3xi32>
    %200 = arith.cmpi eq, %198, %199 : vector<2x3xi32>
    %201 = vector.shape_cast %180 : vector<2x1xf32> to vector<2x1xf32>
    %202 = vector.broadcast %201 : vector<2x1xf32> to vector<2x3xf32>
    %203 = vector.shape_cast %197 : vector<2x1xf32> to vector<2x1xf32>
    %204 = vector.broadcast %203 : vector<2x1xf32> to vector<2x3xf32>
    %205 = arith.select %200, %202, %204 : vector<2x3xi1>, vector<2x3xf32>
    %c0_i32_102 = arith.constant 0 : i32
    %206 = vector.broadcast %c0_i32_102 : i32 to vector<2x3xi32>
    %207 = arith.cmpi eq, %198, %206 : vector<2x3xi32>
    %208 = vector.shape_cast %163 : vector<2x1xf32> to vector<2x1xf32>
    %209 = vector.broadcast %208 : vector<2x1xf32> to vector<2x3xf32>
    %210 = arith.select %207, %209, %205 : vector<2x3xi1>, vector<2x3xf32>
    %c0_103 = arith.constant 0 : index
    %c0_104 = arith.constant 0 : index
    %211 = vector.load %arg17[%c0_103, %c0_104] : memref<1x3xf32, #tpu.memory_space<vmem>>, vector<1x3xf32>
    %212 = vector.broadcast %211 : vector<1x3xf32> to vector<2x3xf32>
    %213 = arith.addf %210, %212 : vector<2x3xf32>
    %214 = math.tanh %213 : vector<2x3xf32>
    %c0_105 = arith.constant 0 : index
    %c0_106 = arith.constant 0 : index
    %215 = vector.load %arg18[%c0_105, %c0_106] : memref<2x3xf32, #tpu.memory_space<vmem>>, vector<2x3xf32>
    tpu.vector_store %arg18[%c0_105, %c0_106], %214 {strides = array<i32>} : memref<2x3xf32, #tpu.memory_space<vmem>>, vector<2x3xf32>,
    return
  }
  func.func @transform_0(%arg0: i32) -> (i32, i32) {
    %c0_i32 = arith.constant 0 : i32
    %c0_i32_0 = arith.constant 0 : i32
    %c0_i32_1 = arith.constant 0 : i32
    return %c0_i32, %c0_i32_0 : i32, i32
  }
  func.func @transform_1(%arg0: i32) -> (i32, i32) {
    %c0_i32 = arith.constant 0 : i32
    %c0_i32_0 = arith.constant 0 : i32
    %c0_i32_1 = arith.constant 0 : i32
    return %c0_i32, %c0_i32_0 : i32, i32
  }
  func.func @transform_2(%arg0: i32) -> (i32, i32, i32) {
    %c0_i32 = arith.constant 0 : i32
    %c0_i32_0 = arith.constant 0 : i32
    %c0_i32_1 = arith.constant 0 : i32
    %c0_i32_2 = arith.constant 0 : i32
    return %c0_i32, %c0_i32_0, %c0_i32_1 : i32, i32, i32
  }
  func.func @transform_3(%arg0: i32) -> (i32, i32, i32) {
    %c0_i32 = arith.constant 0 : i32
    %c0_i32_0 = arith.constant 0 : i32
    %c0_i32_1 = arith.constant 0 : i32
    %c0_i32_2 = arith.constant 0 : i32
    return %c0_i32, %c0_i32_0, %c0_i32_1 : i32, i32, i32
  }
  func.func @transform_4(%arg0: i32) -> (i32, i32) {
    %c0_i32 = arith.constant 0 : i32
    %c0_i32_0 = arith.constant 0 : i32
    %c0_i32_1 = arith.constant 0 : i32
    return %c0_i32, %c0_i32_0 : i32, i32
  }
  func.func @transform_5(%arg0: i32) -> (i32, i32) {
    %c0_i32 = arith.constant 0 : i32
    %c0_i32_0 = arith.constant 0 : i32
    %c0_i32_1 = arith.constant 0 : i32
    return %c0_i32, %c0_i32_0 : i32, i32
  }
  func.func @transform_6(%arg0: i32) -> (i32, i32) {
    %c0_i32 = arith.constant 0 : i32
    %c0_i32_0 = arith.constant 0 : i32
    %c0_i32_1 = arith.constant 0 : i32
    return %c0_i32, %c0_i32_0 : i32, i32
  }
  func.func @transform_7(%arg0: i32) -> (i32, i32) {
    %c0_i32 = arith.constant 0 : i32
    %c0_i32_0 = arith.constant 0 : i32
    %c0_i32_1 = arith.constant 0 : i32
    return %c0_i32, %c0_i32_0 : i32, i32
  }
  func.func @transform_8(%arg0: i32) -> (i32, i32) {
    %c0_i32 = arith.constant 0 : i32
    %c0_i32_0 = arith.constant 0 : i32
    %c0_i32_1 = arith.constant 0 : i32
    return %c0_i32, %c0_i32_0 : i32, i32
  }
  func.func @transform_9(%arg0: i32) -> (i32, i32) {
    %c0_i32 = arith.constant 0 : i32
    %c0_i32_0 = arith.constant 0 : i32
    %c0_i32_1 = arith.constant 0 : i32
    return %c0_i32, %c0_i32_0 : i32, i32
  }
  func.func @transform_10(%arg0: i32) -> (i32, i32) {
    %c0_i32 = arith.constant 0 : i32
    %c0_i32_0 = arith.constant 0 : i32
    %c0_i32_1 = arith.constant 0 : i32
    return %c0_i32, %c0_i32_0 : i32, i32
  }
  func.func @transform_11(%arg0: i32) -> (i32, i32, i32) {
    %c0_i32 = arith.constant 0 : i32
    %c0_i32_0 = arith.constant 0 : i32
    %c0_i32_1 = arith.constant 0 : i32
    %c0_i32_2 = arith.constant 0 : i32
    return %c0_i32, %c0_i32_0, %c0_i32_1 : i32, i32, i32
  }
  func.func @transform_12(%arg0: i32) -> (i32, i32, i32) {
    %c0_i32 = arith.constant 0 : i32
    %c0_i32_0 = arith.constant 0 : i32
    %c0_i32_1 = arith.constant 0 : i32
    %c0_i32_2 = arith.constant 0 : i32
    return %c0_i32, %c0_i32_0, %c0_i32_1 : i32, i32, i32
  }
  func.func @transform_13(%arg0: i32) -> (i32, i32) {
    %c0_i32 = arith.constant 0 : i32
    %c0_i32_0 = arith.constant 0 : i32
    %c0_i32_1 = arith.constant 0 : i32
    return %c0_i32, %c0_i32_0 : i32, i32
  }
  func.func @transform_14(%arg0: i32) -> (i32, i32) {
    %c0_i32 = arith.constant 0 : i32
    %c0_i32_0 = arith.constant 0 : i32
    %c0_i32_1 = arith.constant 0 : i32
    return %c0_i32, %c0_i32_0 : i32, i32
  }
  func.func @transform_15(%arg0: i32) -> (i32, i32) {
    %c0_i32 = arith.constant 0 : i32
    %c0_i32_0 = arith.constant 0 : i32
    %c0_i32_1 = arith.constant 0 : i32
    return %c0_i32, %c0_i32_0 : i32, i32
  }
  func.func @transform_16(%arg0: i32) -> (i32, i32) {
    %c0_i32 = arith.constant 0 : i32
    %c0_i32_0 = arith.constant 0 : i32
    %c0_i32_1 = arith.constant 0 : i32
    return %c0_i32, %c0_i32_0 : i32, i32
  }
  func.func @transform_17(%arg0: i32) -> (i32, i32) {
    %c0_i32 = arith.constant 0 : i32
    %c0_i32_0 = arith.constant 0 : i32
    %c0_i32_1 = arith.constant 0 : i32
    return %c0_i32, %c0_i32_0 : i32, i32
  }
}

</mosaic_0001>

<llo_original>
// kernel: forward.1
$region0: #{forward.1}
  #allocation0 [shape = 'u32[]', space=smem, size = 0x4, offset = 0x4, fixed_abs, tag = 'smem constant byte address 0x4 - core index']
  #allocation1 [shape = 'u32[144,128]{1,0:T(1,128)}', space=vmem, size = 0x12000, scoped, tag = 'internal scratch']
  %s0 = inlined_call_operand.vmem [shape: f32[32,768], index: 0, kind: input, shape index: {}]
  %s1 = inlined_call_operand.hbm [shape: f32[2,768], index: 1, kind: input, shape index: {}]
  %s2 = inlined_call_operand.vmem [shape: f32[2,16,16], index: 2, kind: input, shape index: {}]
  %s3 = inlined_call_operand.hbm [shape: f32[2,16,16], index: 3, kind: input, shape index: {}]
  %s4 = inlined_call_operand.vmem [shape: s32[32,1], index: 4, kind: input, shape index: {}]
  %s5 = inlined_call_operand.vmem [shape: s32[32,1], index: 5, kind: input, shape index: {}]
  %s6 = inlined_call_operand.vmem [shape: s32[32,1], index: 6, kind: input, shape index: {}]
  %s7 = inlined_call_operand.vmem [shape: s32[32,1], index: 7, kind: input, shape index: {}]
  %s8 = inlined_call_operand.vmem [shape: s32[2,1], index: 8, kind: input, shape index: {}]
  %s9 = inlined_call_operand.vmem [shape: s32[2,1], index: 9, kind: input, shape index: {}]
  %s10 = inlined_call_operand.hbm [shape: bf16[768,128], index: 10, kind: input, shape index: {}]
  %s11 = inlined_call_operand.hbm [shape: bf16[3,128,128], index: 11, kind: input, shape index: {}]
  %s12 = inlined_call_operand.hbm [shape: f32[3,1,128], index: 12, kind: input, shape index: {}]
  %s13 = inlined_call_operand.hbm [shape: f32[3,768], index: 13, kind: input, shape index: {}]
  %s14 = inlined_call_operand.hbm [shape: f32[3,768], index: 14, kind: input, shape index: {}]
  %s15 = inlined_call_operand.vmem [shape: f32[3,128], index: 15, kind: input, shape index: {}]
  %s16 = inlined_call_operand.hbm [shape: f32[1,3], index: 16, kind: input, shape index: {}]
  %s17 = inlined_call_operand.hbm [shape: f32[2,3], index: 17, kind: output, shape index: {}]
  %s18 = sld [smem:[#allocation0]]
  $region110: #{forward.1} parent=0
    _
  %s20 = ssub.s32 1, %s18
  %s21 = scalar_select 0, %s20, %s18
  $region1: #{forward.1} parent=0
    #allocation2 [shape = 'u8[6144]{0}', space=vmem, size = 0x1800, scoped, tag = 'input window, operand 1, single buffered']
    #allocation3 [shape = 's32[1]{0}', space=sflag, size = 0x4, scoped, tag = 'scoped memory for forward.1']
    #allocation4 [shape = 's32[1]{0}', space=sflag, size = 0x4, scoped, tag = 'scoped memory for forward.1']
    #allocation5 [shape = 'u8[16384]{0}', space=vmem, size = 0x4000, scoped, tag = 'input window, operand 3, single buffered']
    #allocation6 [shape = 's32[1]{0}', space=sflag, size = 0x4, scoped, tag = 'scoped memory for forward.1']
    #allocation7 [shape = 'u8[196608]{0}', space=vmem, size = 0x30000, scoped, tag = 'input window, operand 10, single buffered']
    #allocation8 [shape = 'u8[98304]{0}', space=vmem, size = 0x18000, scoped, tag = 'input window, operand 11, single buffered']
    #allocation9 [shape = 's32[1]{0}', space=sflag, size = 0x4, scoped, tag = 'scoped memory for forward.1']
    #allocation10 [shape = 'u8[1536]{0}', space=vmem, size = 0x800, scoped, tag = 'input window, operand 12, single buffered']
    #allocation11 [shape = 'u8[12288]{0}', space=vmem, size = 0x3000, scoped, tag = 'input window, operand 13, single buffered']
    #allocation12 [shape = 's32[1]{0}', space=sflag, size = 0x4, scoped, tag = 'scoped memory for forward.1']
    #allocation13 [shape = 'u8[12288]{0}', space=vmem, size = 0x3000, scoped, tag = 'input window, operand 14, single buffered']
    #allocation14 [shape = 'u8[512]{0}', space=vmem, size = 0x400, scoped, tag = 'input window, operand 16, single buffered']
    #allocation15 [shape = 's32[1]{0}', space=sflag, size = 0x4, scoped, tag = 'scoped memory for forward.1']
    #allocation16 [shape = 'u8[1024]{0}', space=vmem, size = 0x400, scoped, tag = 'output window, operand 0, single buffered']
    %22 = vsyncpa [#allocation3], 0
    %23 = vsyncpa [#allocation6], 0
    %24 = vsyncpa [#allocation9], 0
    %25 = vsyncpa [#allocation12], 0
    %26 = vsyncpa [#allocation15], 0
    %27 = vsyncpa [#allocation4], 0
    // Predicated region
    $region2: #{forward.1} parent=1 // pred_check
      _
    $region3: #{forward.1} parent=1 // pred_check_branch
      %29 = sbr.rel (0) target = $region5
    $region4: #{forward.1} parent=1 // pred_region
      _
    $region5: #{forward.1} parent=1 // pred_fallthru
      _
    // Predicated region
    $region6: #{forward.1} parent=1 // pred_check
      _
    $region7: #{forward.1} parent=1 // pred_check_branch
      %31 = sbr.rel (0) target = $region9
    $region8: #{forward.1} parent=1 // pred_region
      %s33 = ssub.s32 192, 192
      %34 = vsyncadd [#allocation3], %s33
      %s36 = sshll.u32 [#allocation2], 4
      %s37 = int_to_ptr.vmem [resolvable:$true] %s36
      %39 = dma.hbm_to_vmem [thread:$0]  %s1, 192, %s37, [#allocation3]
    $region9: #{forward.1} parent=1 // pred_fallthru
      _
    // Predicated region
    $region10: #{forward.1} parent=1 // pred_check
      _
    $region11: #{forward.1} parent=1 // pred_check_branch
      %41 = sbr.rel (0) target = $region13
    $region12: #{forward.1} parent=1 // pred_region
      _
    $region13: #{forward.1} parent=1 // pred_fallthru
      _
    // Predicated region
    $region14: #{forward.1} parent=1 // pred_check
      _
    $region15: #{forward.1} parent=1 // pred_check_branch
      %43 = sbr.rel (0) target = $region17
    $region16: #{forward.1} parent=1 // pred_region
      %s45 = ssub.s32 512, 512
      %46 = vsyncadd [#allocation6], %s45
      %s47 = sshll.u32 [#allocation5], 4
      %s48 = int_to_ptr.vmem [resolvable:$true] %s47
      %53 = dma.hbm_to_vmem [thread:$0]  %s3, 512, %s48, [#allocation6], 128, 128, 8
    $region17: #{forward.1} parent=1 // pred_fallthru
      _
    // Predicated region
    $region18: #{forward.1} parent=1 // pred_check
      _
    $region19: #{forward.1} parent=1 // pred_check_branch
      %55 = sbr.rel (0) target = $region21
    $region20: #{forward.1} parent=1 // pred_region
      _
    $region21: #{forward.1} parent=1 // pred_fallthru
      _
    // Predicated region
    $region22: #{forward.1} parent=1 // pred_check
      _
    $region23: #{forward.1} parent=1 // pred_check_branch
      %57 = sbr.rel (0) target = $region25
    $region24: #{forward.1} parent=1 // pred_region
      _
    $region25: #{forward.1} parent=1 // pred_fallthru
      _
    // Predicated region
    $region26: #{forward.1} parent=1 // pred_check
      _
    $region27: #{forward.1} parent=1 // pred_check_branch
      %59 = sbr.rel (0) target = $region29
    $region28: #{forward.1} parent=1 // pred_region
      _
    $region29: #{forward.1} parent=1 // pred_fallthru
      _
    // Predicated region
    $region30: #{forward.1} parent=1 // pred_check
      _
    $region31: #{forward.1} parent=1 // pred_check_branch
      %61 = sbr.rel (0) target = $region33
    $region32: #{forward.1} parent=1 // pred_region
      _
    $region33: #{forward.1} parent=1 // pred_fallthru
      _
    // Predicated region
    $region34: #{forward.1} parent=1 // pred_check
      _
    $region35: #{forward.1} parent=1 // pred_check_branch
      %63 = sbr.rel (0) target = $region37
    $region36: #{forward.1} parent=1 // pred_region
      _
    $region37: #{forward.1} parent=1 // pred_fallthru
      _
    // Predicated region
    $region38: #{forward.1} parent=1 // pred_check
      _
    $region39: #{forward.1} parent=1 // pred_check_branch
      %65 = sbr.rel (0) target = $region41
    $region40: #{forward.1} parent=1 // pred_region
      _
    $region41: #{forward.1} parent=1 // pred_fallthru
      _
    // Predicated region
    $region42: #{forward.1} parent=1 // pred_check
      _
    $region43: #{forward.1} parent=1 // pred_check_branch
      %67 = sbr.rel (0) target = $region45
    $region44: #{forward.1} parent=1 // pred_region
      %s69 = ssub.s32 6144, 6144
      %70 = vsyncadd [#allocation6], %s69
      %s71 = sshll.u32 [#allocation7], 4
      %s72 = int_to_ptr.vmem [resolvable:$true] %s71
      %77 = dma.hbm_to_vmem [thread:$0]  %s10, 6144, %s72, [#allocation6], 64, 64, 4
    $region45: #{forward.1} parent=1 // pred_fallthru
      _
    // Predicated region
    $region46: #{forward.1} parent=1 // pred_check
      _
    $region47: #{forward.1} parent=1 // pred_check_branch
      %79 = sbr.rel (0) target = $region49
    $region48: #{forward.1} parent=1 // pred_region
      %s81 = ssub.s32 3072, 3072
      %82 = vsyncadd [#allocation9], %s81
      %s83 = sshll.u32 [#allocation8], 4
      %s84 = int_to_ptr.vmem [resolvable:$true] %s83
      %89 = dma.hbm_to_vmem [thread:$0]  %s11, 3072, %s84, [#allocation9], 64, 64, 4
    $region49: #{forward.1} parent=1 // pred_fallthru
      _
    // Predicated region
    $region50: #{forward.1} parent=1 // pred_check
      _
    $region51: #{forward.1} parent=1 // pred_check_branch
      %91 = sbr.rel (0) target = $region53
    $region52: #{forward.1} parent=1 // pred_region
      %s93 = ssub.s32 48, 48
      %94 = vsyncadd [#allocation9], %s93
      %s95 = sshll.u32 [#allocation10], 4
      %s96 = int_to_ptr.vmem [resolvable:$true] %s95
      %101 = dma.hbm_to_vmem [thread:$0]  %s12, 48, %s96, [#allocation9], 16, 16, 1
    $region53: #{forward.1} parent=1 // pred_fallthru
      _
    // Predicated region
    $region54: #{forward.1} parent=1 // pred_check
      _
    $region55: #{forward.1} parent=1 // pred_check_branch
      %103 = sbr.rel (0) target = $region57
    $region56: #{forward.1} parent=1 // pred_region
      %s105 = ssub.s32 384, 384
      %106 = vsyncadd [#allocation12], %s105
      %s108 = sshll.u32 [#allocation11], 4
      %s109 = int_to_ptr.vmem [resolvable:$true] %s108
      %111 = dma.hbm_to_vmem [thread:$0]  %s13, 384, %s109, [#allocation12]
    $region57: #{forward.1} parent=1 // pred_fallthru
      _
    // Predicated region
    $region58: #{forward.1} parent=1 // pred_check
      _
    $region59: #{forward.1} parent=1 // pred_check_branch
      %113 = sbr.rel (0) target = $region61
    $region60: #{forward.1} parent=1 // pred_region
      %s115 = ssub.s32 384, 384
      %116 = vsyncadd [#allocation12], %s115
      %s118 = sshll.u32 [#allocation13], 4
      %s119 = int_to_ptr.vmem [resolvable:$true] %s118
      %121 = dma.hbm_to_vmem [thread:$0]  %s14, 384, %s119, [#allocation12]
    $region61: #{forward.1} parent=1 // pred_fallthru
      _
    // Predicated region
    $region62: #{forward.1} parent=1 // pred_check
      _
    $region63: #{forward.1} parent=1 // pred_check_branch
      %123 = sbr.rel (0) target = $region65
    $region64: #{forward.1} parent=1 // pred_region
      _
    $region65: #{forward.1} parent=1 // pred_fallthru
      _
    // Predicated region
    $region66: #{forward.1} parent=1 // pred_check
      _
    $region67: #{forward.1} parent=1 // pred_check_branch
      %125 = sbr.rel (0) target = $region69
    $region68: #{forward.1} parent=1 // pred_region
      %s127 = ssub.s32 16, 16
      %128 = vsyncadd [#allocation15], %s127
      %s130 = sshll.u32 [#allocation14], 4
      %s131 = int_to_ptr.vmem [resolvable:$true] %s130
      %133 = dma.hbm_to_vmem [thread:$0]  %s16, 16, %s131, [#allocation15]
    $region69: #{forward.1} parent=1 // pred_fallthru
      _
    // Predicated region
    $region70: #{forward.1} parent=1 // pred_check
      _
    $region71: #{forward.1} parent=1 // pred_check_branch
      %135 = sbr.rel (0) target = $region73
    $region72: #{forward.1} parent=1 // pred_region
      %136 = dma.done [#allocation3], 192
    $region73: #{forward.1} parent=1 // pred_fallthru
      _
    // Predicated region
    $region74: #{forward.1} parent=1 // pred_check
      _
    $region75: #{forward.1} parent=1 // pred_check_branch
      %138 = sbr.rel (0) target = $region77
    $region76: #{forward.1} parent=1 // pred_region
      %139 = dma.done [#allocation6], 512
    $region77: #{forward.1} parent=1 // pred_fallthru
      _
    // Predicated region
    $region78: #{forward.1} parent=1 // pred_check
      _
    $region79: #{forward.1} parent=1 // pred_check_branch
      %141 = sbr.rel (0) target = $region81
    $region80: #{forward.1} parent=1 // pred_region
      %142 = dma.done [#allocation6], 6144
    $region81: #{forward.1} parent=1 // pred_fallthru
      _
    // Predicated region
    $region82: #{forward.1} parent=1 // pred_check
      _
    $region83: #{forward.1} parent=1 // pred_check_branch
      %144 = sbr.rel (0) target = $region85
    $region84: #{forward.1} parent=1 // pred_region
      %145 = dma.done [#allocation9], 3072
    $region85: #{forward.1} parent=1 // pred_fallthru
      _
    // Predicated region
    $region86: #{forward.1} parent=1 // pred_check
      _
    $region87: #{forward.1} parent=1 // pred_check_branch
      %147 = sbr.rel (0) target = $region89
    $region88: #{forward.1} parent=1 // pred_region
      %148 = dma.done [#allocation9], 48
    $region89: #{forward.1} parent=1 // pred_fallthru
      _
    // Predicated region
    $region90: #{forward.1} parent=1 // pred_check
      _
    $region91: #{forward.1} parent=1 // pred_check_branch
      %150 = sbr.rel (0) target = $region93
    $region92: #{forward.1} parent=1 // pred_region
      %151 = dma.done [#allocation12], 384
    $region93: #{forward.1} parent=1 // pred_fallthru
      _
    // Predicated region
    $region94: #{forward.1} parent=1 // pred_check
      _
    $region95: #{forward.1} parent=1 // pred_check_branch
      %153 = sbr.rel (0) target = $region97
    $region96: #{forward.1} parent=1 // pred_region
      %154 = dma.done [#allocation12], 384
    $region97: #{forward.1} parent=1 // pred_fallthru
      _
    // Predicated region
    $region98: #{forward.1} parent=1 // pred_check
      _
    $region99: #{forward.1} parent=1 // pred_check_branch
      %156 = sbr.rel (0) target = $region101
    $region100: #{forward.1} parent=1 // pred_region
      %157 = dma.done [#allocation15], 16
    $region101: #{forward.1} parent=1 // pred_fallthru
      _
    %v159 = vld [vmem:[%s0] sm:$0xff]
    %v160 = vld [vmem:[%s0 + $0x8] sm:$0xff]
    %v161 = vld [vmem:[%s0 + $0x10] sm:$0xff]
    %v162 = vld [vmem:[%s0 + $0x18] sm:$0xff]
    %v163 = vld [vmem:[%s0 + $0x20] sm:$0xff]
    %v164 = vld [vmem:[%s0 + $0x28] sm:$0xff]
    %v165 = vld [vmem:[%s0 + $0x30] sm:$0xff]
    %v166 = vld [vmem:[%s0 + $0x38] sm:$0xff]
    %v167 = vld [vmem:[%s0 + $0x40] sm:$0xff]
    %v168 = vld [vmem:[%s0 + $0x48] sm:$0xff]
    %v169 = vld [vmem:[%s0 + $0x50] sm:$0xff]
    %v170 = vld [vmem:[%s0 + $0x58] sm:$0xff]
    %v171 = vld [vmem:[%s0 + $0x60] sm:$0xff]
    %v172 = vld [vmem:[%s0 + $0x68] sm:$0xff]
    %v173 = vld [vmem:[%s0 + $0x70] sm:$0xff]
    %v174 = vld [vmem:[%s0 + $0x78] sm:$0xff]
    %v175 = vld [vmem:[%s0 + $0x80] sm:$0xff]
    %v176 = vld [vmem:[%s0 + $0x88] sm:$0xff]
    %v177 = vld [vmem:[%s0 + $0x90] sm:$0xff]
    %v178 = vld [vmem:[%s0 + $0x98] sm:$0xff]
    %v179 = vld [vmem:[%s0 + $0xa0] sm:$0xff]
    %v180 = vld [vmem:[%s0 + $0xa8] sm:$0xff]
    %v181 = vld [vmem:[%s0 + $0xb0] sm:$0xff]
    %v182 = vld [vmem:[%s0 + $0xb8] sm:$0xff]
    %v183 = vlaneseq
    %v184 = vshrl.u32 %v183, 7
    %v185 = vadd.s32 %v184, 8
    %v186 = vadd.s32 %v184, 16
    %v187 = vadd.s32 %v184, 24
    %v188 = vld [vmem:[%s6] sm:$0xff]
    %v189 = vld [vmem:[%s6 + $0x8] sm:$0xff]
    %v190 = vld [vmem:[%s6 + $0x10] sm:$0xff]
    %v191 = vld [vmem:[%s6 + $0x18] sm:$0xff]
    %vm192 = vcmp.ge.s32.totalorder %v184, %v188
    %vm193 = vcmp.ge.s32.totalorder %v185, %v189
    %vm194 = vcmp.ge.s32.totalorder %v186, %v190
    %vm195 = vcmp.ge.s32.totalorder %v187, %v191
    %v196 = vld [vmem:[%s7] sm:$0xff]
    %v197 = vld [vmem:[%s7 + $0x8] sm:$0xff]
    %v198 = vld [vmem:[%s7 + $0x10] sm:$0xff]
    %v199 = vld [vmem:[%s7 + $0x18] sm:$0xff]
    %vm200 = vcmp.lt.s32.totalorder %v184, %v196
    %vm201 = vcmp.lt.s32.totalorder %v185, %v197
    %vm202 = vcmp.lt.s32.totalorder %v186, %v198
    %vm203 = vcmp.lt.s32.totalorder %v187, %v199
    %vm204 = vmand %vm192, %vm200
    %vm205 = vmand %vm193, %vm201
    %vm206 = vmand %vm194, %vm202
    %vm207 = vmand %vm195, %vm203
    %v208 = vsel %vm204, 1, 0
    %v209 = vsel %vm205, 1, 0
    %v210 = vsel %vm206, 1, 0
    %v211 = vsel %vm207, 1, 0
    %212 = vset.pattern.permute.xlu0 0
    %213 = vperm.xlu0 %212, %v208
    %v214 = vpop.permute.xlu0 %213
    %215 = vset.pattern.permute.xlu0 0
    %216 = vperm.xlu0 %215, %v209
    %v217 = vpop.permute.xlu0 %216
    %218 = vset.pattern.permute.xlu0 0
    %219 = vperm.xlu0 %218, %v210
    %v220 = vpop.permute.xlu0 %219
    %221 = vset.pattern.permute.xlu0 0
    %222 = vperm.xlu0 %221, %v211
    %v223 = vpop.permute.xlu0 %222
    %vm224 = vcmp.eq.s32.totalorder %v214, 1
    %vm225 = vcmp.eq.s32.totalorder %v217, 1
    %vm226 = vcmp.eq.s32.totalorder %v220, 1
    %vm227 = vcmp.eq.s32.totalorder %v223, 1
    %v228 = vsel %vm224, %v159, -1e+30
    %v229 = vsel %vm224, %v160, -1e+30
    %v230 = vsel %vm224, %v161, -1e+30
    %v231 = vsel %vm224, %v162, -1e+30
    %v232 = vsel %vm224, %v163, -1e+30
    %v233 = vsel %vm224, %v164, -1e+30
    %v234 = vsel %vm225, %v165, -1e+30
    %v235 = vsel %vm225, %v166, -1e+30
    %v236 = vsel %vm225, %v167, -1e+30
    %v237 = vsel %vm225, %v168, -1e+30
    %v238 = vsel %vm225, %v169, -1e+30
    %v239 = vsel %vm225, %v170, -1e+30
    %v240 = vsel %vm226, %v171, -1e+30
    %v241 = vsel %vm226, %v172, -1e+30
    %v242 = vsel %vm226, %v173, -1e+30
    %v243 = vsel %vm226, %v174, -1e+30
    %v244 = vsel %vm226, %v175, -1e+30
    %v245 = vsel %vm226, %v176, -1e+30
    %v246 = vsel %vm227, %v177, -1e+30
    %v247 = vsel %vm227, %v178, -1e+30
    %v248 = vsel %vm227, %v179, -1e+30
    %v249 = vsel %vm227, %v180, -1e+30
    %v250 = vsel %vm227, %v181, -1e+30
    %v251 = vsel %vm227, %v182, -1e+30
    %v252 = vmax.f32 %v228, %v234
    %v253 = vrot.slane %v252, 4
    %v254 = vmax.f32 %v252, %v253
    %v255 = vrot.slane %v254, 2
    %v256 = vmax.f32 %v254, %v255
    %v257 = vrot.slane %v256, 1
    %v258 = vmax.f32 %v256, %v257
    %v259 = vmax.f32 %v229, %v235
    %v260 = vrot.slane %v259, 4
    %v261 = vmax.f32 %v259, %v260
    %v262 = vrot.slane %v261, 2
    %v263 = vmax.f32 %v261, %v262
    %v264 = vrot.slane %v263, 1
    %v265 = vmax.f32 %v263, %v264
    %v266 = vmax.f32 %v230, %v236
    %v267 = vrot.slane %v266, 4
    %v268 = vmax.f32 %v266, %v267
    %v269 = vrot.slane %v268, 2
    %v270 = vmax.f32 %v268, %v269
    %v271 = vrot.slane %v270, 1
    %v272 = vmax.f32 %v270, %v271
    %v273 = vmax.f32 %v231, %v237
    %v274 = vrot.slane %v273, 4
    %v275 = vmax.f32 %v273, %v274
    %v276 = vrot.slane %v275, 2
    %v277 = vmax.f32 %v275, %v276
    %v278 = vrot.slane %v277, 1
    %v279 = vmax.f32 %v277, %v278
    %v280 = vmax.f32 %v232, %v238
    %v281 = vrot.slane %v280, 4
    %v282 = vmax.f32 %v280, %v281
    %v283 = vrot.slane %v282, 2
    %v284 = vmax.f32 %v282, %v283
    %v285 = vrot.slane %v284, 1
    %v286 = vmax.f32 %v284, %v285
    %v287 = vmax.f32 %v233, %v239
    %v288 = vrot.slane %v287, 4
    %v289 = vmax.f32 %v287, %v288
    %v290 = vrot.slane %v289, 2
    %v291 = vmax.f32 %v289, %v290
    %v292 = vrot.slane %v291, 1
    %v293 = vmax.f32 %v291, %v292
    %v294 = vmax.f32 %v240, %v246
    %v295 = vrot.slane %v294, 4
    %v296 = vmax.f32 %v294, %v295
    %v297 = vrot.slane %v296, 2
    %v298 = vmax.f32 %v296, %v297
    %v299 = vrot.slane %v298, 1
    %v300 = vmax.f32 %v298, %v299
    %v301 = vmax.f32 %v241, %v247
    %v302 = vrot.slane %v301, 4
    %v303 = vmax.f32 %v301, %v302
    %v304 = vrot.slane %v303, 2
    %v305 = vmax.f32 %v303, %v304
    %v306 = vrot.slane %v305, 1
    %v307 = vmax.f32 %v305, %v306
    %v308 = vmax.f32 %v242, %v248
    %v309 = vrot.slane %v308, 4
    %v310 = vmax.f32 %v308, %v309
    %v311 = vrot.slane %v310, 2
    %v312 = vmax.f32 %v310, %v311
    %v313 = vrot.slane %v312, 1
    %v314 = vmax.f32 %v312, %v313
    %v315 = vmax.f32 %v243, %v249
    %v316 = vrot.slane %v315, 4
    %v317 = vmax.f32 %v315, %v316
    %v318 = vrot.slane %v317, 2
    %v319 = vmax.f32 %v317, %v318
    %v320 = vrot.slane %v319, 1
    %v321 = vmax.f32 %v319, %v320
    %v322 = vmax.f32 %v244, %v250
    %v323 = vrot.slane %v322, 4
    %v324 = vmax.f32 %v322, %v323
    %v325 = vrot.slane %v324, 2
    %v326 = vmax.f32 %v324, %v325
    %v327 = vrot.slane %v326, 1
    %v328 = vmax.f32 %v326, %v327
    %v329 = vmax.f32 %v245, %v251
    %v330 = vrot.slane %v329, 4
    %v331 = vmax.f32 %v329, %v330
    %v332 = vrot.slane %v331, 2
    %v333 = vmax.f32 %v331, %v332
    %v334 = vrot.slane %v333, 1
    %v335 = vmax.f32 %v333, %v334
    %vm336 = vcmp.eq.s32.totalorder %v184, 0
    %v337 = vsel %vm336, 1, 0
    %vm338 = vcmp.eq.s32.totalorder %v337, 1
    %v339 = vsel %vm338, %v258, %v300
    %v340 = vsel %vm338, %v265, %v307
    %v341 = vsel %vm338, %v272, %v314
    %v342 = vsel %vm338, %v279, %v321
    %v343 = vsel %vm338, %v286, %v328
    %v344 = vsel %vm338, %v293, %v335
    %v345 = vlaneseq
    %v346 = vand.u32 %v345, 127
    %v347 = vld [vmem:[%s4] sm:$0xff]
    %v348 = vld [vmem:[%s4 + $0x8] sm:$0xff]
    %v349 = vld [vmem:[%s4 + $0x10] sm:$0xff]
    %v350 = vld [vmem:[%s4 + $0x18] sm:$0xff]
    %351 = vset.pattern.permute.xlu0 0
    %352 = vperm.xlu0 %351, %v347
    %v353 = vpop.permute.xlu0 %352
    %354 = vset.pattern.permute.xlu0 0
    %355 = vperm.xlu0 %354, %v348
    %v356 = vpop.permute.xlu0 %355
    %357 = vset.pattern.permute.xlu0 0
    %358 = vperm.xlu0 %357, %v349
    %v359 = vpop.permute.xlu0 %358
    %360 = vset.pattern.permute.xlu0 0
    %361 = vperm.xlu0 %360, %v350
    %v362 = vpop.permute.xlu0 %361
    %vm363 = vcmp.ge.s32.totalorder %v346, %v353
    %vm364 = vcmp.ge.s32.totalorder %v346, %v356
    %vm365 = vcmp.ge.s32.totalorder %v346, %v359
    %vm366 = vcmp.ge.s32.totalorder %v346, %v362
    %v367 = vld [vmem:[%s5] sm:$0xff]
    %v368 = vld [vmem:[%s5 + $0x8] sm:$0xff]
    %v369 = vld [vmem:[%s5 + $0x10] sm:$0xff]
    %v370 = vld [vmem:[%s5 + $0x18] sm:$0xff]
    %371 = vset.pattern.permute.xlu0 0
    %372 = vperm.xlu0 %371, %v367
    %v373 = vpop.permute.xlu0 %372
    %374 = vset.pattern.permute.xlu0 0
    %375 = vperm.xlu0 %374, %v368
    %v376 = vpop.permute.xlu0 %375
    %377 = vset.pattern.permute.xlu0 0
    %378 = vperm.xlu0 %377, %v369
    %v379 = vpop.permute.xlu0 %378
    %380 = vset.pattern.permute.xlu0 0
    %381 = vperm.xlu0 %380, %v370
    %v382 = vpop.permute.xlu0 %381
    %vm383 = vcmp.lt.s32.totalorder %v346, %v373
    %vm384 = vcmp.lt.s32.totalorder %v346, %v376
    %vm385 = vcmp.lt.s32.totalorder %v346, %v379
    %vm386 = vcmp.lt.s32.totalorder %v346, %v382
    %vm387 = vmand %vm363, %vm383
    %vm388 = vmand %vm364, %vm384
    %vm389 = vmand %vm365, %vm385
    %vm390 = vmand %vm366, %vm386
    %v391 = vsel %vm387, 1.0, 0.0
    %v392 = vsel %vm388, 1.0, 0.0
    %v393 = vsel %vm389, 1.0, 0.0
    %v394 = vsel %vm390, 1.0, 0.0
    %v395 = vpack.c.bf16 %v392, %v391
    %v396 = vpack.c.bf16 %v394, %v393
    %v397 = vpack.c.bf16 %v165, %v159
    %v398 = vpack.c.bf16 %v166, %v160
    %v399 = vpack.c.bf16 %v167, %v161
    %v400 = vpack.c.bf16 %v168, %v162
    %v401 = vpack.c.bf16 %v169, %v163
    %v402 = vpack.c.bf16 %v170, %v164
    %v403 = vpack.c.bf16 %v177, %v171
    %v404 = vpack.c.bf16 %v178, %v172
    %v405 = vpack.c.bf16 %v179, %v173
    %v406 = vpack.c.bf16 %v180, %v174
    %v407 = vpack.c.bf16 %v181, %v175
    %v408 = vpack.c.bf16 %v182, %v176
    %vm409 = vcmask 261120
    %v411 = vsel %vm409, %v395, 0
    %v414 = vsel %vm409, %v396, 0
    %416 = vmatprep.subr.bf16.mxu0 0
    %417 = vmatpush1.bf16.msra.mxu0 0
    %418 = vmatprep.subr.bf16.mxu0 0
    %419 = vmatpush1.bf16.msra.mxu0 0
    %420 = vmatprep.subr.bf16.mxu0 0
    %421 = vmatpush1.bf16.msra.mxu0 0
    %422 = vmatprep.subr.bf16.mxu0 0
    %423 = vmatpush1.bf16.msra.mxu0 0
    %424 = vmatprep.subr.bf16.mxu0 0
    %425 = vmatpush1.bf16.msra.mxu0 0
    %426 = vmatprep.subr.bf16.mxu0 0
    %427 = vmatpush1.bf16.msra.mxu0 0
    %428 = vmatprep.subr.bf16.mxu0 %v404
    %429 = vmatpush1.bf16.msra.mxu0 %v403
    %430 = vmatprep.subr.bf16.mxu0 %v398
    %431 = vmatpush1.bf16.msra.mxu0 %v397
    %432 = vmatprep.subr.bf16.mxu0 0
    %433 = vmatpush2.bf16.msra.mxu0 0
    %434 = vmatprep.subr.bf16.mxu0 0
    %435 = vmatpush2.bf16.msra.mxu0 0
    %436 = vmatprep.subr.bf16.mxu0 0
    %437 = vmatpush2.bf16.msra.mxu0 0
    %438 = vmatprep.subr.bf16.mxu0 0
    %439 = vmatpush2.bf16.msra.mxu0 0
    %440 = vmatprep.subr.bf16.mxu0 0
    %441 = vmatpush2.bf16.msra.mxu0 0
    %442 = vmatprep.subr.bf16.mxu0 0
    %443 = vmatpush2.bf16.msra.mxu0 0
    %444 = vmatprep.subr.bf16.mxu0 0
    %445 = vmatpush2.bf16.msra.mxu0 0
    %446 = vmatprep.subr.bf16.mxu0 0
    %447 = vmatpush2.bf16.msra.mxu0 0
    %448 = vmatprep.mubr.bf16.mxu0 0
    %449 = vmatmul.mubr.bf16.gmra.mxu0 %v411
    %v450 = vpop.f32.mrf.mxu0
    %v451 = vadd.f32 0.0, %v450
    %v452 = vpop.f32.mrf.mxu0
    %v453 = vadd.f32 0.0, %v452
    %v454 = vpop.f32.mrf.mxu0
    %v455 = vadd.f32 0.0, %v454
    %v456 = vpop.f32.mrf.mxu0
    %v457 = vadd.f32 0.0, %v456
    %458 = vmatprep.mubr.bf16.mxu0 0
    %459 = vmatmul.mubr.bf16.gmra.mxu0 %v414
    %v460 = vpop.f32.mrf.mxu0
    %v461 = vadd.f32 0.0, %v460
    %v462 = vpop.f32.mrf.mxu0
    %v463 = vadd.f32 0.0, %v462
    %v464 = vpop.f32.mrf.mxu0
    %v465 = vadd.f32 0.0, %v464
    %v466 = vpop.f32.mrf.mxu0
    %v467 = vadd.f32 0.0, %v466
    %468 = vdwg.mxu0
    %469 = vmatprep.subr.bf16.mxu0 0
    %470 = vmatpush1.bf16.msra.mxu0 0
    %471 = vmatprep.subr.bf16.mxu0 0
    %472 = vmatpush1.bf16.msra.mxu0 0
    %473 = vmatprep.subr.bf16.mxu0 0
    %474 = vmatpush1.bf16.msra.mxu0 0
    %475 = vmatprep.subr.bf16.mxu0 0
    %476 = vmatpush1.bf16.msra.mxu0 0
    %477 = vmatprep.subr.bf16.mxu0 0
    %478 = vmatpush1.bf16.msra.mxu0 0
    %479 = vmatprep.subr.bf16.mxu0 0
    %480 = vmatpush1.bf16.msra.mxu0 0
    %481 = vmatprep.subr.bf16.mxu0 %v406
    %482 = vmatpush1.bf16.msra.mxu0 %v405
    %483 = vmatprep.subr.bf16.mxu0 %v400
    %484 = vmatpush1.bf16.msra.mxu0 %v399
    %485 = vmatprep.subr.bf16.mxu0 0
    %486 = vmatpush2.bf16.msra.mxu0 0
    %487 = vmatprep.subr.bf16.mxu0 0
    %488 = vmatpush2.bf16.msra.mxu0 0
    %489 = vmatprep.subr.bf16.mxu0 0
    %490 = vmatpush2.bf16.msra.mxu0 0
    %491 = vmatprep.subr.bf16.mxu0 0
    %492 = vmatpush2.bf16.msra.mxu0 0
    %493 = vmatprep.subr.bf16.mxu0 0
    %494 = vmatpush2.bf16.msra.mxu0 0
    %495 = vmatprep.subr.bf16.mxu0 0
    %496 = vmatpush2.bf16.msra.mxu0 0
    %497 = vmatprep.subr.bf16.mxu0 0
    %498 = vmatpush2.bf16.msra.mxu0 0
    %499 = vmatprep.subr.bf16.mxu0 0
    %500 = vmatpush2.bf16.msra.mxu0 0
    %501 = vmatprep.mubr.bf16.mxu0 0
    %502 = vmatmul.mubr.bf16.gmra.mxu0 %v411
    %v503 = vpop.f32.mrf.mxu0
    %v504 = vadd.f32 0.0, %v503
    %v505 = vpop.f32.mrf.mxu0
    %v506 = vadd.f32 0.0, %v505
    %v507 = vpop.f32.mrf.mxu0
    %v508 = vadd.f32 0.0, %v507
    %v509 = vpop.f32.mrf.mxu0
    %v510 = vadd.f32 0.0, %v509
    %511 = vmatprep.mubr.bf16.mxu0 0
    %512 = vmatmul.mubr.bf16.gmra.mxu0 %v414
    %v513 = vpop.f32.mrf.mxu0
    %v514 = vadd.f32 0.0, %v513
    %v515 = vpop.f32.mrf.mxu0
    %v516 = vadd.f32 0.0, %v515
    %v517 = vpop.f32.mrf.mxu0
    %v518 = vadd.f32 0.0, %v517
    %v519 = vpop.f32.mrf.mxu0
    %v520 = vadd.f32 0.0, %v519
    %521 = vdwg.mxu0
    %522 = vmatprep.subr.bf16.mxu0 0
    %523 = vmatpush1.bf16.msra.mxu0 0
    %524 = vmatprep.subr.bf16.mxu0 0
    %525 = vmatpush1.bf16.msra.mxu0 0
    %526 = vmatprep.subr.bf16.mxu0 0
    %527 = vmatpush1.bf16.msra.mxu0 0
    %528 = vmatprep.subr.bf16.mxu0 0
    %529 = vmatpush1.bf16.msra.mxu0 0
    %530 = vmatprep.subr.bf16.mxu0 0
    %531 = vmatpush1.bf16.msra.mxu0 0
    %532 = vmatprep.subr.bf16.mxu0 0
    %533 = vmatpush1.bf16.msra.mxu0 0
    %534 = vmatprep.subr.bf16.mxu0 %v408
    %535 = vmatpush1.bf16.msra.mxu0 %v407
    %536 = vmatprep.subr.bf16.mxu0 %v402
    %537 = vmatpush1.bf16.msra.mxu0 %v401
    %538 = vmatprep.subr.bf16.mxu0 0
    %539 = vmatpush2.bf16.msra.mxu0 0
    %540 = vmatprep.subr.bf16.mxu0 0
    %541 = vmatpush2.bf16.msra.mxu0 0
    %542 = vmatprep.subr.bf16.mxu0 0
    %543 = vmatpush2.bf16.msra.mxu0 0
    %544 = vmatprep.subr.bf16.mxu0 0
    %545 = vmatpush2.bf16.msra.mxu0 0
    %546 = vmatprep.subr.bf16.mxu0 0
    %547 = vmatpush2.bf16.msra.mxu0 0
    %548 = vmatprep.subr.bf16.mxu0 0
    %549 = vmatpush2.bf16.msra.mxu0 0
    %550 = vmatprep.subr.bf16.mxu0 0
    %551 = vmatpush2.bf16.msra.mxu0 0
    %552 = vmatprep.subr.bf16.mxu0 0
    %553 = vmatpush2.bf16.msra.mxu0 0
    %554 = vmatprep.mubr.bf16.mxu0 0
    %555 = vmatmul.mubr.bf16.gmra.mxu0 %v411
    %v556 = vpop.f32.mrf.mxu0
    %v557 = vadd.f32 0.0, %v556
    %v558 = vpop.f32.mrf.mxu0
    %v559 = vadd.f32 0.0, %v558
    %v560 = vpop.f32.mrf.mxu0
    %v561 = vadd.f32 0.0, %v560
    %v562 = vpop.f32.mrf.mxu0
    %v563 = vadd.f32 0.0, %v562
    %564 = vmatprep.mubr.bf16.mxu0 0
    %565 = vmatmul.mubr.bf16.gmra.mxu0 %v414
    %v566 = vpop.f32.mrf.mxu0
    %v567 = vadd.f32 0.0, %v566
    %v568 = vpop.f32.mrf.mxu0
    %v569 = vadd.f32 0.0, %v568
    %v570 = vpop.f32.mrf.mxu0
    %v571 = vadd.f32 0.0, %v570
    %v572 = vpop.f32.mrf.mxu0
    %v573 = vadd.f32 0.0, %v572
    %574 = vdwg.mxu0
    %v575 = vpack.c.bf16 %v455, %v451
    %v576 = vpack.c.bf16 %v457, %v453
    %v577 = vpack.c.bf16 %v508, %v504
    %v578 = vpack.c.bf16 %v510, %v506
    %v579 = vpack.c.bf16 %v561, %v557
    %v580 = vpack.c.bf16 %v563, %v559
    %v581 = vpack.c.bf16 %v465, %v461
    %v582 = vpack.c.bf16 %v467, %v463
    %v583 = vpack.c.bf16 %v518, %v514
    %v584 = vpack.c.bf16 %v520, %v516
    %v585 = vpack.c.bf16 %v571, %v567
    %v586 = vpack.c.bf16 %v573, %v569
    %v587 = vld [vmem:[#allocation7] sm:$0xf]
    %v588 = vld [vmem:[#allocation7 + $0x4] sm:$0xf]
    %v589 = vld [vmem:[#allocation7 + $0x8] sm:$0xf]
    %v590 = vld [vmem:[#allocation7 + $0xc] sm:$0xf]
    %v591 = vld [vmem:[#allocation7 + $0x10] sm:$0xf]
    %v592 = vld [vmem:[#allocation7 + $0x14] sm:$0xf]
    %v593 = vld [vmem:[#allocation7 + $0x18] sm:$0xf]
    %v594 = vld [vmem:[#allocation7 + $0x1c] sm:$0xf]
    %v595 = vld [vmem:[#allocation7 + $0x20] sm:$0xf]
    %v596 = vld [vmem:[#allocation7 + $0x24] sm:$0xf]
    %v597 = vld [vmem:[#allocation7 + $0x28] sm:$0xf]
    %v598 = vld [vmem:[#allocation7 + $0x2c] sm:$0xf]
    %v599 = vld [vmem:[#allocation7 + $0x30] sm:$0xf]
    %v600 = vld [vmem:[#allocation7 + $0x34] sm:$0xf]
    %v601 = vld [vmem:[#allocation7 + $0x38] sm:$0xf]
    %v602 = vld [vmem:[#allocation7 + $0x3c] sm:$0xf]
    %v603 = vld [vmem:[#allocation7 + $0x40] sm:$0xf]
    %v604 = vld [vmem:[#allocation7 + $0x44] sm:$0xf]
    %v605 = vld [vmem:[#allocation7 + $0x48] sm:$0xf]
    %v606 = vld [vmem:[#allocation7 + $0x4c] sm:$0xf]
    %v607 = vld [vmem:[#allocation7 + $0x50] sm:$0xf]
    %v608 = vld [vmem:[#allocation7 + $0x54] sm:$0xf]
    %v609 = vld [vmem:[#allocation7 + $0x58] sm:$0xf]
    %v610 = vld [vmem:[#allocation7 + $0x5c] sm:$0xf]
    %v611 = vld [vmem:[#allocation7 + $0x60] sm:$0xf]
    %v612 = vld [vmem:[#allocation7 + $0x64] sm:$0xf]
    %v613 = vld [vmem:[#allocation7 + $0x68] sm:$0xf]
    %v614 = vld [vmem:[#allocation7 + $0x6c] sm:$0xf]
    %v615 = vld [vmem:[#allocation7 + $0x70] sm:$0xf]
    %v616 = vld [vmem:[#allocation7 + $0x74] sm:$0xf]
    %v617 = vld [vmem:[#allocation7 + $0x78] sm:$0xf]
    %v618 = vld [vmem:[#allocation7 + $0x7c] sm:$0xf]
    %v619 = vld [vmem:[#allocation7 + $0x80] sm:$0xf]
    %v620 = vld [vmem:[#allocation7 + $0x84] sm:$0xf]
    %v621 = vld [vmem:[#allocation7 + $0x88] sm:$0xf]
    %v622 = vld [vmem:[#allocation7 + $0x8c] sm:$0xf]
    %v623 = vld [vmem:[#allocation7 + $0x90] sm:$0xf]
    %v624 = vld [vmem:[#allocation7 + $0x94] sm:$0xf]
    %v625 = vld [vmem:[#allocation7 + $0x98] sm:$0xf]
    %v626 = vld [vmem:[#allocation7 + $0x9c] sm:$0xf]
    %v627 = vld [vmem:[#allocation7 + $0xa0] sm:$0xf]
    %v628 = vld [vmem:[#allocation7 + $0xa4] sm:$0xf]
    %v629 = vld [vmem:[#allocation7 + $0xa8] sm:$0xf]
    %v630 = vld [vmem:[#allocation7 + $0xac] sm:$0xf]
    %v631 = vld [vmem:[#allocation7 + $0xb0] sm:$0xf]
    %v632 = vld [vmem:[#allocation7 + $0xb4] sm:$0xf]
    %v633 = vld [vmem:[#allocation7 + $0xb8] sm:$0xf]
    %v634 = vld [vmem:[#allocation7 + $0xbc] sm:$0xf]
    %v635 = vld [vmem:[#allocation7 + $0xc0] sm:$0xf]
    %v636 = vld [vmem:[#allocation7 + $0xc4] sm:$0xf]
    %v637 = vld [vmem:[#allocation7 + $0xc8] sm:$0xf]
    %v638 = vld [vmem:[#allocation7 + $0xcc] sm:$0xf]
    %v639 = vld [vmem:[#allocation7 + $0xd0] sm:$0xf]
    %v640 = vld [vmem:[#allocation7 + $0xd4] sm:$0xf]
    %v641 = vld [vmem:[#allocation7 + $0xd8] sm:$0xf]
    %v642 = vld [vmem:[#allocation7 + $0xdc] sm:$0xf]
    %v643 = vld [vmem:[#allocation7 + $0xe0] sm:$0xf]
    %v644 = vld [vmem:[#allocation7 + $0xe4] sm:$0xf]
    %v645 = vld [vmem:[#allocation7 + $0xe8] sm:$0xf]
    %v646 = vld [vmem:[#allocation7 + $0xec] sm:$0xf]
    %v647 = vld [vmem:[#allocation7 + $0xf0] sm:$0xf]
    %v648 = vld [vmem:[#allocation7 + $0xf4] sm:$0xf]
    %v649 = vld [vmem:[#allocation7 + $0xf8] sm:$0xf]
    %v650 = vld [vmem:[#allocation7 + $0xfc] sm:$0xf]
    %v651 = vld [vmem:[#allocation7 + $0x100] sm:$0xf]
    %v652 = vld [vmem:[#allocation7 + $0x104] sm:$0xf]
    %v653 = vld [vmem:[#allocation7 + $0x108] sm:$0xf]
    %v654 = vld [vmem:[#allocation7 + $0x10c] sm:$0xf]
    %v655 = vld [vmem:[#allocation7 + $0x110] sm:$0xf]
    %v656 = vld [vmem:[#allocation7 + $0x114] sm:$0xf]
    %v657 = vld [vmem:[#allocation7 + $0x118] sm:$0xf]
    %v658 = vld [vmem:[#allocation7 + $0x11c] sm:$0xf]
    %v659 = vld [vmem:[#allocation7 + $0x120] sm:$0xf]
    %v660 = vld [vmem:[#allocation7 + $0x124] sm:$0xf]
    %v661 = vld [vmem:[#allocation7 + $0x128] sm:$0xf]
    %v662 = vld [vmem:[#allocation7 + $0x12c] sm:$0xf]
    %v663 = vld [vmem:[#allocation7 + $0x130] sm:$0xf]
    %v664 = vld [vmem:[#allocation7 + $0x134] sm:$0xf]
    %v665 = vld [vmem:[#allocation7 + $0x138] sm:$0xf]
    %v666 = vld [vmem:[#allocation7 + $0x13c] sm:$0xf]
    %v667 = vld [vmem:[#allocation7 + $0x140] sm:$0xf]
    %v668 = vld [vmem:[#allocation7 + $0x144] sm:$0xf]
    %v669 = vld [vmem:[#allocation7 + $0x148] sm:$0xf]
    %v670 = vld [vmem:[#allocation7 + $0x14c] sm:$0xf]
    %v671 = vld [vmem:[#allocation7 + $0x150] sm:$0xf]
    %v672 = vld [vmem:[#allocation7 + $0x154] sm:$0xf]
    %v673 = vld [vmem:[#allocation7 + $0x158] sm:$0xf]
    %v674 = vld [vmem:[#allocation7 + $0x15c] sm:$0xf]
    %v675 = vld [vmem:[#allocation7 + $0x160] sm:$0xf]
    %v676 = vld [vmem:[#allocation7 + $0x164] sm:$0xf]
    %v677 = vld [vmem:[#allocation7 + $0x168] sm:$0xf]
    %v678 = vld [vmem:[#allocation7 + $0x16c] sm:$0xf]
    %v679 = vld [vmem:[#allocation7 + $0x170] sm:$0xf]
    %v680 = vld [vmem:[#allocation7 + $0x174] sm:$0xf]
    %v681 = vld [vmem:[#allocation7 + $0x178] sm:$0xf]
    %v682 = vld [vmem:[#allocation7 + $0x17c] sm:$0xf]
    %v779 = vunpack.c.l.b16 %v587
    %v780 = vunpack.c.l.b16 %v588
    %v781 = vunpack.c.l.b16 %v589
    %v782 = vunpack.c.l.b16 %v590
    %v783 = vunpack.c.l.b16 %v591
    %v784 = vunpack.c.l.b16 %v592
    %v785 = vunpack.c.l.b16 %v593
    %v786 = vunpack.c.l.b16 %v594
    %v787 = vunpack.c.l.b16 %v595
    %v788 = vunpack.c.l.b16 %v596
    %v789 = vunpack.c.l.b16 %v597
    %v790 = vunpack.c.l.b16 %v598
    %v791 = vunpack.c.l.b16 %v599
    %v792 = vunpack.c.l.b16 %v600
    %v793 = vunpack.c.l.b16 %v601
    %v794 = vunpack.c.l.b16 %v602
    %v795 = vunpack.c.l.b16 %v603
    %v796 = vunpack.c.l.b16 %v604
    %v797 = vunpack.c.l.b16 %v605
    %v798 = vunpack.c.l.b16 %v606
    %v799 = vunpack.c.l.b16 %v607
    %v800 = vunpack.c.l.b16 %v608
    %v801 = vunpack.c.l.b16 %v609
    %v802 = vunpack.c.l.b16 %v610
    %v803 = vunpack.c.l.b16 %v611
    %v804 = vunpack.c.l.b16 %v612
    %v805 = vunpack.c.l.b16 %v613
    %v806 = vunpack.c.l.b16 %v614
    %v807 = vunpack.c.l.b16 %v615
    %v808 = vunpack.c.l.b16 %v616
    %v809 = vunpack.c.l.b16 %v617
    %v810 = vunpack.c.l.b16 %v618
    %v811 = vunpack.c.l.b16 %v619
    %v812 = vunpack.c.l.b16 %v620
    %v813 = vunpack.c.l.b16 %v621
    %v814 = vunpack.c.l.b16 %v622
    %v815 = vunpack.c.l.b16 %v623
    %v816 = vunpack.c.l.b16 %v624
    %v817 = vunpack.c.l.b16 %v625
    %v818 = vunpack.c.l.b16 %v626
    %v819 = vunpack.c.l.b16 %v627
    %v820 = vunpack.c.l.b16 %v628
    %v821 = vunpack.c.l.b16 %v629
    %v822 = vunpack.c.l.b16 %v630
    %v823 = vunpack.c.l.b16 %v631
    %v824 = vunpack.c.l.b16 %v632
    %v825 = vunpack.c.l.b16 %v633
    %v826 = vunpack.c.l.b16 %v634
    %v827 = vunpack.c.l.b16 %v635
    %v828 = vunpack.c.l.b16 %v636
    %v829 = vunpack.c.l.b16 %v637
    %v830 = vunpack.c.l.b16 %v638
    %v831 = vunpack.c.l.b16 %v639
    %v832 = vunpack.c.l.b16 %v640
    %v833 = vunpack.c.l.b16 %v641
    %v834 = vunpack.c.l.b16 %v642
    %v835 = vunpack.c.l.b16 %v643
    %v836 = vunpack.c.l.b16 %v644
    %v837 = vunpack.c.l.b16 %v645
    %v838 = vunpack.c.l.b16 %v646
    %v839 = vunpack.c.l.b16 %v647
    %v840 = vunpack.c.l.b16 %v648
    %v841 = vunpack.c.l.b16 %v649
    %v842 = vunpack.c.l.b16 %v650
    %v843 = vunpack.c.l.b16 %v651
    %v844 = vunpack.c.l.b16 %v652
    %v845 = vunpack.c.l.b16 %v653
    %v846 = vunpack.c.l.b16 %v654
    %v847 = vunpack.c.l.b16 %v655
    %v848 = vunpack.c.l.b16 %v656
    %v849 = vunpack.c.l.b16 %v657
    %v850 = vunpack.c.l.b16 %v658
    %v851 = vunpack.c.l.b16 %v659
    %v852 = vunpack.c.l.b16 %v660
    %v853 = vunpack.c.l.b16 %v661
    %v854 = vunpack.c.l.b16 %v662
    %v855 = vunpack.c.l.b16 %v663
    %v856 = vunpack.c.l.b16 %v664
    %v857 = vunpack.c.l.b16 %v665
    %v858 = vunpack.c.l.b16 %v666
    %v859 = vunpack.c.l.b16 %v667
    %v860 = vunpack.c.l.b16 %v668
    %v861 = vunpack.c.l.b16 %v669
    %v862 = vunpack.c.l.b16 %v670
    %v863 = vunpack.c.l.b16 %v671
    %v864 = vunpack.c.l.b16 %v672
    %v865 = vunpack.c.l.b16 %v673
    %v866 = vunpack.c.l.b16 %v674
    %v867 = vunpack.c.l.b16 %v675
    %v868 = vunpack.c.l.b16 %v676
    %v869 = vunpack.c.l.b16 %v677
    %v870 = vunpack.c.l.b16 %v678
    %v871 = vunpack.c.l.b16 %v679
    %v872 = vunpack.c.l.b16 %v680
    %v873 = vunpack.c.l.b16 %v681
    %v874 = vunpack.c.l.b16 %v682
    %v875 = vpack.c.b16 %v780, %v779
    %v876 = vpack.c.b16 %v782, %v781
    %v877 = vpack.c.b16 %v784, %v783
    %v878 = vpack.c.b16 %v786, %v785
    %v879 = vpack.c.b16 %v788, %v787
    %v880 = vpack.c.b16 %v790, %v789
    %v881 = vpack.c.b16 %v792, %v791
    %v882 = vpack.c.b16 %v794, %v793
    %v883 = vpack.c.b16 %v796, %v795
    %v884 = vpack.c.b16 %v798, %v797
    %v885 = vpack.c.b16 %v800, %v799
    %v886 = vpack.c.b16 %v802, %v801
    %v887 = vpack.c.b16 %v804, %v803
    %v888 = vpack.c.b16 %v806, %v805
    %v889 = vpack.c.b16 %v808, %v807
    %v890 = vpack.c.b16 %v810, %v809
    %v891 = vpack.c.b16 %v812, %v811
    %v892 = vpack.c.b16 %v814, %v813
    %v893 = vpack.c.b16 %v816, %v815
    %v894 = vpack.c.b16 %v818, %v817
    %v895 = vpack.c.b16 %v820, %v819
    %v896 = vpack.c.b16 %v822, %v821
    %v897 = vpack.c.b16 %v824, %v823
    %v898 = vpack.c.b16 %v826, %v825
    %v899 = vpack.c.b16 %v828, %v827
    %v900 = vpack.c.b16 %v830, %v829
    %v901 = vpack.c.b16 %v832, %v831
    %v902 = vpack.c.b16 %v834, %v833
    %v903 = vpack.c.b16 %v836, %v835
    %v904 = vpack.c.b16 %v838, %v837
    %v905 = vpack.c.b16 %v840, %v839
    %v906 = vpack.c.b16 %v842, %v841
    %v907 = vpack.c.b16 %v844, %v843
    %v908 = vpack.c.b16 %v846, %v845
    %v909 = vpack.c.b16 %v848, %v847
    %v910 = vpack.c.b16 %v850, %v849
    %v911 = vpack.c.b16 %v852, %v851
    %v912 = vpack.c.b16 %v854, %v853
    %v913 = vpack.c.b16 %v856, %v855
    %v914 = vpack.c.b16 %v858, %v857
    %v915 = vpack.c.b16 %v860, %v859
    %v916 = vpack.c.b16 %v862, %v861
    %v917 = vpack.c.b16 %v864, %v863
    %v918 = vpack.c.b16 %v866, %v865
    %v919 = vpack.c.b16 %v868, %v867
    %v920 = vpack.c.b16 %v870, %v869
    %v921 = vpack.c.b16 %v872, %v871
    %v922 = vpack.c.b16 %v874, %v873
    %971 = vmatprep.subr.bf16.mxu0 0
    %972 = vmatpush1.bf16.msra.mxu0 %v882
    %973 = vmatprep.subr.bf16.mxu0 0
    %974 = vmatpush1.bf16.msra.mxu0 %v881
    %975 = vmatprep.subr.bf16.mxu0 0
    %976 = vmatpush1.bf16.msra.mxu0 %v880
    %977 = vmatprep.subr.bf16.mxu0 0
    %978 = vmatpush1.bf16.msra.mxu0 %v879
    %979 = vmatprep.subr.bf16.mxu0 0
    %980 = vmatpush1.bf16.msra.mxu0 %v878
    %981 = vmatprep.subr.bf16.mxu0 0
    %982 = vmatpush1.bf16.msra.mxu0 %v877
    %983 = vmatprep.subr.bf16.mxu0 0
    %984 = vmatpush1.bf16.msra.mxu0 %v876
    %985 = vmatprep.subr.bf16.mxu0 0
    %986 = vmatpush1.bf16.msra.mxu0 %v875
    %987 = vmatprep.subr.bf16.mxu0 0
    %988 = vmatpush2.bf16.msra.mxu0 %v890
    %989 = vmatprep.subr.bf16.mxu0 0
    %990 = vmatpush2.bf16.msra.mxu0 %v889
    %991 = vmatprep.subr.bf16.mxu0 0
    %992 = vmatpush2.bf16.msra.mxu0 %v888
    %993 = vmatprep.subr.bf16.mxu0 0
    %994 = vmatpush2.bf16.msra.mxu0 %v887
    %995 = vmatprep.subr.bf16.mxu0 0
    %996 = vmatpush2.bf16.msra.mxu0 %v886
    %997 = vmatprep.subr.bf16.mxu0 0
    %998 = vmatpush2.bf16.msra.mxu0 %v885
    %999 = vmatprep.subr.bf16.mxu0 0
    %1000 = vmatpush2.bf16.msra.mxu0 %v884
    %1001 = vmatprep.subr.bf16.mxu0 0
    %1002 = vmatpush2.bf16.msra.mxu0 %v883
    %1003 = vmatprep.mubr.bf16.mxu0 %v576
    %1004 = vmatmul.mubr.bf16.gmra.mxu0 %v575
    %v1005 = vpop.f32.mrf.mxu0
    %v1006 = vadd.f32 0.0, %v1005
    %v1007 = vpop.f32.mrf.mxu0
    %v1008 = vpop.f32.mrf.mxu0
    %v1009 = vadd.f32 0.0, %v1008
    %v1010 = vpop.f32.mrf.mxu0
    %1011 = vmatprep.mubr.bf16.mxu0 %v582
    %1012 = vmatmul.mubr.bf16.gmra.mxu0 %v581
    %v1013 = vpop.f32.mrf.mxu0
    %v1014 = vadd.f32 0.0, %v1013
    %v1015 = vpop.f32.mrf.mxu0
    %v1016 = vpop.f32.mrf.mxu0
    %v1017 = vadd.f32 0.0, %v1016
    %v1018 = vpop.f32.mrf.mxu0
    %1019 = vdwg.mxu0
    %1020 = vmatprep.subr.bf16.mxu0 0
    %1021 = vmatpush1.bf16.msra.mxu0 %v898
    %1022 = vmatprep.subr.bf16.mxu0 0
    %1023 = vmatpush1.bf16.msra.mxu0 %v897
    %1024 = vmatprep.subr.bf16.mxu0 0
    %1025 = vmatpush1.bf16.msra.mxu0 %v896
    %1026 = vmatprep.subr.bf16.mxu0 0
    %1027 = vmatpush1.bf16.msra.mxu0 %v895
    %1028 = vmatprep.subr.bf16.mxu0 0
    %1029 = vmatpush1.bf16.msra.mxu0 %v894
    %1030 = vmatprep.subr.bf16.mxu0 0
    %1031 = vmatpush1.bf16.msra.mxu0 %v893
    %1032 = vmatprep.subr.bf16.mxu0 0
    %1033 = vmatpush1.bf16.msra.mxu0 %v892
    %1034 = vmatprep.subr.bf16.mxu0 0
    %1035 = vmatpush1.bf16.msra.mxu0 %v891
    %1036 = vmatprep.subr.bf16.mxu0 0
    %1037 = vmatpush2.bf16.msra.mxu0 %v906
    %1038 = vmatprep.subr.bf16.mxu0 0
    %1039 = vmatpush2.bf16.msra.mxu0 %v905
    %1040 = vmatprep.subr.bf16.mxu0 0
    %1041 = vmatpush2.bf16.msra.mxu0 %v904
    %1042 = vmatprep.subr.bf16.mxu0 0
    %1043 = vmatpush2.bf16.msra.mxu0 %v903
    %1044 = vmatprep.subr.bf16.mxu0 0
    %1045 = vmatpush2.bf16.msra.mxu0 %v902
    %1046 = vmatprep.subr.bf16.mxu0 0
    %1047 = vmatpush2.bf16.msra.mxu0 %v901
    %1048 = vmatprep.subr.bf16.mxu0 0
    %1049 = vmatpush2.bf16.msra.mxu0 %v900
    %1050 = vmatprep.subr.bf16.mxu0 0
    %1051 = vmatpush2.bf16.msra.mxu0 %v899
    %1052 = vmatprep.mubr.bf16.mxu0 %v578
    %1053 = vmatmul.mubr.bf16.gmra.mxu0 %v577
    %v1054 = vpop.f32.mrf.mxu0
    %v1055 = vadd.f32 %v1006, %v1054
    %v1056 = vpop.f32.mrf.mxu0
    %v1057 = vpop.f32.mrf.mxu0
    %v1058 = vadd.f32 %v1009, %v1057
    %v1059 = vpop.f32.mrf.mxu0
    %1060 = vmatprep.mubr.bf16.mxu0 %v584
    %1061 = vmatmul.mubr.bf16.gmra.mxu0 %v583
    %v1062 = vpop.f32.mrf.mxu0
    %v1063 = vadd.f32 %v1014, %v1062
    %v1064 = vpop.f32.mrf.mxu0
    %v1065 = vpop.f32.mrf.mxu0
    %v1066 = vadd.f32 %v1017, %v1065
    %v1067 = vpop.f32.mrf.mxu0
    %1068 = vdwg.mxu0
    %1069 = vmatprep.subr.bf16.mxu0 0
    %1070 = vmatpush1.bf16.msra.mxu0 %v914
    %1071 = vmatprep.subr.bf16.mxu0 0
    %1072 = vmatpush1.bf16.msra.mxu0 %v913
    %1073 = vmatprep.subr.bf16.mxu0 0
    %1074 = vmatpush1.bf16.msra.mxu0 %v912
    %1075 = vmatprep.subr.bf16.mxu0 0
    %1076 = vmatpush1.bf16.msra.mxu0 %v911
    %1077 = vmatprep.subr.bf16.mxu0 0
    %1078 = vmatpush1.bf16.msra.mxu0 %v910
    %1079 = vmatprep.subr.bf16.mxu0 0
    %1080 = vmatpush1.bf16.msra.mxu0 %v909
    %1081 = vmatprep.subr.bf16.mxu0 0
    %1082 = vmatpush1.bf16.msra.mxu0 %v908
    %1083 = vmatprep.subr.bf16.mxu0 0
    %1084 = vmatpush1.bf16.msra.mxu0 %v907
    %1085 = vmatprep.subr.bf16.mxu0 0
    %1086 = vmatpush2.bf16.msra.mxu0 %v922
    %1087 = vmatprep.subr.bf16.mxu0 0
    %1088 = vmatpush2.bf16.msra.mxu0 %v921
    %1089 = vmatprep.subr.bf16.mxu0 0
    %1090 = vmatpush2.bf16.msra.mxu0 %v920
    %1091 = vmatprep.subr.bf16.mxu0 0
    %1092 = vmatpush2.bf16.msra.mxu0 %v919
    %1093 = vmatprep.subr.bf16.mxu0 0
    %1094 = vmatpush2.bf16.msra.mxu0 %v918
    %1095 = vmatprep.subr.bf16.mxu0 0
    %1096 = vmatpush2.bf16.msra.mxu0 %v917
    %1097 = vmatprep.subr.bf16.mxu0 0
    %1098 = vmatpush2.bf16.msra.mxu0 %v916
    %1099 = vmatprep.subr.bf16.mxu0 0
    %1100 = vmatpush2.bf16.msra.mxu0 %v915
    %1101 = vmatprep.mubr.bf16.mxu0 %v580
    %1102 = vmatmul.mubr.bf16.gmra.mxu0 %v579
    %v1103 = vpop.f32.mrf.mxu0
    %v1104 = vadd.f32 %v1055, %v1103
    %v1105 = vpop.f32.mrf.mxu0
    %v1106 = vpop.f32.mrf.mxu0
    %v1107 = vadd.f32 %v1058, %v1106
    %v1108 = vpop.f32.mrf.mxu0
    %1109 = vmatprep.mubr.bf16.mxu0 %v586
    %1110 = vmatmul.mubr.bf16.gmra.mxu0 %v585
    %v1111 = vpop.f32.mrf.mxu0
    %v1112 = vadd.f32 %v1063, %v1111
    %v1113 = vpop.f32.mrf.mxu0
    %v1114 = vpop.f32.mrf.mxu0
    %v1115 = vadd.f32 %v1066, %v1114
    %v1116 = vpop.f32.mrf.mxu0
    %1117 = vdwg.mxu0
    %v1118 = vmax.f32 %v1104, 0.0
    %v1119 = vmax.f32 %v1107, 0.0
    %v1120 = vmax.f32 %v1112, 0.0
    %v1121 = vmax.f32 %v1115, 0.0
    %v1122 = vld [vmem:[%s2] sm:$0xff]
    %v1123 = vld [vmem:[%s2 + $0x8] sm:$0xff]
    %v1124 = vld [vmem:[#allocation5] sm:$0xff]
    %v1125 = vld [vmem:[#allocation5 + $0x8] sm:$0xff]
    %v1126 = vadd.f32 %v1122, %v1124
    %v1127 = vadd.f32 %v1123, %v1125
    %vm1128 = vcmp.ge.f32.partialorder %v1126, 1.0
    %vm1129 = vcmp.ge.f32.partialorder %v1127, 1.0
    %v1130 = vsel %vm1128, 1.0, %v1126
    %v1131 = vsel %vm1129, 1.0, %v1127
    %vm1132 = vcmask 130048
    %v1133 = vsel %vm1132, %v1130, 0.0
    %1134 = vadd.xlane.f32.xlu0 %v1133
    %v1135 = vpop.xlane.xlu0 %1134
    %v1136 = vsel %vm1132, %v1131, 0.0
    %1137 = vadd.xlane.f32.xlu0 %v1136
    %v1138 = vpop.xlane.xlu0 %1137
    %v1139 = vadd.f32 %v1135, 1e-07
    %v1140 = vadd.f32 %v1138, 1e-07
    %v1141 = vrcp.pop %v1139
    %v1142 = vrcp.pop %v1140
    %s1143 = scalar_lea.vmem %s2, 16
    %v1144 = vld [vmem:[%s1143] sm:$0xff]
    %v1145 = vld [vmem:[%s1143 + $0x8] sm:$0xff]
    %s1146 = scalar_lea.vmem [#allocation5], 16
    %v1147 = vld [vmem:[%s1146] sm:$0xff]
    %v1148 = vld [vmem:[%s1146 + $0x8] sm:$0xff]
    %v1149 = vadd.f32 %v1144, %v1147
    %v1150 = vadd.f32 %v1145, %v1148
    %vm1151 = vcmp.ge.f32.partialorder %v1149, 1.0
    %vm1152 = vcmp.ge.f32.partialorder %v1150, 1.0
    %v1153 = vsel %vm1151, 1.0, %v1149
    %v1154 = vsel %vm1152, 1.0, %v1150
    %v1155 = vsel %vm1132, %v1153, 0.0
    %1156 = vadd.xlane.f32.xlu0 %v1155
    %v1157 = vpop.xlane.xlu0 %1156
    %v1158 = vsel %vm1132, %v1154, 0.0
    %1159 = vadd.xlane.f32.xlu0 %v1158
    %v1160 = vpop.xlane.xlu0 %1159
    %v1161 = vadd.f32 %v1157, 1e-07
    %v1162 = vadd.f32 %v1160, 1e-07
    %v1163 = vrcp.pop %v1161
    %v1164 = vrcp.pop %v1162
    %v1165 = vld [vmem:[#allocation8] sm:$0xf]
    %v1166 = vld [vmem:[#allocation8 + $0x4] sm:$0xf]
    %v1167 = vld [vmem:[#allocation8 + $0x8] sm:$0xf]
    %v1168 = vld [vmem:[#allocation8 + $0xc] sm:$0xf]
    %v1169 = vld [vmem:[#allocation8 + $0x10] sm:$0xf]
    %v1170 = vld [vmem:[#allocation8 + $0x14] sm:$0xf]
    %v1171 = vld [vmem:[#allocation8 + $0x18] sm:$0xf]
    %v1172 = vld [vmem:[#allocation8 + $0x1c] sm:$0xf]
    %v1173 = vld [vmem:[#allocation8 + $0x20] sm:$0xf]
    %v1174 = vld [vmem:[#allocation8 + $0x24] sm:$0xf]
    %v1175 = vld [vmem:[#allocation8 + $0x28] sm:$0xf]
    %v1176 = vld [vmem:[#allocation8 + $0x2c] sm:$0xf]
    %v1177 = vld [vmem:[#allocation8 + $0x30] sm:$0xf]
    %v1178 = vld [vmem:[#allocation8 + $0x34] sm:$0xf]
    %v1179 = vld [vmem:[#allocation8 + $0x38] sm:$0xf]
    %v1180 = vld [vmem:[#allocation8 + $0x3c] sm:$0xf]
    %v1181 = vld [vmem:[#allocation10] sm:$0x1]
    %v1182 = vpack.c.bf16 %v1119, %v1118
    %v1183 = vpack.c.bf16 %v1121, %v1120
    %v1200 = vunpack.c.l.b16 %v1165
    %v1201 = vunpack.c.l.b16 %v1166
    %v1202 = vunpack.c.l.b16 %v1167
    %v1203 = vunpack.c.l.b16 %v1168
    %v1204 = vunpack.c.l.b16 %v1169
    %v1205 = vunpack.c.l.b16 %v1170
    %v1206 = vunpack.c.l.b16 %v1171
    %v1207 = vunpack.c.l.b16 %v1172
    %v1208 = vunpack.c.l.b16 %v1173
    %v1209 = vunpack.c.l.b16 %v1174
    %v1210 = vunpack.c.l.b16 %v1175
    %v1211 = vunpack.c.l.b16 %v1176
    %v1212 = vunpack.c.l.b16 %v1177
    %v1213 = vunpack.c.l.b16 %v1178
    %v1214 = vunpack.c.l.b16 %v1179
    %v1215 = vunpack.c.l.b16 %v1180
    %v1216 = vpack.c.b16 %v1201, %v1200
    %v1217 = vpack.c.b16 %v1203, %v1202
    %v1218 = vpack.c.b16 %v1205, %v1204
    %v1219 = vpack.c.b16 %v1207, %v1206
    %v1220 = vpack.c.b16 %v1209, %v1208
    %v1221 = vpack.c.b16 %v1211, %v1210
    %v1222 = vpack.c.b16 %v1213, %v1212
    %v1223 = vpack.c.b16 %v1215, %v1214
    %1232 = vmatprep.subr.bf16.mxu0 0
    %1233 = vmatpush1.bf16.msra.mxu0 %v1223
    %1234 = vmatprep.subr.bf16.mxu0 0
    %1235 = vmatpush1.bf16.msra.mxu0 %v1222
    %1236 = vmatprep.subr.bf16.mxu0 0
    %1237 = vmatpush1.bf16.msra.mxu0 %v1221
    %1238 = vmatprep.subr.bf16.mxu0 0
    %1239 = vmatpush1.bf16.msra.mxu0 %v1220
    %1240 = vmatprep.subr.bf16.mxu0 0
    %1241 = vmatpush1.bf16.msra.mxu0 %v1219
    %1242 = vmatprep.subr.bf16.mxu0 0
    %1243 = vmatpush1.bf16.msra.mxu0 %v1218
    %1244 = vmatprep.subr.bf16.mxu0 0
    %1245 = vmatpush1.bf16.msra.mxu0 %v1217
    %1246 = vmatprep.subr.bf16.mxu0 0
    %1247 = vmatpush1.bf16.msra.mxu0 %v1216
    %1248 = vmatprep.subr.bf16.mxu0 0
    %1249 = vmatpush2.bf16.msra.mxu0 0
    %1250 = vmatprep.subr.bf16.mxu0 0
    %1251 = vmatpush2.bf16.msra.mxu0 0
    %1252 = vmatprep.subr.bf16.mxu0 0
    %1253 = vmatpush2.bf16.msra.mxu0 0
    %1254 = vmatprep.subr.bf16.mxu0 0
    %1255 = vmatpush2.bf16.msra.mxu0 0
    %1256 = vmatprep.subr.bf16.mxu0 0
    %1257 = vmatpush2.bf16.msra.mxu0 0
    %1258 = vmatprep.subr.bf16.mxu0 0
    %1259 = vmatpush2.bf16.msra.mxu0 0
    %1260 = vmatprep.subr.bf16.mxu0 0
    %1261 = vmatpush2.bf16.msra.mxu0 0
    %1262 = vmatprep.subr.bf16.mxu0 0
    %1263 = vmatpush2.bf16.msra.mxu0 0
    %1264 = vmatprep.mubr.bf16.mxu0 0
    %1265 = vmatmul.mubr.bf16.gmra.mxu0 %v1182
    %v1266 = vpop.f32.mrf.mxu0
    %v1267 = vadd.f32 0.0, %v1266
    %v1268 = vpop.f32.mrf.mxu0
    %v1269 = vpop.f32.mrf.mxu0
    %v1270 = vadd.f32 0.0, %v1269
    %v1271 = vpop.f32.mrf.mxu0
    %1272 = vmatprep.mubr.bf16.mxu0 0
    %1273 = vmatmul.mubr.bf16.gmra.mxu0 %v1183
    %v1274 = vpop.f32.mrf.mxu0
    %v1275 = vadd.f32 0.0, %v1274
    %v1276 = vpop.f32.mrf.mxu0
    %v1277 = vpop.f32.mrf.mxu0
    %v1278 = vadd.f32 0.0, %v1277
    %v1279 = vpop.f32.mrf.mxu0
    %1280 = vdwg.mxu0
    %v1282 = vsel %vm1132, %v1130, 0
    %v1285 = vsel %vm1132, %v1131, 0
    %1287 = vmatprep.subr.mxu0 0.0
    %1288 = vmatpush1.msra.mxu0 0.0
    %1289 = vmatprep.subr.mxu0 0.0
    %1290 = vmatpush1.msra.mxu0 0.0
    %1291 = vmatprep.subr.mxu0 0.0
    %1292 = vmatpush1.msra.mxu0 0.0
    %1293 = vmatprep.subr.mxu0 0.0
    %1294 = vmatpush1.msra.mxu0 0.0
    %1295 = vmatprep.subr.mxu0 0.0
    %1296 = vmatpush1.msra.mxu0 0.0
    %1297 = vmatprep.subr.mxu0 0.0
    %1298 = vmatpush1.msra.mxu0 0.0
    %1299 = vmatprep.subr.mxu0 0.0
    %1300 = vmatpush1.msra.mxu0 0.0
    %1301 = vmatprep.subr.mxu0 0.0
    %1302 = vmatpush1.msra.mxu0 0.0
    %1303 = vmatprep.subr.mxu0 0.0
    %1304 = vmatpush1.msra.mxu0 0.0
    %1305 = vmatprep.subr.mxu0 0.0
    %1306 = vmatpush1.msra.mxu0 0.0
    %1307 = vmatprep.subr.mxu0 0.0
    %1308 = vmatpush1.msra.mxu0 0.0
    %1309 = vmatprep.subr.mxu0 0.0
    %1310 = vmatpush1.msra.mxu0 0.0
    %1311 = vmatprep.subr.mxu0 0.0
    %1312 = vmatpush1.msra.mxu0 0.0
    %1313 = vmatprep.subr.mxu0 0.0
    %1314 = vmatpush1.msra.mxu0 0.0
    %1315 = vmatprep.subr.mxu0 0.0
    %1316 = vmatpush1.msra.mxu0 %v1270
    %1317 = vmatprep.subr.mxu0 0.0
    %1318 = vmatpush1.msra.mxu0 %v1267
    %1319 = vmatprep.subr.mxu0 0.0
    %1320 = vmatpush2.msra.mxu0 0.0
    %1321 = vmatprep.subr.mxu0 0.0
    %1322 = vmatpush2.msra.mxu0 0.0
    %1323 = vmatprep.subr.mxu0 0.0
    %1324 = vmatpush2.msra.mxu0 0.0
    %1325 = vmatprep.subr.mxu0 0.0
    %1326 = vmatpush2.msra.mxu0 0.0
    %1327 = vmatprep.subr.mxu0 0.0
    %1328 = vmatpush2.msra.mxu0 0.0
    %1329 = vmatprep.subr.mxu0 0.0
    %1330 = vmatpush2.msra.mxu0 0.0
    %1331 = vmatprep.subr.mxu0 0.0
    %1332 = vmatpush2.msra.mxu0 0.0
    %1333 = vmatprep.subr.mxu0 0.0
    %1334 = vmatpush2.msra.mxu0 0.0
    %1335 = vmatprep.subr.mxu0 0.0
    %1336 = vmatpush2.msra.mxu0 0.0
    %1337 = vmatprep.subr.mxu0 0.0
    %1338 = vmatpush2.msra.mxu0 0.0
    %1339 = vmatprep.subr.mxu0 0.0
    %1340 = vmatpush2.msra.mxu0 0.0
    %1341 = vmatprep.subr.mxu0 0.0
    %1342 = vmatpush2.msra.mxu0 0.0
    %1343 = vmatprep.subr.mxu0 0.0
    %1344 = vmatpush2.msra.mxu0 0.0
    %1345 = vmatprep.subr.mxu0 0.0
    %1346 = vmatpush2.msra.mxu0 0.0
    %1347 = vmatprep.subr.mxu0 0.0
    %1348 = vmatpush2.msra.mxu0 0.0
    %1349 = vmatprep.subr.mxu0 0.0
    %1350 = vmatpush2.msra.mxu0 0.0
    %1351 = vmatprep.mubr.f32.mxu0 0.0
    %1352 = vmatmul.mubr.f32.gmra.mxu0 %v1282
    %v1353 = vpop.f32.mrf.mxu0
    %v1354 = vadd.f32 0.0, %v1353
    %v1355 = vpop.f32.mrf.mxu0
    %1356 = vmatprep.mubr.f32.mxu0 0.0
    %1357 = vmatmul.mubr.f32.gmra.mxu0 %v1285
    %v1358 = vpop.f32.mrf.mxu0
    %v1359 = vadd.f32 0.0, %v1358
    %v1360 = vpop.f32.mrf.mxu0
    %1361 = vdwg.mxu0
    %v1362 = vmul.f32 %v1354, %v1141
    %v1363 = vmul.f32 %v1359, %v1142
    %v1365 = vsel %vm1132, %v1153, 0
    %v1368 = vsel %vm1132, %v1154, 0
    %1370 = vmatprep.subr.mxu0 0.0
    %1371 = vmatpush1.msra.mxu0 0.0
    %1372 = vmatprep.subr.mxu0 0.0
    %1373 = vmatpush1.msra.mxu0 0.0
    %1374 = vmatprep.subr.mxu0 0.0
    %1375 = vmatpush1.msra.mxu0 0.0
    %1376 = vmatprep.subr.mxu0 0.0
    %1377 = vmatpush1.msra.mxu0 0.0
    %1378 = vmatprep.subr.mxu0 0.0
    %1379 = vmatpush1.msra.mxu0 0.0
    %1380 = vmatprep.subr.mxu0 0.0
    %1381 = vmatpush1.msra.mxu0 0.0
    %1382 = vmatprep.subr.mxu0 0.0
    %1383 = vmatpush1.msra.mxu0 0.0
    %1384 = vmatprep.subr.mxu0 0.0
    %1385 = vmatpush1.msra.mxu0 0.0
    %1386 = vmatprep.subr.mxu0 0.0
    %1387 = vmatpush1.msra.mxu0 0.0
    %1388 = vmatprep.subr.mxu0 0.0
    %1389 = vmatpush1.msra.mxu0 0.0
    %1390 = vmatprep.subr.mxu0 0.0
    %1391 = vmatpush1.msra.mxu0 0.0
    %1392 = vmatprep.subr.mxu0 0.0
    %1393 = vmatpush1.msra.mxu0 0.0
    %1394 = vmatprep.subr.mxu0 0.0
    %1395 = vmatpush1.msra.mxu0 0.0
    %1396 = vmatprep.subr.mxu0 0.0
    %1397 = vmatpush1.msra.mxu0 0.0
    %1398 = vmatprep.subr.mxu0 0.0
    %1399 = vmatpush1.msra.mxu0 %v1278
    %1400 = vmatprep.subr.mxu0 0.0
    %1401 = vmatpush1.msra.mxu0 %v1275
    %1402 = vmatprep.subr.mxu0 0.0
    %1403 = vmatpush2.msra.mxu0 0.0
    %1404 = vmatprep.subr.mxu0 0.0
    %1405 = vmatpush2.msra.mxu0 0.0
    %1406 = vmatprep.subr.mxu0 0.0
    %1407 = vmatpush2.msra.mxu0 0.0
    %1408 = vmatprep.subr.mxu0 0.0
    %1409 = vmatpush2.msra.mxu0 0.0
    %1410 = vmatprep.subr.mxu0 0.0
    %1411 = vmatpush2.msra.mxu0 0.0
    %1412 = vmatprep.subr.mxu0 0.0
    %1413 = vmatpush2.msra.mxu0 0.0
    %1414 = vmatprep.subr.mxu0 0.0
    %1415 = vmatpush2.msra.mxu0 0.0
    %1416 = vmatprep.subr.mxu0 0.0
    %1417 = vmatpush2.msra.mxu0 0.0
    %1418 = vmatprep.subr.mxu0 0.0
    %1419 = vmatpush2.msra.mxu0 0.0
    %1420 = vmatprep.subr.mxu0 0.0
    %1421 = vmatpush2.msra.mxu0 0.0
    %1422 = vmatprep.subr.mxu0 0.0
    %1423 = vmatpush2.msra.mxu0 0.0
    %1424 = vmatprep.subr.mxu0 0.0
    %1425 = vmatpush2.msra.mxu0 0.0
    %1426 = vmatprep.subr.mxu0 0.0
    %1427 = vmatpush2.msra.mxu0 0.0
    %1428 = vmatprep.subr.mxu0 0.0
    %1429 = vmatpush2.msra.mxu0 0.0
    %1430 = vmatprep.subr.mxu0 0.0
    %1431 = vmatpush2.msra.mxu0 0.0
    %1432 = vmatprep.subr.mxu0 0.0
    %1433 = vmatpush2.msra.mxu0 0.0
    %1434 = vmatprep.mubr.f32.mxu0 0.0
    %1435 = vmatmul.mubr.f32.gmra.mxu0 %v1365
    %v1436 = vpop.f32.mrf.mxu0
    %v1437 = vadd.f32 0.0, %v1436
    %v1438 = vpop.f32.mrf.mxu0
    %1439 = vmatprep.mubr.f32.mxu0 0.0
    %1440 = vmatmul.mubr.f32.gmra.mxu0 %v1368
    %v1441 = vpop.f32.mrf.mxu0
    %v1442 = vadd.f32 0.0, %v1441
    %v1443 = vpop.f32.mrf.mxu0
    %1444 = vdwg.mxu0
    %v1445 = vmul.f32 %v1437, %v1163
    %v1446 = vmul.f32 %v1442, %v1164
    %v1448 = vlaneseq
    %v1449 = vshrl.u32 %v1448, 7
    %v1450 = vsub.s32 0, %v1449
    %v1451 = vrot.slane %v1181, %v1450
    %v1453 = vadd.f32 %v1362, %v1451
    %v1454 = vadd.f32 %v1363, %v1451
    %v1455 = vadd.f32 %v1445, %v1451
    %v1456 = vadd.f32 %v1446, %v1451
    %v1457 = vmax.f32 %v1453, 0.0
    %v1458 = vmax.f32 %v1454, 0.0
    %v1459 = vmax.f32 %v1455, 0.0
    %v1460 = vmax.f32 %v1456, 0.0
    %v1461 = vadd.f32 %v1457, %v1118
    %v1462 = vadd.f32 %v1458, %v1119
    %v1463 = vadd.f32 %v1459, %v1120
    %v1464 = vadd.f32 %v1460, %v1121
    %s1465 = scalar_lea.vmem [#allocation8], 64
    %v1466 = vld [vmem:[%s1465] sm:$0xf]
    %v1467 = vld [vmem:[%s1465 + $0x4] sm:$0xf]
    %v1468 = vld [vmem:[%s1465 + $0x8] sm:$0xf]
    %v1469 = vld [vmem:[%s1465 + $0xc] sm:$0xf]
    %v1470 = vld [vmem:[%s1465 + $0x10] sm:$0xf]
    %v1471 = vld [vmem:[%s1465 + $0x14] sm:$0xf]
    %v1472 = vld [vmem:[%s1465 + $0x18] sm:$0xf]
    %v1473 = vld [vmem:[%s1465 + $0x1c] sm:$0xf]
    %v1474 = vld [vmem:[%s1465 + $0x20] sm:$0xf]
    %v1475 = vld [vmem:[%s1465 + $0x24] sm:$0xf]
    %v1476 = vld [vmem:[%s1465 + $0x28] sm:$0xf]
    %v1477 = vld [vmem:[%s1465 + $0x2c] sm:$0xf]
    %v1478 = vld [vmem:[%s1465 + $0x30] sm:$0xf]
    %v1479 = vld [vmem:[%s1465 + $0x34] sm:$0xf]
    %v1480 = vld [vmem:[%s1465 + $0x38] sm:$0xf]
    %v1481 = vld [vmem:[%s1465 + $0x3c] sm:$0xf]
    %s1482 = scalar_lea.vmem [#allocation10], 1
    %v1483 = vld [vmem:[%s1482] sm:$0x1]
    %v1484 = vpack.c.bf16 %v1462, %v1461
    %v1485 = vpack.c.bf16 %v1464, %v1463
    %v1502 = vunpack.c.l.b16 %v1466
    %v1503 = vunpack.c.l.b16 %v1467
    %v1504 = vunpack.c.l.b16 %v1468
    %v1505 = vunpack.c.l.b16 %v1469
    %v1506 = vunpack.c.l.b16 %v1470
    %v1507 = vunpack.c.l.b16 %v1471
    %v1508 = vunpack.c.l.b16 %v1472
    %v1509 = vunpack.c.l.b16 %v1473
    %v1510 = vunpack.c.l.b16 %v1474
    %v1511 = vunpack.c.l.b16 %v1475
    %v1512 = vunpack.c.l.b16 %v1476
    %v1513 = vunpack.c.l.b16 %v1477
    %v1514 = vunpack.c.l.b16 %v1478
    %v1515 = vunpack.c.l.b16 %v1479
    %v1516 = vunpack.c.l.b16 %v1480
    %v1517 = vunpack.c.l.b16 %v1481
    %v1518 = vpack.c.b16 %v1503, %v1502
    %v1519 = vpack.c.b16 %v1505, %v1504
    %v1520 = vpack.c.b16 %v1507, %v1506
    %v1521 = vpack.c.b16 %v1509, %v1508
    %v1522 = vpack.c.b16 %v1511, %v1510
    %v1523 = vpack.c.b16 %v1513, %v1512
    %v1524 = vpack.c.b16 %v1515, %v1514
    %v1525 = vpack.c.b16 %v1517, %v1516
    %1534 = vmatprep.subr.bf16.mxu0 0
    %1535 = vmatpush1.bf16.msra.mxu0 %v1525
    %1536 = vmatprep.subr.bf16.mxu0 0
    %1537 = vmatpush1.bf16.msra.mxu0 %v1524
    %1538 = vmatprep.subr.bf16.mxu0 0
    %1539 = vmatpush1.bf16.msra.mxu0 %v1523
    %1540 = vmatprep.subr.bf16.mxu0 0
    %1541 = vmatpush1.bf16.msra.mxu0 %v1522
    %1542 = vmatprep.subr.bf16.mxu0 0
    %1543 = vmatpush1.bf16.msra.mxu0 %v1521
    %1544 = vmatprep.subr.bf16.mxu0 0
    %1545 = vmatpush1.bf16.msra.mxu0 %v1520
    %1546 = vmatprep.subr.bf16.mxu0 0
    %1547 = vmatpush1.bf16.msra.mxu0 %v1519
    %1548 = vmatprep.subr.bf16.mxu0 0
    %1549 = vmatpush1.bf16.msra.mxu0 %v1518
    %1550 = vmatprep.subr.bf16.mxu0 0
    %1551 = vmatpush2.bf16.msra.mxu0 0
    %1552 = vmatprep.subr.bf16.mxu0 0
    %1553 = vmatpush2.bf16.msra.mxu0 0
    %1554 = vmatprep.subr.bf16.mxu0 0
    %1555 = vmatpush2.bf16.msra.mxu0 0
    %1556 = vmatprep.subr.bf16.mxu0 0
    %1557 = vmatpush2.bf16.msra.mxu0 0
    %1558 = vmatprep.subr.bf16.mxu0 0
    %1559 = vmatpush2.bf16.msra.mxu0 0
    %1560 = vmatprep.subr.bf16.mxu0 0
    %1561 = vmatpush2.bf16.msra.mxu0 0
    %1562 = vmatprep.subr.bf16.mxu0 0
    %1563 = vmatpush2.bf16.msra.mxu0 0
    %1564 = vmatprep.subr.bf16.mxu0 0
    %1565 = vmatpush2.bf16.msra.mxu0 0
    %1566 = vmatprep.mubr.bf16.mxu0 0
    %1567 = vmatmul.mubr.bf16.gmra.mxu0 %v1484
    %v1568 = vpop.f32.mrf.mxu0
    %v1569 = vadd.f32 0.0, %v1568
    %v1570 = vpop.f32.mrf.mxu0
    %v1571 = vpop.f32.mrf.mxu0
    %v1572 = vadd.f32 0.0, %v1571
    %v1573 = vpop.f32.mrf.mxu0
    %1574 = vmatprep.mubr.bf16.mxu0 0
    %1575 = vmatmul.mubr.bf16.gmra.mxu0 %v1485
    %v1576 = vpop.f32.mrf.mxu0
    %v1577 = vadd.f32 0.0, %v1576
    %v1578 = vpop.f32.mrf.mxu0
    %v1579 = vpop.f32.mrf.mxu0
    %v1580 = vadd.f32 0.0, %v1579
    %v1581 = vpop.f32.mrf.mxu0
    %1582 = vdwg.mxu0
    %1583 = vmatprep.subr.mxu0 0.0
    %1584 = vmatpush1.msra.mxu0 0.0
    %1585 = vmatprep.subr.mxu0 0.0
    %1586 = vmatpush1.msra.mxu0 0.0
    %1587 = vmatprep.subr.mxu0 0.0
    %1588 = vmatpush1.msra.mxu0 0.0
    %1589 = vmatprep.subr.mxu0 0.0
    %1590 = vmatpush1.msra.mxu0 0.0
    %1591 = vmatprep.subr.mxu0 0.0
    %1592 = vmatpush1.msra.mxu0 0.0
    %1593 = vmatprep.subr.mxu0 0.0
    %1594 = vmatpush1.msra.mxu0 0.0
    %1595 = vmatprep.subr.mxu0 0.0
    %1596 = vmatpush1.msra.mxu0 0.0
    %1597 = vmatprep.subr.mxu0 0.0
    %1598 = vmatpush1.msra.mxu0 0.0
    %1599 = vmatprep.subr.mxu0 0.0
    %1600 = vmatpush1.msra.mxu0 0.0
    %1601 = vmatprep.subr.mxu0 0.0
    %1602 = vmatpush1.msra.mxu0 0.0
    %1603 = vmatprep.subr.mxu0 0.0
    %1604 = vmatpush1.msra.mxu0 0.0
    %1605 = vmatprep.subr.mxu0 0.0
    %1606 = vmatpush1.msra.mxu0 0.0
    %1607 = vmatprep.subr.mxu0 0.0
    %1608 = vmatpush1.msra.mxu0 0.0
    %1609 = vmatprep.subr.mxu0 0.0
    %1610 = vmatpush1.msra.mxu0 0.0
    %1611 = vmatprep.subr.mxu0 0.0
    %1612 = vmatpush1.msra.mxu0 %v1572
    %1613 = vmatprep.subr.mxu0 0.0
    %1614 = vmatpush1.msra.mxu0 %v1569
    %1615 = vmatprep.subr.mxu0 0.0
    %1616 = vmatpush2.msra.mxu0 0.0
    %1617 = vmatprep.subr.mxu0 0.0
    %1618 = vmatpush2.msra.mxu0 0.0
    %1619 = vmatprep.subr.mxu0 0.0
    %1620 = vmatpush2.msra.mxu0 0.0
    %1621 = vmatprep.subr.mxu0 0.0
    %1622 = vmatpush2.msra.mxu0 0.0
    %1623 = vmatprep.subr.mxu0 0.0
    %1624 = vmatpush2.msra.mxu0 0.0
    %1625 = vmatprep.subr.mxu0 0.0
    %1626 = vmatpush2.msra.mxu0 0.0
    %1627 = vmatprep.subr.mxu0 0.0
    %1628 = vmatpush2.msra.mxu0 0.0
    %1629 = vmatprep.subr.mxu0 0.0
    %1630 = vmatpush2.msra.mxu0 0.0
    %1631 = vmatprep.subr.mxu0 0.0
    %1632 = vmatpush2.msra.mxu0 0.0
    %1633 = vmatprep.subr.mxu0 0.0
    %1634 = vmatpush2.msra.mxu0 0.0
    %1635 = vmatprep.subr.mxu0 0.0
    %1636 = vmatpush2.msra.mxu0 0.0
    %1637 = vmatprep.subr.mxu0 0.0
    %1638 = vmatpush2.msra.mxu0 0.0
    %1639 = vmatprep.subr.mxu0 0.0
    %1640 = vmatpush2.msra.mxu0 0.0
    %1641 = vmatprep.subr.mxu0 0.0
    %1642 = vmatpush2.msra.mxu0 0.0
    %1643 = vmatprep.subr.mxu0 0.0
    %1644 = vmatpush2.msra.mxu0 0.0
    %1645 = vmatprep.subr.mxu0 0.0
    %1646 = vmatpush2.msra.mxu0 0.0
    %1647 = vmatprep.mubr.f32.mxu0 0.0
    %1648 = vmatmul.mubr.f32.gmra.mxu0 %v1282
    %v1649 = vpop.f32.mrf.mxu0
    %v1650 = vadd.f32 0.0, %v1649
    %v1651 = vpop.f32.mrf.mxu0
    %1652 = vmatprep.mubr.f32.mxu0 0.0
    %1653 = vmatmul.mubr.f32.gmra.mxu0 %v1285
    %v1654 = vpop.f32.mrf.mxu0
    %v1655 = vadd.f32 0.0, %v1654
    %v1656 = vpop.f32.mrf.mxu0
    %1657 = vdwg.mxu0
    %v1658 = vmul.f32 %v1650, %v1141
    %v1659 = vmul.f32 %v1655, %v1142
    %1660 = vmatprep.subr.mxu0 0.0
    %1661 = vmatpush1.msra.mxu0 0.0
    %1662 = vmatprep.subr.mxu0 0.0
    %1663 = vmatpush1.msra.mxu0 0.0
    %1664 = vmatprep.subr.mxu0 0.0
    %1665 = vmatpush1.msra.mxu0 0.0
    %1666 = vmatprep.subr.mxu0 0.0
    %1667 = vmatpush1.msra.mxu0 0.0
    %1668 = vmatprep.subr.mxu0 0.0
    %1669 = vmatpush1.msra.mxu0 0.0
    %1670 = vmatprep.subr.mxu0 0.0
    %1671 = vmatpush1.msra.mxu0 0.0
    %1672 = vmatprep.subr.mxu0 0.0
    %1673 = vmatpush1.msra.mxu0 0.0
    %1674 = vmatprep.subr.mxu0 0.0
    %1675 = vmatpush1.msra.mxu0 0.0
    %1676 = vmatprep.subr.mxu0 0.0
    %1677 = vmatpush1.msra.mxu0 0.0
    %1678 = vmatprep.subr.mxu0 0.0
    %1679 = vmatpush1.msra.mxu0 0.0
    %1680 = vmatprep.subr.mxu0 0.0
    %1681 = vmatpush1.msra.mxu0 0.0
    %1682 = vmatprep.subr.mxu0 0.0
    %1683 = vmatpush1.msra.mxu0 0.0
    %1684 = vmatprep.subr.mxu0 0.0
    %1685 = vmatpush1.msra.mxu0 0.0
    %1686 = vmatprep.subr.mxu0 0.0
    %1687 = vmatpush1.msra.mxu0 0.0
    %1688 = vmatprep.subr.mxu0 0.0
    %1689 = vmatpush1.msra.mxu0 %v1580
    %1690 = vmatprep.subr.mxu0 0.0
    %1691 = vmatpush1.msra.mxu0 %v1577
    %1692 = vmatprep.subr.mxu0 0.0
    %1693 = vmatpush2.msra.mxu0 0.0
    %1694 = vmatprep.subr.mxu0 0.0
    %1695 = vmatpush2.msra.mxu0 0.0
    %1696 = vmatprep.subr.mxu0 0.0
    %1697 = vmatpush2.msra.mxu0 0.0
    %1698 = vmatprep.subr.mxu0 0.0
    %1699 = vmatpush2.msra.mxu0 0.0
    %1700 = vmatprep.subr.mxu0 0.0
    %1701 = vmatpush2.msra.mxu0 0.0
    %1702 = vmatprep.subr.mxu0 0.0
    %1703 = vmatpush2.msra.mxu0 0.0
    %1704 = vmatprep.subr.mxu0 0.0
    %1705 = vmatpush2.msra.mxu0 0.0
    %1706 = vmatprep.subr.mxu0 0.0
    %1707 = vmatpush2.msra.mxu0 0.0
    %1708 = vmatprep.subr.mxu0 0.0
    %1709 = vmatpush2.msra.mxu0 0.0
    %1710 = vmatprep.subr.mxu0 0.0
    %1711 = vmatpush2.msra.mxu0 0.0
    %1712 = vmatprep.subr.mxu0 0.0
    %1713 = vmatpush2.msra.mxu0 0.0
    %1714 = vmatprep.subr.mxu0 0.0
    %1715 = vmatpush2.msra.mxu0 0.0
    %1716 = vmatprep.subr.mxu0 0.0
    %1717 = vmatpush2.msra.mxu0 0.0
    %1718 = vmatprep.subr.mxu0 0.0
    %1719 = vmatpush2.msra.mxu0 0.0
    %1720 = vmatprep.subr.mxu0 0.0
    %1721 = vmatpush2.msra.mxu0 0.0
    %1722 = vmatprep.subr.mxu0 0.0
    %1723 = vmatpush2.msra.mxu0 0.0
    %1724 = vmatprep.mubr.f32.mxu0 0.0
    %1725 = vmatmul.mubr.f32.gmra.mxu0 %v1365
    %v1726 = vpop.f32.mrf.mxu0
    %v1727 = vadd.f32 0.0, %v1726
    %v1728 = vpop.f32.mrf.mxu0
    %1729 = vmatprep.mubr.f32.mxu0 0.0
    %1730 = vmatmul.mubr.f32.gmra.mxu0 %v1368
    %v1731 = vpop.f32.mrf.mxu0
    %v1732 = vadd.f32 0.0, %v1731
    %v1733 = vpop.f32.mrf.mxu0
    %1734 = vdwg.mxu0
    %v1735 = vmul.f32 %v1727, %v1163
    %v1736 = vmul.f32 %v1732, %v1164
    %v1738 = vlaneseq
    %v1739 = vshrl.u32 %v1738, 7
    %v1740 = vsub.s32 0, %v1739
    %v1741 = vrot.slane %v1483, %v1740
    %v1743 = vadd.f32 %v1658, %v1741
    %v1744 = vadd.f32 %v1659, %v1741
    %v1745 = vadd.f32 %v1735, %v1741
    %v1746 = vadd.f32 %v1736, %v1741
    %v1747 = vmax.f32 %v1743, 0.0
    %v1748 = vmax.f32 %v1744, 0.0
    %v1749 = vmax.f32 %v1745, 0.0
    %v1750 = vmax.f32 %v1746, 0.0
    %v1751 = vadd.f32 %v1747, %v1461
    %v1752 = vadd.f32 %v1748, %v1462
    %v1753 = vadd.f32 %v1749, %v1463
    %v1754 = vadd.f32 %v1750, %v1464
    %s1755 = scalar_lea.vmem [#allocation8], 128
    %v1756 = vld [vmem:[%s1755] sm:$0xf]
    %v1757 = vld [vmem:[%s1755 + $0x4] sm:$0xf]
    %v1758 = vld [vmem:[%s1755 + $0x8] sm:$0xf]
    %v1759 = vld [vmem:[%s1755 + $0xc] sm:$0xf]
    %v1760 = vld [vmem:[%s1755 + $0x10] sm:$0xf]
    %v1761 = vld [vmem:[%s1755 + $0x14] sm:$0xf]
    %v1762 = vld [vmem:[%s1755 + $0x18] sm:$0xf]
    %v1763 = vld [vmem:[%s1755 + $0x1c] sm:$0xf]
    %v1764 = vld [vmem:[%s1755 + $0x20] sm:$0xf]
    %v1765 = vld [vmem:[%s1755 + $0x24] sm:$0xf]
    %v1766 = vld [vmem:[%s1755 + $0x28] sm:$0xf]
    %v1767 = vld [vmem:[%s1755 + $0x2c] sm:$0xf]
    %v1768 = vld [vmem:[%s1755 + $0x30] sm:$0xf]
    %v1769 = vld [vmem:[%s1755 + $0x34] sm:$0xf]
    %v1770 = vld [vmem:[%s1755 + $0x38] sm:$0xf]
    %v1771 = vld [vmem:[%s1755 + $0x3c] sm:$0xf]
    %s1772 = scalar_lea.vmem [#allocation10], 2
    %v1773 = vld [vmem:[%s1772] sm:$0x1]
    %v1774 = vpack.c.bf16 %v1752, %v1751
    %v1775 = vpack.c.bf16 %v1754, %v1753
    %v1792 = vunpack.c.l.b16 %v1756
    %v1793 = vunpack.c.l.b16 %v1757
    %v1794 = vunpack.c.l.b16 %v1758
    %v1795 = vunpack.c.l.b16 %v1759
    %v1796 = vunpack.c.l.b16 %v1760
    %v1797 = vunpack.c.l.b16 %v1761
    %v1798 = vunpack.c.l.b16 %v1762
    %v1799 = vunpack.c.l.b16 %v1763
    %v1800 = vunpack.c.l.b16 %v1764
    %v1801 = vunpack.c.l.b16 %v1765
    %v1802 = vunpack.c.l.b16 %v1766
    %v1803 = vunpack.c.l.b16 %v1767
    %v1804 = vunpack.c.l.b16 %v1768
    %v1805 = vunpack.c.l.b16 %v1769
    %v1806 = vunpack.c.l.b16 %v1770
    %v1807 = vunpack.c.l.b16 %v1771
    %v1808 = vpack.c.b16 %v1793, %v1792
    %v1809 = vpack.c.b16 %v1795, %v1794
    %v1810 = vpack.c.b16 %v1797, %v1796
    %v1811 = vpack.c.b16 %v1799, %v1798
    %v1812 = vpack.c.b16 %v1801, %v1800
    %v1813 = vpack.c.b16 %v1803, %v1802
    %v1814 = vpack.c.b16 %v1805, %v1804
    %v1815 = vpack.c.b16 %v1807, %v1806
    %1824 = vmatprep.subr.bf16.mxu0 0
    %1825 = vmatpush1.bf16.msra.mxu0 %v1815
    %1826 = vmatprep.subr.bf16.mxu0 0
    %1827 = vmatpush1.bf16.msra.mxu0 %v1814
    %1828 = vmatprep.subr.bf16.mxu0 0
    %1829 = vmatpush1.bf16.msra.mxu0 %v1813
    %1830 = vmatprep.subr.bf16.mxu0 0
    %1831 = vmatpush1.bf16.msra.mxu0 %v1812
    %1832 = vmatprep.subr.bf16.mxu0 0
    %1833 = vmatpush1.bf16.msra.mxu0 %v1811
    %1834 = vmatprep.subr.bf16.mxu0 0
    %1835 = vmatpush1.bf16.msra.mxu0 %v1810
    %1836 = vmatprep.subr.bf16.mxu0 0
    %1837 = vmatpush1.bf16.msra.mxu0 %v1809
    %1838 = vmatprep.subr.bf16.mxu0 0
    %1839 = vmatpush1.bf16.msra.mxu0 %v1808
    %1840 = vmatprep.subr.bf16.mxu0 0
    %1841 = vmatpush2.bf16.msra.mxu0 0
    %1842 = vmatprep.subr.bf16.mxu0 0
    %1843 = vmatpush2.bf16.msra.mxu0 0
    %1844 = vmatprep.subr.bf16.mxu0 0
    %1845 = vmatpush2.bf16.msra.mxu0 0
    %1846 = vmatprep.subr.bf16.mxu0 0
    %1847 = vmatpush2.bf16.msra.mxu0 0
    %1848 = vmatprep.subr.bf16.mxu0 0
    %1849 = vmatpush2.bf16.msra.mxu0 0
    %1850 = vmatprep.subr.bf16.mxu0 0
    %1851 = vmatpush2.bf16.msra.mxu0 0
    %1852 = vmatprep.subr.bf16.mxu0 0
    %1853 = vmatpush2.bf16.msra.mxu0 0
    %1854 = vmatprep.subr.bf16.mxu0 0
    %1855 = vmatpush2.bf16.msra.mxu0 0
    %1856 = vmatprep.mubr.bf16.mxu0 0
    %1857 = vmatmul.mubr.bf16.gmra.mxu0 %v1774
    %v1858 = vpop.f32.mrf.mxu0
    %v1859 = vadd.f32 0.0, %v1858
    %v1860 = vpop.f32.mrf.mxu0
    %v1861 = vpop.f32.mrf.mxu0
    %v1862 = vadd.f32 0.0, %v1861
    %v1863 = vpop.f32.mrf.mxu0
    %1864 = vmatprep.mubr.bf16.mxu0 0
    %1865 = vmatmul.mubr.bf16.gmra.mxu0 %v1775
    %v1866 = vpop.f32.mrf.mxu0
    %v1867 = vadd.f32 0.0, %v1866
    %v1868 = vpop.f32.mrf.mxu0
    %v1869 = vpop.f32.mrf.mxu0
    %v1870 = vadd.f32 0.0, %v1869
    %v1871 = vpop.f32.mrf.mxu0
    %1872 = vdwg.mxu0
    %1873 = vmatprep.subr.mxu0 0.0
    %1874 = vmatpush1.msra.mxu0 0.0
    %1875 = vmatprep.subr.mxu0 0.0
    %1876 = vmatpush1.msra.mxu0 0.0
    %1877 = vmatprep.subr.mxu0 0.0
    %1878 = vmatpush1.msra.mxu0 0.0
    %1879 = vmatprep.subr.mxu0 0.0
    %1880 = vmatpush1.msra.mxu0 0.0
    %1881 = vmatprep.subr.mxu0 0.0
    %1882 = vmatpush1.msra.mxu0 0.0
    %1883 = vmatprep.subr.mxu0 0.0
    %1884 = vmatpush1.msra.mxu0 0.0
    %1885 = vmatprep.subr.mxu0 0.0
    %1886 = vmatpush1.msra.mxu0 0.0
    %1887 = vmatprep.subr.mxu0 0.0
    %1888 = vmatpush1.msra.mxu0 0.0
    %1889 = vmatprep.subr.mxu0 0.0
    %1890 = vmatpush1.msra.mxu0 0.0
    %1891 = vmatprep.subr.mxu0 0.0
    %1892 = vmatpush1.msra.mxu0 0.0
    %1893 = vmatprep.subr.mxu0 0.0
    %1894 = vmatpush1.msra.mxu0 0.0
    %1895 = vmatprep.subr.mxu0 0.0
    %1896 = vmatpush1.msra.mxu0 0.0
    %1897 = vmatprep.subr.mxu0 0.0
    %1898 = vmatpush1.msra.mxu0 0.0
    %1899 = vmatprep.subr.mxu0 0.0
    %1900 = vmatpush1.msra.mxu0 0.0
    %1901 = vmatprep.subr.mxu0 0.0
    %1902 = vmatpush1.msra.mxu0 %v1862
    %1903 = vmatprep.subr.mxu0 0.0
    %1904 = vmatpush1.msra.mxu0 %v1859
    %1905 = vmatprep.subr.mxu0 0.0
    %1906 = vmatpush2.msra.mxu0 0.0
    %1907 = vmatprep.subr.mxu0 0.0
    %1908 = vmatpush2.msra.mxu0 0.0
    %1909 = vmatprep.subr.mxu0 0.0
    %1910 = vmatpush2.msra.mxu0 0.0
    %1911 = vmatprep.subr.mxu0 0.0
    %1912 = vmatpush2.msra.mxu0 0.0
    %1913 = vmatprep.subr.mxu0 0.0
    %1914 = vmatpush2.msra.mxu0 0.0
    %1915 = vmatprep.subr.mxu0 0.0
    %1916 = vmatpush2.msra.mxu0 0.0
    %1917 = vmatprep.subr.mxu0 0.0
    %1918 = vmatpush2.msra.mxu0 0.0
    %1919 = vmatprep.subr.mxu0 0.0
    %1920 = vmatpush2.msra.mxu0 0.0
    %1921 = vmatprep.subr.mxu0 0.0
    %1922 = vmatpush2.msra.mxu0 0.0
    %1923 = vmatprep.subr.mxu0 0.0
    %1924 = vmatpush2.msra.mxu0 0.0
    %1925 = vmatprep.subr.mxu0 0.0
    %1926 = vmatpush2.msra.mxu0 0.0
    %1927 = vmatprep.subr.mxu0 0.0
    %1928 = vmatpush2.msra.mxu0 0.0
    %1929 = vmatprep.subr.mxu0 0.0
    %1930 = vmatpush2.msra.mxu0 0.0
    %1931 = vmatprep.subr.mxu0 0.0
    %1932 = vmatpush2.msra.mxu0 0.0
    %1933 = vmatprep.subr.mxu0 0.0
    %1934 = vmatpush2.msra.mxu0 0.0
    %1935 = vmatprep.subr.mxu0 0.0
    %1936 = vmatpush2.msra.mxu0 0.0
    %1937 = vmatprep.mubr.f32.mxu0 0.0
    %1938 = vmatmul.mubr.f32.gmra.mxu0 %v1282
    %v1939 = vpop.f32.mrf.mxu0
    %v1940 = vadd.f32 0.0, %v1939
    %v1941 = vpop.f32.mrf.mxu0
    %1942 = vmatprep.mubr.f32.mxu0 0.0
    %1943 = vmatmul.mubr.f32.gmra.mxu0 %v1285
    %v1944 = vpop.f32.mrf.mxu0
    %v1945 = vadd.f32 0.0, %v1944
    %v1946 = vpop.f32.mrf.mxu0
    %1947 = vdwg.mxu0
    %v1948 = vmul.f32 %v1940, %v1141
    %v1949 = vmul.f32 %v1945, %v1142
    %1950 = vmatprep.subr.mxu0 0.0
    %1951 = vmatpush1.msra.mxu0 0.0
    %1952 = vmatprep.subr.mxu0 0.0
    %1953 = vmatpush1.msra.mxu0 0.0
    %1954 = vmatprep.subr.mxu0 0.0
    %1955 = vmatpush1.msra.mxu0 0.0
    %1956 = vmatprep.subr.mxu0 0.0
    %1957 = vmatpush1.msra.mxu0 0.0
    %1958 = vmatprep.subr.mxu0 0.0
    %1959 = vmatpush1.msra.mxu0 0.0
    %1960 = vmatprep.subr.mxu0 0.0
    %1961 = vmatpush1.msra.mxu0 0.0
    %1962 = vmatprep.subr.mxu0 0.0
    %1963 = vmatpush1.msra.mxu0 0.0
    %1964 = vmatprep.subr.mxu0 0.0
    %1965 = vmatpush1.msra.mxu0 0.0
    %1966 = vmatprep.subr.mxu0 0.0
    %1967 = vmatpush1.msra.mxu0 0.0
    %1968 = vmatprep.subr.mxu0 0.0
    %1969 = vmatpush1.msra.mxu0 0.0
    %1970 = vmatprep.subr.mxu0 0.0
    %1971 = vmatpush1.msra.mxu0 0.0
    %1972 = vmatprep.subr.mxu0 0.0
    %1973 = vmatpush1.msra.mxu0 0.0
    %1974 = vmatprep.subr.mxu0 0.0
    %1975 = vmatpush1.msra.mxu0 0.0
    %1976 = vmatprep.subr.mxu0 0.0
    %1977 = vmatpush1.msra.mxu0 0.0
    %1978 = vmatprep.subr.mxu0 0.0
    %1979 = vmatpush1.msra.mxu0 %v1870
    %1980 = vmatprep.subr.mxu0 0.0
    %1981 = vmatpush1.msra.mxu0 %v1867
    %1982 = vmatprep.subr.mxu0 0.0
    %1983 = vmatpush2.msra.mxu0 0.0
    %1984 = vmatprep.subr.mxu0 0.0
    %1985 = vmatpush2.msra.mxu0 0.0
    %1986 = vmatprep.subr.mxu0 0.0
    %1987 = vmatpush2.msra.mxu0 0.0
    %1988 = vmatprep.subr.mxu0 0.0
    %1989 = vmatpush2.msra.mxu0 0.0
    %1990 = vmatprep.subr.mxu0 0.0
    %1991 = vmatpush2.msra.mxu0 0.0
    %1992 = vmatprep.subr.mxu0 0.0
    %1993 = vmatpush2.msra.mxu0 0.0
    %1994 = vmatprep.subr.mxu0 0.0
    %1995 = vmatpush2.msra.mxu0 0.0
    %1996 = vmatprep.subr.mxu0 0.0
    %1997 = vmatpush2.msra.mxu0 0.0
    %1998 = vmatprep.subr.mxu0 0.0
    %1999 = vmatpush2.msra.mxu0 0.0
    %2000 = vmatprep.subr.mxu0 0.0
    %2001 = vmatpush2.msra.mxu0 0.0
    %2002 = vmatprep.subr.mxu0 0.0
    %2003 = vmatpush2.msra.mxu0 0.0
    %2004 = vmatprep.subr.mxu0 0.0
    %2005 = vmatpush2.msra.mxu0 0.0
    %2006 = vmatprep.subr.mxu0 0.0
    %2007 = vmatpush2.msra.mxu0 0.0
    %2008 = vmatprep.subr.mxu0 0.0
    %2009 = vmatpush2.msra.mxu0 0.0
    %2010 = vmatprep.subr.mxu0 0.0
    %2011 = vmatpush2.msra.mxu0 0.0
    %2012 = vmatprep.subr.mxu0 0.0
    %2013 = vmatpush2.msra.mxu0 0.0
    %2014 = vmatprep.mubr.f32.mxu0 0.0
    %2015 = vmatmul.mubr.f32.gmra.mxu0 %v1365
    %v2016 = vpop.f32.mrf.mxu0
    %v2017 = vadd.f32 0.0, %v2016
    %v2018 = vpop.f32.mrf.mxu0
    %2019 = vmatprep.mubr.f32.mxu0 0.0
    %2020 = vmatmul.mubr.f32.gmra.mxu0 %v1368
    %v2021 = vpop.f32.mrf.mxu0
    %v2022 = vadd.f32 0.0, %v2021
    %v2023 = vpop.f32.mrf.mxu0
    %2024 = vdwg.mxu0
    %v2025 = vmul.f32 %v2017, %v1163
    %v2026 = vmul.f32 %v2022, %v1164
    %v2028 = vlaneseq
    %v2029 = vshrl.u32 %v2028, 7
    %v2030 = vsub.s32 0, %v2029
    %v2031 = vrot.slane %v1773, %v2030
    %v2033 = vadd.f32 %v1948, %v2031
    %v2034 = vadd.f32 %v1949, %v2031
    %v2035 = vadd.f32 %v2025, %v2031
    %v2036 = vadd.f32 %v2026, %v2031
    %v2037 = vmax.f32 %v2033, 0.0
    %v2038 = vmax.f32 %v2034, 0.0
    %v2039 = vmax.f32 %v2035, 0.0
    %v2040 = vmax.f32 %v2036, 0.0
    %v2041 = vadd.f32 %v2037, %v1751
    %v2042 = vadd.f32 %v2038, %v1752
    %v2043 = vadd.f32 %v2039, %v1753
    %v2044 = vadd.f32 %v2040, %v1754
    %v2045 = vld [vmem:[%s8] sm:$0x3]
    %2046 = vset.pattern.permute.xlu0 0
    %2047 = vperm.xlu0 %2046, %v2045
    %v2048 = vpop.permute.xlu0 %2047
    %vm2049 = vcmp.ge.s32.totalorder %v346, %v2048
    %v2050 = vld [vmem:[%s9] sm:$0x3]
    %2051 = vset.pattern.permute.xlu0 0
    %2052 = vperm.xlu0 %2051, %v2050
    %v2053 = vpop.permute.xlu0 %2052
    %vm2054 = vcmp.lt.s32.totalorder %v346, %v2053
    %vm2055 = vmand %vm2049, %vm2054
    %v2056 = vsel %vm2055, 1.0, 0.0
    %v2058 = vsel %vm409, %v2056, 0
    %2060 = vmatprep.subr.mxu0 0.0
    %2061 = vmatpush1.msra.mxu0 0.0
    %2062 = vmatprep.subr.mxu0 0.0
    %2063 = vmatpush1.msra.mxu0 0.0
    %2064 = vmatprep.subr.mxu0 0.0
    %2065 = vmatpush1.msra.mxu0 0.0
    %2066 = vmatprep.subr.mxu0 0.0
    %2067 = vmatpush1.msra.mxu0 0.0
    %2068 = vmatprep.subr.mxu0 0.0
    %2069 = vmatpush1.msra.mxu0 0.0
    %2070 = vmatprep.subr.mxu0 0.0
    %2071 = vmatpush1.msra.mxu0 0.0
    %2072 = vmatprep.subr.mxu0 0.0
    %2073 = vmatpush1.msra.mxu0 0.0
    %2074 = vmatprep.subr.mxu0 0.0
    %2075 = vmatpush1.msra.mxu0 0.0
    %2076 = vmatprep.subr.mxu0 0.0
    %2077 = vmatpush1.msra.mxu0 0.0
    %2078 = vmatprep.subr.mxu0 0.0
    %2079 = vmatpush1.msra.mxu0 0.0
    %2080 = vmatprep.subr.mxu0 0.0
    %2081 = vmatpush1.msra.mxu0 0.0
    %2082 = vmatprep.subr.mxu0 0.0
    %2083 = vmatpush1.msra.mxu0 0.0
    %2084 = vmatprep.subr.mxu0 0.0
    %2085 = vmatpush1.msra.mxu0 %v2044
    %2086 = vmatprep.subr.mxu0 0.0
    %2087 = vmatpush1.msra.mxu0 %v2043
    %2088 = vmatprep.subr.mxu0 0.0
    %2089 = vmatpush1.msra.mxu0 %v2042
    %2090 = vmatprep.subr.mxu0 0.0
    %2091 = vmatpush1.msra.mxu0 %v2041
    %2092 = vmatprep.subr.mxu0 0.0
    %2093 = vmatpush2.msra.mxu0 0.0
    %2094 = vmatprep.subr.mxu0 0.0
    %2095 = vmatpush2.msra.mxu0 0.0
    %2096 = vmatprep.subr.mxu0 0.0
    %2097 = vmatpush2.msra.mxu0 0.0
    %2098 = vmatprep.subr.mxu0 0.0
    %2099 = vmatpush2.msra.mxu0 0.0
    %2100 = vmatprep.subr.mxu0 0.0
    %2101 = vmatpush2.msra.mxu0 0.0
    %2102 = vmatprep.subr.mxu0 0.0
    %2103 = vmatpush2.msra.mxu0 0.0
    %2104 = vmatprep.subr.mxu0 0.0
    %2105 = vmatpush2.msra.mxu0 0.0
    %2106 = vmatprep.subr.mxu0 0.0
    %2107 = vmatpush2.msra.mxu0 0.0
    %2108 = vmatprep.subr.mxu0 0.0
    %2109 = vmatpush2.msra.mxu0 0.0
    %2110 = vmatprep.subr.mxu0 0.0
    %2111 = vmatpush2.msra.mxu0 0.0
    %2112 = vmatprep.subr.mxu0 0.0
    %2113 = vmatpush2.msra.mxu0 0.0
    %2114 = vmatprep.subr.mxu0 0.0
    %2115 = vmatpush2.msra.mxu0 0.0
    %2116 = vmatprep.subr.mxu0 0.0
    %2117 = vmatpush2.msra.mxu0 0.0
    %2118 = vmatprep.subr.mxu0 0.0
    %2119 = vmatpush2.msra.mxu0 0.0
    %2120 = vmatprep.subr.mxu0 0.0
    %2121 = vmatpush2.msra.mxu0 0.0
    %2122 = vmatprep.subr.mxu0 0.0
    %2123 = vmatpush2.msra.mxu0 0.0
    %2124 = vmatprep.mubr.f32.mxu0 0.0
    %2125 = vmatmul.mubr.f32.gmra.mxu0 %v2058
    %v2126 = vpop.f32.mrf.mxu0
    %v2127 = vadd.f32 0.0, %v2126
    %v2128 = vpop.f32.mrf.mxu0
    %2129 = vdwg.mxu0
    %v2130 = vld [vmem:[#allocation2] sm:$0xff]
    %v2131 = vld [vmem:[#allocation2 + $0x8] sm:$0xf]
    %v2132 = vld [vmem:[#allocation11] ss:$4 sm:$0x3f]
    %v2134 = vlaneseq
    %v2135 = vshrl.u32 %v2134, 7
    %v2136 = vsub.s32 0, %v2135
    %v2137 = vrot.slane %v2132, %v2136
    %v2138 = vlaneseq
    %v2139 = vshrl.u32 %v2138, 7
    %v2140 = vsub.s32 1, %v2139
    %v2141 = vrot.slane %v2132, %v2140
    %v2142 = vlaneseq
    %v2143 = vshrl.u32 %v2142, 7
    %v2144 = vsub.s32 2, %v2143
    %v2145 = vrot.slane %v2132, %v2144
    %v2146 = vlaneseq
    %v2147 = vshrl.u32 %v2146, 7
    %v2148 = vsub.s32 3, %v2147
    %v2149 = vrot.slane %v2132, %v2148
    %v2150 = vlaneseq
    %v2151 = vshrl.u32 %v2150, 7
    %v2152 = vsub.s32 4, %v2151
    %v2153 = vrot.slane %v2132, %v2152
    %v2154 = vlaneseq
    %v2155 = vshrl.u32 %v2154, 7
    %v2156 = vsub.s32 5, %v2155
    %v2157 = vrot.slane %v2132, %v2156
    %v2158 = vcombine.low %v2137, %v2141
    %v2159 = vcombine.low %v2145, %v2149
    %v2161 = vunpack.c.l.s4 1983009808
    %v2162 = vunpack.c.0.s8 %v2161
    %v2163 = vlaneseq
    %v2164 = vshrl.u32 %v2163, 7
    %v2165 = vsub.s32 %v2162, %v2164
    %v2166 = vrot.slane %v2158, %v2165
    %v2168 = vunpack.c.l.s4 1983009808
    %v2169 = vunpack.c.0.s8 %v2168
    %v2170 = vlaneseq
    %v2171 = vshrl.u32 %v2170, 7
    %v2172 = vsub.s32 %v2169, %v2171
    %v2173 = vrot.slane %v2159, %v2172
    %v2174 = vcombine.low %v2166, %v2173
    %v2175 = vcombine.low %v2153, %v2157
    %v2177 = vunpack.c.l.s4 1983009808
    %v2178 = vunpack.c.0.s8 %v2177
    %v2179 = vlaneseq
    %v2180 = vshrl.u32 %v2179, 7
    %v2181 = vsub.s32 %v2178, %v2180
    %v2182 = vrot.slane %v2175, %v2181
    %v2185 = vmul.f32 %v2130, %v2174
    %v2186 = vmul.f32 %v2131, %v2182
    %v2189 = vcombine.high %v2185, %v2185
    %v2191 = vunpack.c.l.s4 1983009808
    %v2192 = vunpack.c.0.s8 %v2191
    %v2193 = vlaneseq
    %v2194 = vshrl.u32 %v2193, 7
    %v2195 = vsub.s32 %v2192, %v2194
    %v2196 = vrot.slane %v2185, %v2195
    %v2198 = vunpack.c.l.s4 1983009808
    %v2199 = vunpack.c.0.s8 %v2198
    %v2200 = vlaneseq
    %v2201 = vshrl.u32 %v2200, 7
    %v2202 = vsub.s32 %v2199, %v2201
    %v2203 = vrot.slane %v2189, %v2202
    %v2204 = vcombine.high %v2196, %v2196
    %v2205 = vcombine.high %v2203, %v2203
    %v2207 = vunpack.c.l.s4 1983009808
    %v2208 = vunpack.c.0.s8 %v2207
    %v2209 = vlaneseq
    %v2210 = vshrl.u32 %v2209, 7
    %v2211 = vsub.s32 %v2208, %v2210
    %v2212 = vrot.slane %v2186, %v2211
    %v2213 = vcombine.high %v2212, %v2212
    %vm2220 = vcmask 1041408
    %v2221 = vsel %vm2220, %v2196, 0.0
    %v2222 = vsel %vm2220, %v2204, 0.0
    %v2223 = vadd.f32 %v2221, %v2222
    %v2224 = vsel %vm2220, %v2203, 0.0
    %v2225 = vadd.f32 %v2223, %v2224
    %v2226 = vsel %vm2220, %v2205, 0.0
    %v2227 = vadd.f32 %v2225, %v2226
    %v2228 = vsel %vm2220, %v2212, 0.0
    %v2229 = vadd.f32 %v2227, %v2228
    %v2230 = vsel %vm2220, %v2213, 0.0
    %v2231 = vadd.f32 %v2229, %v2230
    %2232 = vadd.xlane.f32.xlu0 %v2231
    %v2233 = vpop.xlane.xlu0 %2232
    %v2234 = vld [vmem:[#allocation13] ss:$4 sm:$0x3f]
    %v2236 = vlaneseq
    %v2237 = vshrl.u32 %v2236, 7
    %v2238 = vsub.s32 0, %v2237
    %v2239 = vrot.slane %v2234, %v2238
    %v2240 = vlaneseq
    %v2241 = vshrl.u32 %v2240, 7
    %v2242 = vsub.s32 1, %v2241
    %v2243 = vrot.slane %v2234, %v2242
    %v2244 = vlaneseq
    %v2245 = vshrl.u32 %v2244, 7
    %v2246 = vsub.s32 2, %v2245
    %v2247 = vrot.slane %v2234, %v2246
    %v2248 = vlaneseq
    %v2249 = vshrl.u32 %v2248, 7
    %v2250 = vsub.s32 3, %v2249
    %v2251 = vrot.slane %v2234, %v2250
    %v2252 = vlaneseq
    %v2253 = vshrl.u32 %v2252, 7
    %v2254 = vsub.s32 4, %v2253
    %v2255 = vrot.slane %v2234, %v2254
    %v2256 = vlaneseq
    %v2257 = vshrl.u32 %v2256, 7
    %v2258 = vsub.s32 5, %v2257
    %v2259 = vrot.slane %v2234, %v2258
    %v2266 = vmul.f32 %v339, %v2239
    %v2267 = vmul.f32 %v340, %v2243
    %v2268 = vmul.f32 %v341, %v2247
    %v2269 = vmul.f32 %v342, %v2251
    %v2270 = vmul.f32 %v343, %v2255
    %v2271 = vmul.f32 %v344, %v2259
    %v2272 = vsel %vm2220, %v2266, 0.0
    %v2273 = vsel %vm2220, %v2267, 0.0
    %v2274 = vadd.f32 %v2272, %v2273
    %v2275 = vsel %vm2220, %v2268, 0.0
    %v2276 = vadd.f32 %v2274, %v2275
    %v2277 = vsel %vm2220, %v2269, 0.0
    %v2278 = vadd.f32 %v2276, %v2277
    %v2279 = vsel %vm2220, %v2270, 0.0
    %v2280 = vadd.f32 %v2278, %v2279
    %v2281 = vsel %vm2220, %v2271, 0.0
    %v2282 = vadd.f32 %v2280, %v2281
    %2283 = vadd.xlane.f32.xlu0 %v2282
    %v2284 = vpop.xlane.xlu0 %2283
    %v2285 = vadd.f32 %v2233, %v2284
    %v2286 = vld [vmem:[%s15] sm:$0x1]
    %v2287 = vlaneseq
    %v2288 = vshrl.u32 %v2287, 7
    %v2289 = vsub.s32 0, %v2288
    %v2290 = vrot.slane %v2286, %v2289
    %v2291 = vmul.f32 %v2127, %v2290
    %v2292 = vsel %vm2220, %v2291, 0.0
    %2293 = vadd.xlane.f32.xlu0 %v2292
    %v2294 = vpop.xlane.xlu0 %2293
    %v2295 = vadd.f32 %v2285, %v2294
    %s2296 = scalar_lea.vmem [#allocation11], 1
    %v2297 = vld [vmem:[%s2296] ss:$4 sm:$0x3f]
    %v2299 = vlaneseq
    %v2300 = vshrl.u32 %v2299, 7
    %v2301 = vsub.s32 0, %v2300
    %v2302 = vrot.slane %v2297, %v2301
    %v2303 = vlaneseq
    %v2304 = vshrl.u32 %v2303, 7
    %v2305 = vsub.s32 1, %v2304
    %v2306 = vrot.slane %v2297, %v2305
    %v2307 = vlaneseq
    %v2308 = vshrl.u32 %v2307, 7
    %v2309 = vsub.s32 2, %v2308
    %v2310 = vrot.slane %v2297, %v2309
    %v2311 = vlaneseq
    %v2312 = vshrl.u32 %v2311, 7
    %v2313 = vsub.s32 3, %v2312
    %v2314 = vrot.slane %v2297, %v2313
    %v2315 = vlaneseq
    %v2316 = vshrl.u32 %v2315, 7
    %v2317 = vsub.s32 4, %v2316
    %v2318 = vrot.slane %v2297, %v2317
    %v2319 = vlaneseq
    %v2320 = vshrl.u32 %v2319, 7
    %v2321 = vsub.s32 5, %v2320
    %v2322 = vrot.slane %v2297, %v2321
    %v2323 = vcombine.low %v2302, %v2306
    %v2324 = vcombine.low %v2310, %v2314
    %v2326 = vunpack.c.l.s4 1983009808
    %v2327 = vunpack.c.0.s8 %v2326
    %v2328 = vlaneseq
    %v2329 = vshrl.u32 %v2328, 7
    %v2330 = vsub.s32 %v2327, %v2329
    %v2331 = vrot.slane %v2323, %v2330
    %v2333 = vunpack.c.l.s4 1983009808
    %v2334 = vunpack.c.0.s8 %v2333
    %v2335 = vlaneseq
    %v2336 = vshrl.u32 %v2335, 7
    %v2337 = vsub.s32 %v2334, %v2336
    %v2338 = vrot.slane %v2324, %v2337
    %v2339 = vcombine.low %v2331, %v2338
    %v2340 = vcombine.low %v2318, %v2322
    %v2342 = vunpack.c.l.s4 1983009808
    %v2343 = vunpack.c.0.s8 %v2342
    %v2344 = vlaneseq
    %v2345 = vshrl.u32 %v2344, 7
    %v2346 = vsub.s32 %v2343, %v2345
    %v2347 = vrot.slane %v2340, %v2346
    %v2350 = vmul.f32 %v2130, %v2339
    %v2351 = vmul.f32 %v2131, %v2347
    %v2354 = vcombine.high %v2350, %v2350
    %v2356 = vunpack.c.l.s4 1983009808
    %v2357 = vunpack.c.0.s8 %v2356
    %v2358 = vlaneseq
    %v2359 = vshrl.u32 %v2358, 7
    %v2360 = vsub.s32 %v2357, %v2359
    %v2361 = vrot.slane %v2350, %v2360
    %v2363 = vunpack.c.l.s4 1983009808
    %v2364 = vunpack.c.0.s8 %v2363
    %v2365 = vlaneseq
    %v2366 = vshrl.u32 %v2365, 7
    %v2367 = vsub.s32 %v2364, %v2366
    %v2368 = vrot.slane %v2354, %v2367
    %v2369 = vcombine.high %v2361, %v2361
    %v2370 = vcombine.high %v2368, %v2368
    %v2372 = vunpack.c.l.s4 1983009808
    %v2373 = vunpack.c.0.s8 %v2372
    %v2374 = vlaneseq
    %v2375 = vshrl.u32 %v2374, 7
    %v2376 = vsub.s32 %v2373, %v2375
    %v2377 = vrot.slane %v2351, %v2376
    %v2378 = vcombine.high %v2377, %v2377
    %v2385 = vsel %vm2220, %v2361, 0.0
    %v2386 = vsel %vm2220, %v2369, 0.0
    %v2387 = vadd.f32 %v2385, %v2386
    %v2388 = vsel %vm2220, %v2368, 0.0
    %v2389 = vadd.f32 %v2387, %v2388
    %v2390 = vsel %vm2220, %v2370, 0.0
    %v2391 = vadd.f32 %v2389, %v2390
    %v2392 = vsel %vm2220, %v2377, 0.0
    %v2393 = vadd.f32 %v2391, %v2392
    %v2394 = vsel %vm2220, %v2378, 0.0
    %v2395 = vadd.f32 %v2393, %v2394
    %2396 = vadd.xlane.f32.xlu0 %v2395
    %v2397 = vpop.xlane.xlu0 %2396
    %s2398 = scalar_lea.vmem [#allocation13], 1
    %v2399 = vld [vmem:[%s2398] ss:$4 sm:$0x3f]
    %v2401 = vlaneseq
    %v2402 = vshrl.u32 %v2401, 7
    %v2403 = vsub.s32 0, %v2402
    %v2404 = vrot.slane %v2399, %v2403
    %v2405 = vlaneseq
    %v2406 = vshrl.u32 %v2405, 7
    %v2407 = vsub.s32 1, %v2406
    %v2408 = vrot.slane %v2399, %v2407
    %v2409 = vlaneseq
    %v2410 = vshrl.u32 %v2409, 7
    %v2411 = vsub.s32 2, %v2410
    %v2412 = vrot.slane %v2399, %v2411
    %v2413 = vlaneseq
    %v2414 = vshrl.u32 %v2413, 7
    %v2415 = vsub.s32 3, %v2414
    %v2416 = vrot.slane %v2399, %v2415
    %v2417 = vlaneseq
    %v2418 = vshrl.u32 %v2417, 7
    %v2419 = vsub.s32 4, %v2418
    %v2420 = vrot.slane %v2399, %v2419
    %v2421 = vlaneseq
    %v2422 = vshrl.u32 %v2421, 7
    %v2423 = vsub.s32 5, %v2422
    %v2424 = vrot.slane %v2399, %v2423
    %v2431 = vmul.f32 %v339, %v2404
    %v2432 = vmul.f32 %v340, %v2408
    %v2433 = vmul.f32 %v341, %v2412
    %v2434 = vmul.f32 %v342, %v2416
    %v2435 = vmul.f32 %v343, %v2420
    %v2436 = vmul.f32 %v344, %v2424
    %v2437 = vsel %vm2220, %v2431, 0.0
    %v2438 = vsel %vm2220, %v2432, 0.0
    %v2439 = vadd.f32 %v2437, %v2438
    %v2440 = vsel %vm2220, %v2433, 0.0
    %v2441 = vadd.f32 %v2439, %v2440
    %v2442 = vsel %vm2220, %v2434, 0.0
    %v2443 = vadd.f32 %v2441, %v2442
    %v2444 = vsel %vm2220, %v2435, 0.0
    %v2445 = vadd.f32 %v2443, %v2444
    %v2446 = vsel %vm2220, %v2436, 0.0
    %v2447 = vadd.f32 %v2445, %v2446
    %2448 = vadd.xlane.f32.xlu0 %v2447
    %v2449 = vpop.xlane.xlu0 %2448
    %v2450 = vadd.f32 %v2397, %v2449
    %v2451 = vld [vmem:[%s15 + $0x1] sm:$0x1]
    %v2452 = vlaneseq
    %v2453 = vshrl.u32 %v2452, 7
    %v2454 = vsub.s32 0, %v2453
    %v2455 = vrot.slane %v2451, %v2454
    %v2456 = vmul.f32 %v2127, %v2455
    %v2457 = vsel %vm2220, %v2456, 0.0
    %2458 = vadd.xlane.f32.xlu0 %v2457
    %v2459 = vpop.xlane.xlu0 %2458
    %v2460 = vadd.f32 %v2450, %v2459
    %s2461 = scalar_lea.vmem [#allocation11], 2
    %v2462 = vld [vmem:[%s2461] ss:$4 sm:$0x3f]
    %v2464 = vlaneseq
    %v2465 = vshrl.u32 %v2464, 7
    %v2466 = vsub.s32 0, %v2465
    %v2467 = vrot.slane %v2462, %v2466
    %v2468 = vlaneseq
    %v2469 = vshrl.u32 %v2468, 7
    %v2470 = vsub.s32 1, %v2469
    %v2471 = vrot.slane %v2462, %v2470
    %v2472 = vlaneseq
    %v2473 = vshrl.u32 %v2472, 7
    %v2474 = vsub.s32 2, %v2473
    %v2475 = vrot.slane %v2462, %v2474
    %v2476 = vlaneseq
    %v2477 = vshrl.u32 %v2476, 7
    %v2478 = vsub.s32 3, %v2477
    %v2479 = vrot.slane %v2462, %v2478
    %v2480 = vlaneseq
    %v2481 = vshrl.u32 %v2480, 7
    %v2482 = vsub.s32 4, %v2481
    %v2483 = vrot.slane %v2462, %v2482
    %v2484 = vlaneseq
    %v2485 = vshrl.u32 %v2484, 7
    %v2486 = vsub.s32 5, %v2485
    %v2487 = vrot.slane %v2462, %v2486
    %v2488 = vcombine.low %v2467, %v2471
    %v2489 = vcombine.low %v2475, %v2479
    %v2491 = vunpack.c.l.s4 1983009808
    %v2492 = vunpack.c.0.s8 %v2491
    %v2493 = vlaneseq
    %v2494 = vshrl.u32 %v2493, 7
    %v2495 = vsub.s32 %v2492, %v2494
    %v2496 = vrot.slane %v2488, %v2495
    %v2498 = vunpack.c.l.s4 1983009808
    %v2499 = vunpack.c.0.s8 %v2498
    %v2500 = vlaneseq
    %v2501 = vshrl.u32 %v2500, 7
    %v2502 = vsub.s32 %v2499, %v2501
    %v2503 = vrot.slane %v2489, %v2502
    %v2504 = vcombine.low %v2496, %v2503
    %v2505 = vcombine.low %v2483, %v2487
    %v2507 = vunpack.c.l.s4 1983009808
    %v2508 = vunpack.c.0.s8 %v2507
    %v2509 = vlaneseq
    %v2510 = vshrl.u32 %v2509, 7
    %v2511 = vsub.s32 %v2508, %v2510
    %v2512 = vrot.slane %v2505, %v2511
    %v2515 = vmul.f32 %v2130, %v2504
    %v2516 = vmul.f32 %v2131, %v2512
    %v2519 = vcombine.high %v2515, %v2515
    %v2521 = vunpack.c.l.s4 1983009808
    %v2522 = vunpack.c.0.s8 %v2521
    %v2523 = vlaneseq
    %v2524 = vshrl.u32 %v2523, 7
    %v2525 = vsub.s32 %v2522, %v2524
    %v2526 = vrot.slane %v2515, %v2525
    %v2528 = vunpack.c.l.s4 1983009808
    %v2529 = vunpack.c.0.s8 %v2528
    %v2530 = vlaneseq
    %v2531 = vshrl.u32 %v2530, 7
    %v2532 = vsub.s32 %v2529, %v2531
    %v2533 = vrot.slane %v2519, %v2532
    %v2534 = vcombine.high %v2526, %v2526
    %v2535 = vcombine.high %v2533, %v2533
    %v2537 = vunpack.c.l.s4 1983009808
    %v2538 = vunpack.c.0.s8 %v2537
    %v2539 = vlaneseq
    %v2540 = vshrl.u32 %v2539, 7
    %v2541 = vsub.s32 %v2538, %v2540
    %v2542 = vrot.slane %v2516, %v2541
    %v2543 = vcombine.high %v2542, %v2542
    %v2550 = vsel %vm2220, %v2526, 0.0
    %v2551 = vsel %vm2220, %v2534, 0.0
    %v2552 = vadd.f32 %v2550, %v2551
    %v2553 = vsel %vm2220, %v2533, 0.0
    %v2554 = vadd.f32 %v2552, %v2553
    %v2555 = vsel %vm2220, %v2535, 0.0
    %v2556 = vadd.f32 %v2554, %v2555
    %v2557 = vsel %vm2220, %v2542, 0.0
    %v2558 = vadd.f32 %v2556, %v2557
    %v2559 = vsel %vm2220, %v2543, 0.0
    %v2560 = vadd.f32 %v2558, %v2559
    %2561 = vadd.xlane.f32.xlu0 %v2560
    %v2562 = vpop.xlane.xlu0 %2561
    %s2563 = scalar_lea.vmem [#allocation13], 2
    %v2564 = vld [vmem:[%s2563] ss:$4 sm:$0x3f]
    %v2566 = vlaneseq
    %v2567 = vshrl.u32 %v2566, 7
    %v2568 = vsub.s32 0, %v2567
    %v2569 = vrot.slane %v2564, %v2568
    %v2570 = vlaneseq
    %v2571 = vshrl.u32 %v2570, 7
    %v2572 = vsub.s32 1, %v2571
    %v2573 = vrot.slane %v2564, %v2572
    %v2574 = vlaneseq
    %v2575 = vshrl.u32 %v2574, 7
    %v2576 = vsub.s32 2, %v2575
    %v2577 = vrot.slane %v2564, %v2576
    %v2578 = vlaneseq
    %v2579 = vshrl.u32 %v2578, 7
    %v2580 = vsub.s32 3, %v2579
    %v2581 = vrot.slane %v2564, %v2580
    %v2582 = vlaneseq
    %v2583 = vshrl.u32 %v2582, 7
    %v2584 = vsub.s32 4, %v2583
    %v2585 = vrot.slane %v2564, %v2584
    %v2586 = vlaneseq
    %v2587 = vshrl.u32 %v2586, 7
    %v2588 = vsub.s32 5, %v2587
    %v2589 = vrot.slane %v2564, %v2588
    %v2596 = vmul.f32 %v339, %v2569
    %v2597 = vmul.f32 %v340, %v2573
    %v2598 = vmul.f32 %v341, %v2577
    %v2599 = vmul.f32 %v342, %v2581
    %v2600 = vmul.f32 %v343, %v2585
    %v2601 = vmul.f32 %v344, %v2589
    %v2602 = vsel %vm2220, %v2596, 0.0
    %v2603 = vsel %vm2220, %v2597, 0.0
    %v2604 = vadd.f32 %v2602, %v2603
    %v2605 = vsel %vm2220, %v2598, 0.0
    %v2606 = vadd.f32 %v2604, %v2605
    %v2607 = vsel %vm2220, %v2599, 0.0
    %v2608 = vadd.f32 %v2606, %v2607
    %v2609 = vsel %vm2220, %v2600, 0.0
    %v2610 = vadd.f32 %v2608, %v2609
    %v2611 = vsel %vm2220, %v2601, 0.0
    %v2612 = vadd.f32 %v2610, %v2611
    %2613 = vadd.xlane.f32.xlu0 %v2612
    %v2614 = vpop.xlane.xlu0 %2613
    %v2615 = vadd.f32 %v2562, %v2614
    %v2616 = vld [vmem:[%s15 + $0x2] sm:$0x1]
    %v2617 = vlaneseq
    %v2618 = vshrl.u32 %v2617, 7
    %v2619 = vsub.s32 0, %v2618
    %v2620 = vrot.slane %v2616, %v2619
    %v2621 = vmul.f32 %v2127, %v2620
    %v2622 = vsel %vm2220, %v2621, 0.0
    %2623 = vadd.xlane.f32.xlu0 %v2622
    %v2624 = vpop.xlane.xlu0 %2623
    %v2625 = vadd.f32 %v2615, %v2624
    %vm2626 = vcmp.eq.s32.totalorder %v346, 1
    %v2627 = vsel %vm2626, %v2460, %v2625
    %vm2628 = vcmp.eq.s32.totalorder %v346, 0
    %v2629 = vsel %vm2628, %v2295, %v2627
    %v2630 = vld [vmem:[#allocation14] sm:$0x1]
    %v2632 = vlaneseq
    %v2633 = vshrl.u32 %v2632, 7
    %v2634 = vsub.s32 0, %v2633
    %v2635 = vrot.slane %v2630, %v2634
    %v2637 = vadd.f32 %v2629, %v2635
    %v2638 = vtanh.pop %v2637
    %vm2639 = vcmask 17408
    %2640 = vst.msk [vmem:[#allocation16] sm:$0x3] %vm2639, %v2638
    // Predicated region
    $region102: #{forward.1} parent=1 // pred_check
      _
    $region103: #{forward.1} parent=1 // pred_check_branch
      %2642 = sbr.rel (0) target = $region105
    $region104: #{forward.1} parent=1 // pred_region
      %s2644 = ssub.s32 32, 32
      %2645 = vsyncadd [#allocation4], %s2644
      %s2647 = sshll.u32 [#allocation16], 4
      %s2648 = int_to_ptr.vmem [resolvable:$true] %s2647
      %2650 = dma.vmem_to_hbm [thread:$0]  %s2648, 32, %s17, [#allocation4]
    $region105: #{forward.1} parent=1 // pred_fallthru
      _
    // Predicated region
    $region106: #{forward.1} parent=1 // pred_check
      _
    $region107: #{forward.1} parent=1 // pred_check_branch
      %2652 = sbr.rel (0) target = $region109
    $region108: #{forward.1} parent=1 // pred_region
      %2653 = dma.done [#allocation4], 32
    $region109: #{forward.1} parent=1 // pred_fallthru
      _
    %2654 = vsyncpa [#allocation3], 1
    %2655 = vsyncpa [#allocation6], 1
    %2656 = vsyncpa [#allocation9], 1
    %2657 = vsyncpa [#allocation12], 1
    %2658 = vsyncpa [#allocation15], 1
    %2659 = vsyncpa [#allocation4], 1

</llo_original>
